<compile_context>
chip_gen: v7x
topology: tpu7x:2x2x1
jax: 0.10.0
libtpu: 0.0.40
codegen_flags: <defaults>
</compile_context>

<pallas_src>
import functools

import jax
import jax.numpy as jnp
from jax.experimental import pallas as pl
from jax.experimental.pallas import tpu as pltpu


def _lstm_chunk_kernel(x_ref, h0_ref, c0_ref, wih_ref, whh_ref,
                       y_ref, hT_ref, cT_ref,
                       gx_scr, h_scr, c_scr, *, seq_len, mxu_dtype):
    t_idx = pl.program_id(1)                  # time-chunk index (inner, sequential)
    t_chunk, b_tile, d_in = x_ref.shape
    hidden = whh_ref.shape[-1]

    # (Re)initialize the carried state from (h0, c0) at the start of each batch tile.
    @pl.when(t_idx == 0)
    def _():
        h_scr[...] = h0_ref[0].astype(jnp.float32)
        c_scr[...] = c0_ref[0].astype(jnp.float32)

    # Hoisted input projection for the whole chunk, one MXU matmul per gate.
    # Storing it per-gate keeps every per-step slice a clean (BT, H) tile.
    x2 = x_ref[...].reshape(t_chunk * b_tile, d_in).astype(mxu_dtype)
    for g in range(4):
        proj = jnp.dot(x2, wih_ref[g], preferred_element_type=jnp.float32)
        gx_scr[g] = proj.reshape(t_chunk, b_tile, hidden).astype(gx_scr.dtype)

    t0 = t_idx * t_chunk
    full_chunk = (seq_len % t_chunk) == 0     # static: no tail guard if True

    def step(s, carry):
        def do_step():
            h_prev = h_scr[...]               # f32 carried state (VMEM resident)
            c_prev = c_scr[...]
            h_mxu = h_prev.astype(mxu_dtype)
            # Per-gate dots ordered [i, f, g, o]; each activation only depends
            # on its own dot, so EUP work overlaps the next gate's MXU pass.
            i_g = jax.nn.sigmoid(
                gx_scr[0, s].astype(jnp.float32)
                + jnp.dot(h_mxu, whh_ref[0], preferred_element_type=jnp.float32))
            f_g = jax.nn.sigmoid(
                gx_scr[1, s].astype(jnp.float32)
                + jnp.dot(h_mxu, whh_ref[1], preferred_element_type=jnp.float32))
            g_g = jnp.tanh(
                gx_scr[2, s].astype(jnp.float32)
                + jnp.dot(h_mxu, whh_ref[2], preferred_element_type=jnp.float32))
            o_g = jax.nn.sigmoid(
                gx_scr[3, s].astype(jnp.float32)
                + jnp.dot(h_mxu, whh_ref[3], preferred_element_type=jnp.float32))
            c_new = f_g * c_prev + i_g * g_g              # f32 cell state
            h_new = o_g * jnp.tanh(c_new)                 # f32 hidden state
            y_ref[s] = h_new.astype(y_ref.dtype)          # staged in the y VMEM block
            h_scr[...] = h_new
            c_scr[...] = c_new

        if full_chunk:
            do_step()
        else:
            # Tail chunk: skip padded steps entirely (their x block rows are OOB
            # reads); state stays frozen and OOB y rows are masked on writeback.
            pl.when(t0 + s < seq_len)(do_step)
        return carry

    unroll = max(1, min(8, t_chunk))
    jax.lax.fori_loop(0, t_chunk, step, 0, unroll=unroll)

    @pl.when(t_idx == pl.num_programs(1) - 1)
    def _():
        hT_ref[0] = h_scr[...].astype(hT_ref.dtype)
        cT_ref[0] = c_scr[...].astype(cT_ref.dtype)


def _vmem_limit_bytes():
    """Per-generation scoped-VMEM limit (defaults of 16/32 MiB are too small)."""
    try:
        cap = int(getattr(pltpu.get_tpu_info(), "vmem_capacity_bytes"))
    except Exception:
        cap = 64 * 1024 * 1024                 # conservative: v7x physical VMEM
    return max(32 * 1024 * 1024, min(cap - 16 * 1024 * 1024, 100 * 1024 * 1024))


def depth_lstm_pallas(x, h0, c0, w_ih, w_hh, *, t_chunk=32, b_tile=256,
                      mxu_dtype=None):
    """Single-layer bias-free LSTM forward (GeniePath `Depth`).

    x: (T, B, D_in); h0, c0: (1, B, H); w_ih: (4H, D_in); w_hh: (4H, H).
    Returns y (T, B, H) and (h_T, c_T) each (1, B, H), all in x.dtype.
    mxu_dtype: matmul-operand dtype (default bf16; pass jnp.float32 for a
    slower, tighter-numerics path).
    """
    T, B, D_in = x.shape
    H = h0.shape[-1]
    io_dtype = x.dtype
    if mxu_dtype is None:
        mxu_dtype = jnp.bfloat16
    gx_dtype = jnp.float32 if mxu_dtype == jnp.float32 else mxu_dtype

    # Per-gate, right-multiplication weight layout; single one-time cast here.
    wih_g = jnp.transpose(w_ih.reshape(4, H, D_in), (0, 2, 1)).astype(mxu_dtype)  # (4, D_in, H)
    whh_g = jnp.transpose(w_hh.reshape(4, H, H), (0, 2, 1)).astype(mxu_dtype)     # (4, H, H)

    # Initial state stays f32 (no lossy io-dtype round-trip of c0 / h0).
    h0f = h0.astype(jnp.float32)
    c0f = c0.astype(jnp.float32)

    # Batch tiling WITHOUT padding x (no extra full-HBM copy): partial last tiles
    # are handled by Pallas OOB-read / masked-write semantics; batch rows never
    # mix inside the row-wise matmuls and elementwise ops.
    if B <= b_tile:
        BT = B                                  # full-dim block: always legal
    else:
        BT = max(8, (b_tile // 8) * 8)          # must be sublane-aligned
    nb = pl.cdiv(B, BT)
    TC = max(1, min(t_chunk, T))
    nt = pl.cdiv(T, TC)

    grid_spec = pltpu.PrefetchScalarGridSpec(
        num_scalar_prefetch=0,
        grid=(nb, nt),                                          # (parallel, sequential)
        in_specs=[
            pl.BlockSpec((TC, BT, D_in), lambda b, t: (t, b, 0)),   # x chunk
            pl.BlockSpec((1, BT, H), lambda b, t: (0, b, 0)),       # h0 (f32)
            pl.BlockSpec((1, BT, H), lambda b, t: (0, b, 0)),       # c0 (f32)
            pl.BlockSpec((4, D_in, H), lambda b, t: (0, 0, 0)),     # W_ih per gate (resident)
            pl.BlockSpec((4, H, H), lambda b, t: (0, 0, 0)),        # W_hh per gate (resident)
        ],
        out_specs=[
            pl.BlockSpec((TC, BT, H), lambda b, t: (t, b, 0)),      # y chunk
            pl.BlockSpec((1, BT, H), lambda b, t: (0, b, 0)),       # h_T
            pl.BlockSpec((1, BT, H), lambda b, t: (0, b, 0)),       # c_T
        ],
        scratch_shapes=[
            pltpu.VMEM((4, TC, BT, H), gx_dtype),   # per-chunk, per-gate x-projection
            pltpu.VMEM((BT, H), jnp.float32),       # carried h (f32)
            pltpu.VMEM((BT, H), jnp.float32),       # carried c (f32)
        ],
    )

    y, hT, cT = pl.pallas_call(
        functools.partial(_lstm_chunk_kernel, seq_len=T, mxu_dtype=mxu_dtype),
        grid_spec=grid_spec,
        out_shape=(
            jax.ShapeDtypeStruct((T, B, H), io_dtype),
            jax.ShapeDtypeStruct((1, B, H), io_dtype),
            jax.ShapeDtypeStruct((1, B, H), io_dtype),
        ),
        compiler_params=pltpu.CompilerParams(
            dimension_semantics=("parallel", "arbitrary"),
            vmem_limit_bytes=_vmem_limit_bytes(),
        ),
    )(x, h0f, c0f, wih_g, whh_g)

    return y, (hT, cT)


def _lstm_reference(x, h0, c0, w_ih, w_hh):
    """Pure-JAX reference matching torch.nn.LSTM(in_dim, H, 1, bias=False)."""
    H = h0.shape[-1]

    def step(carry, x_t):
        h, c = carry
        gates = x_t @ w_ih.T + h @ w_hh.T
        i = jax.nn.sigmoid(gates[:, 0 * H:1 * H])
        f = jax.nn.sigmoid(gates[:, 1 * H:2 * H])
        g = jnp.tanh(gates[:, 2 * H:3 * H])
        o = jax.nn.sigmoid(gates[:, 3 * H:4 * H])
        c_new = f * c + i * g
        h_new = o * jnp.tanh(c_new)
        return (h_new, c_new), h_new

    (hT, cT), y = jax.lax.scan(step, (h0[0], c0[0]), x)
    return y, (hT[None], cT[None])


if __name__ == "__main__":
    T, B, D_IN, HID = 8, 4, 16, 32

    key = jax.random.PRNGKey(0)
    kx, kh, kc, kwi, kwh = jax.random.split(key, 5)

    x = jax.random.normal(kx, (T, B, D_IN), dtype=jnp.float32)
    h0 = jax.random.normal(kh, (1, B, HID), dtype=jnp.float32)
    c0 = jax.random.normal(kc, (1, B, HID), dtype=jnp.float32)

    # PyTorch LSTM init: U(-1/sqrt(H), 1/sqrt(H)); deterministic via PRNGKey(0).
    bound = 1.0 / (HID ** 0.5)
    w_ih = jax.random.uniform(kwi, (4 * HID, D_IN), jnp.float32, -bound, bound)
    w_hh = jax.random.uniform(kwh, (4 * HID, HID), jnp.float32, -bound, bound)

    y_ref, (hT_ref, cT_ref) = _lstm_reference(x, h0, c0, w_ih, w_hh)

    # Validation path: f32 MXU operands, tight tolerance.
    y32, (h32, c32) = depth_lstm_pallas(x, h0, c0, w_ih, w_hh,
                                        mxu_dtype=jnp.float32)
    # Performance path (default): bf16 MXU operands, f32 accumulation.
    ybf, (hbf, cbf) = depth_lstm_pallas(x, h0, c0, w_ih, w_hh)
    jax.block_until_ready((y32, h32, c32, ybf, hbf, cbf))

    assert y32.shape == y_ref.shape and h32.shape == hT_ref.shape and c32.shape == cT_ref.shape
    assert jnp.allclose(y32, y_ref, atol=1e-5, rtol=1e-5)
    assert jnp.allclose(h32, hT_ref, atol=1e-5, rtol=1e-5)
    assert jnp.allclose(c32, cT_ref, atol=1e-5, rtol=1e-5)

    # bf16 matmul operands trade numerics for ~3x per-step MXU latency.
    assert jnp.allclose(ybf, y_ref, atol=5e-2, rtol=5e-2)
    assert jnp.allclose(hbf, hT_ref, atol=5e-2, rtol=5e-2)
    assert jnp.allclose(cbf, cT_ref, atol=5e-2, rtol=5e-2)

    print("KERNEL_OK")
</pallas_src>

<mosaic_0001>
module attributes {stable_mosaic.version = 11 : i64} {
  func.func @_lstm_chunk_kernel(%arg0: i32, %arg1: i32, %arg2: memref<8x4x16xf32, #tpu.memory_space<vmem>>, %arg3: memref<1x4x32xf32, #tpu.memory_space<vmem>>, %arg4: memref<1x4x32xf32, #tpu.memory_space<vmem>>, %arg5: memref<4x16x32xf32, #tpu.memory_space<vmem>>, %arg6: memref<4x32x32xf32, #tpu.memory_space<vmem>>, %arg7: memref<8x4x32xf32, #tpu.memory_space<vmem>>, %arg8: memref<1x4x32xf32, #tpu.memory_space<vmem>>, %arg9: memref<1x4x32xf32, #tpu.memory_space<vmem>>, %arg10: memref<4x8x4x32xf32, #tpu.memory_space<vmem>>, %arg11: memref<4x32xf32, #tpu.memory_space<vmem>>, %arg12: memref<4x32xf32, #tpu.memory_space<vmem>>) attributes {dimension_semantics = [#tpu.dimension_semantics<parallel>, #tpu.dimension_semantics<arbitrary>], iteration_bounds = array<i64: 1, 1>, scalar_prefetch = 0 : i64, scratch_operands = 3 : i64, tpu.core_type = #tpu.core_type<tc>, window_params = [{transform_indices = @transform_0, window_bounds = array<i64: 8, 4, 16>}, {transform_indices = @transform_1, window_bounds = array<i64: 1, 4, 32>}, {transform_indices = @transform_2, window_bounds = array<i64: 1, 4, 32>}, {pipeline_mode = #tpu.pipeline_mode<synchronous>, transform_indices = @transform_3, window_bounds = array<i64: 4, 16, 32>}, {pipeline_mode = #tpu.pipeline_mode<synchronous>, transform_indices = @transform_4, window_bounds = array<i64: 4, 32, 32>}, {transform_indices = @transform_5, window_bounds = array<i64: 8, 4, 32>}, {transform_indices = @transform_6, window_bounds = array<i64: 1, 4, 32>}, {transform_indices = @transform_7, window_bounds = array<i64: 1, 4, 32>}]} {
    %c0_i32 = arith.constant 0 : i32
    %0 = arith.cmpi eq, %arg1, %c0_i32 : i32
    %1 = arith.extui %0 : i1 to i32
    %c0_i32_0 = arith.constant 0 : i32
    %2 = arith.cmpi ne, %1, %c0_i32_0 : i32
    scf.if %2 {
      %c0_362 = arith.constant 0 : index
      %c0_363 = arith.constant 0 : index
      %c0_364 = arith.constant 0 : index
      %492 = vector.load %arg3[%c0_362, %c0_363, %c0_364] : memref<1x4x32xf32, #tpu.memory_space<vmem>>, vector<1x4x32xf32>
      %493 = vector.shape_cast %492 : vector<1x4x32xf32> to vector<4x32xf32>
      %c0_365 = arith.constant 0 : index
      %c0_366 = arith.constant 0 : index
      %494 = vector.load %arg11[%c0_365, %c0_366] : memref<4x32xf32, #tpu.memory_space<vmem>>, vector<4x32xf32>
      tpu.vector_store %arg11[%c0_365, %c0_366], %493 {strides = array<i32>} : memref<4x32xf32, #tpu.memory_space<vmem>>, vector<4x32xf32>,
      %c0_367 = arith.constant 0 : index
      %c0_368 = arith.constant 0 : index
      %c0_369 = arith.constant 0 : index
      %495 = vector.load %arg4[%c0_367, %c0_368, %c0_369] : memref<1x4x32xf32, #tpu.memory_space<vmem>>, vector<1x4x32xf32>
      %496 = vector.shape_cast %495 : vector<1x4x32xf32> to vector<4x32xf32>
      %c0_370 = arith.constant 0 : index
      %c0_371 = arith.constant 0 : index
      %497 = vector.load %arg12[%c0_370, %c0_371] : memref<4x32xf32, #tpu.memory_space<vmem>>, vector<4x32xf32>
      tpu.vector_store %arg12[%c0_370, %c0_371], %496 {strides = array<i32>} : memref<4x32xf32, #tpu.memory_space<vmem>>, vector<4x32xf32>,
    } else {
    }
    %c0 = arith.constant 0 : index
    %c0_1 = arith.constant 0 : index
    %c0_2 = arith.constant 0 : index
    %3 = vector.load %arg2[%c0, %c0_1, %c0_2] : memref<8x4x16xf32, #tpu.memory_space<vmem>>, vector<8x4x16xf32>
    %4 = vector.shape_cast %3 : vector<8x4x16xf32> to vector<32x16xf32>
    %c0_3 = arith.constant 0 : index
    %c0_4 = arith.constant 0 : index
    %c0_5 = arith.constant 0 : index
    %5 = vector.load %arg5[%c0_3, %c0_4, %c0_5] : memref<4x16x32xf32, #tpu.memory_space<vmem>>, vector<1x16x32xf32>
    %6 = vector.shape_cast %5 : vector<1x16x32xf32> to vector<16x32xf32>
    %cst = arith.constant dense<0.000000e+00> : vector<32x32xf32>
    %7 = tpu.matmul %4, %6, %cst {dimension_numbers = #tpu.dot_dimension_numbers<[1], [0], [0], [1], [0, 0, 1, 1], [], []>} : vector<32x16xf32>, vector<16x32xf32>, vector<32x32xf32> -> vector<32x32xf32>
    %8 = vector.shape_cast %7 : vector<32x32xf32> to vector<8x4x32xf32>
    %c0_6 = arith.constant 0 : index
    %c0_7 = arith.constant 0 : index
    %c0_8 = arith.constant 0 : index
    %c0_9 = arith.constant 0 : index
    %9 = vector.load %arg10[%c0_6, %c0_7, %c0_8, %c0_9] : memref<4x8x4x32xf32, #tpu.memory_space<vmem>>, vector<1x8x4x32xf32>
    %10 = vector.shape_cast %9 : vector<1x8x4x32xf32> to vector<8x4x32xf32>
    %11 = vector.shape_cast %8 : vector<8x4x32xf32> to vector<1x8x4x32xf32>
    tpu.vector_store %arg10[%c0_6, %c0_7, %c0_8, %c0_9], %11 {strides = array<i32>} : memref<4x8x4x32xf32, #tpu.memory_space<vmem>>, vector<1x8x4x32xf32>,
    %c1 = arith.constant 1 : index
    %c0_10 = arith.constant 0 : index
    %c0_11 = arith.constant 0 : index
    %12 = vector.load %arg5[%c1, %c0_10, %c0_11] : memref<4x16x32xf32, #tpu.memory_space<vmem>>, vector<1x16x32xf32>
    %13 = vector.shape_cast %12 : vector<1x16x32xf32> to vector<16x32xf32>
    %cst_12 = arith.constant dense<0.000000e+00> : vector<32x32xf32>
    %14 = tpu.matmul %4, %13, %cst_12 {dimension_numbers = #tpu.dot_dimension_numbers<[1], [0], [0], [1], [0, 0, 1, 1], [], []>} : vector<32x16xf32>, vector<16x32xf32>, vector<32x32xf32> -> vector<32x32xf32>
    %15 = vector.shape_cast %14 : vector<32x32xf32> to vector<8x4x32xf32>
    %c1_13 = arith.constant 1 : index
    %c0_14 = arith.constant 0 : index
    %c0_15 = arith.constant 0 : index
    %c0_16 = arith.constant 0 : index
    %16 = vector.load %arg10[%c1_13, %c0_14, %c0_15, %c0_16] : memref<4x8x4x32xf32, #tpu.memory_space<vmem>>, vector<1x8x4x32xf32>
    %17 = vector.shape_cast %16 : vector<1x8x4x32xf32> to vector<8x4x32xf32>
    %18 = vector.shape_cast %15 : vector<8x4x32xf32> to vector<1x8x4x32xf32>
    tpu.vector_store %arg10[%c1_13, %c0_14, %c0_15, %c0_16], %18 {strides = array<i32>} : memref<4x8x4x32xf32, #tpu.memory_space<vmem>>, vector<1x8x4x32xf32>,
    %c2 = arith.constant 2 : index
    %c0_17 = arith.constant 0 : index
    %c0_18 = arith.constant 0 : index
    %19 = vector.load %arg5[%c2, %c0_17, %c0_18] : memref<4x16x32xf32, #tpu.memory_space<vmem>>, vector<1x16x32xf32>
    %20 = vector.shape_cast %19 : vector<1x16x32xf32> to vector<16x32xf32>
    %cst_19 = arith.constant dense<0.000000e+00> : vector<32x32xf32>
    %21 = tpu.matmul %4, %20, %cst_19 {dimension_numbers = #tpu.dot_dimension_numbers<[1], [0], [0], [1], [0, 0, 1, 1], [], []>} : vector<32x16xf32>, vector<16x32xf32>, vector<32x32xf32> -> vector<32x32xf32>
    %22 = vector.shape_cast %21 : vector<32x32xf32> to vector<8x4x32xf32>
    %c2_20 = arith.constant 2 : index
    %c0_21 = arith.constant 0 : index
    %c0_22 = arith.constant 0 : index
    %c0_23 = arith.constant 0 : index
    %23 = vector.load %arg10[%c2_20, %c0_21, %c0_22, %c0_23] : memref<4x8x4x32xf32, #tpu.memory_space<vmem>>, vector<1x8x4x32xf32>
    %24 = vector.shape_cast %23 : vector<1x8x4x32xf32> to vector<8x4x32xf32>
    %25 = vector.shape_cast %22 : vector<8x4x32xf32> to vector<1x8x4x32xf32>
    tpu.vector_store %arg10[%c2_20, %c0_21, %c0_22, %c0_23], %25 {strides = array<i32>} : memref<4x8x4x32xf32, #tpu.memory_space<vmem>>, vector<1x8x4x32xf32>,
    %c3 = arith.constant 3 : index
    %c0_24 = arith.constant 0 : index
    %c0_25 = arith.constant 0 : index
    %26 = vector.load %arg5[%c3, %c0_24, %c0_25] : memref<4x16x32xf32, #tpu.memory_space<vmem>>, vector<1x16x32xf32>
    %27 = vector.shape_cast %26 : vector<1x16x32xf32> to vector<16x32xf32>
    %cst_26 = arith.constant dense<0.000000e+00> : vector<32x32xf32>
    %28 = tpu.matmul %4, %27, %cst_26 {dimension_numbers = #tpu.dot_dimension_numbers<[1], [0], [0], [1], [0, 0, 1, 1], [], []>} : vector<32x16xf32>, vector<16x32xf32>, vector<32x32xf32> -> vector<32x32xf32>
    %29 = vector.shape_cast %28 : vector<32x32xf32> to vector<8x4x32xf32>
    %c3_27 = arith.constant 3 : index
    %c0_28 = arith.constant 0 : index
    %c0_29 = arith.constant 0 : index
    %c0_30 = arith.constant 0 : index
    %30 = vector.load %arg10[%c3_27, %c0_28, %c0_29, %c0_30] : memref<4x8x4x32xf32, #tpu.memory_space<vmem>>, vector<1x8x4x32xf32>
    %31 = vector.shape_cast %30 : vector<1x8x4x32xf32> to vector<8x4x32xf32>
    %32 = vector.shape_cast %29 : vector<8x4x32xf32> to vector<1x8x4x32xf32>
    tpu.vector_store %arg10[%c3_27, %c0_28, %c0_29, %c0_30], %32 {strides = array<i32>} : memref<4x8x4x32xf32, #tpu.memory_space<vmem>>, vector<1x8x4x32xf32>,
    %c0_i32_31 = arith.constant 0 : i32
    %c0_32 = arith.constant 0 : index
    %c0_33 = arith.constant 0 : index
    %33 = vector.load %arg11[%c0_32, %c0_33] : memref<4x32xf32, #tpu.memory_space<vmem>>, vector<4x32xf32>
    %c0_34 = arith.constant 0 : index
    %c0_35 = arith.constant 0 : index
    %34 = vector.load %arg12[%c0_34, %c0_35] : memref<4x32xf32, #tpu.memory_space<vmem>>, vector<4x32xf32>
    %c0_36 = arith.constant 0 : index
    %35 = arith.index_cast %c0_i32_31 : i32 to index
    %c0_37 = arith.constant 0 : index
    %c0_38 = arith.constant 0 : index
    %36 = vector.load %arg10[%c0_36, %35, %c0_37, %c0_38] : memref<4x8x4x32xf32, #tpu.memory_space<vmem>>, vector<1x1x4x32xf32>
    %37 = vector.shape_cast %36 : vector<1x1x4x32xf32> to vector<4x32xf32>
    %c0_39 = arith.constant 0 : index
    %c0_40 = arith.constant 0 : index
    %c0_41 = arith.constant 0 : index
    %38 = vector.load %arg6[%c0_39, %c0_40, %c0_41] : memref<4x32x32xf32, #tpu.memory_space<vmem>>, vector<1x32x32xf32>
    %39 = vector.shape_cast %38 : vector<1x32x32xf32> to vector<32x32xf32>
    %cst_42 = arith.constant dense<0.000000e+00> : vector<4x32xf32>
    %40 = tpu.matmul %33, %39, %cst_42 {dimension_numbers = #tpu.dot_dimension_numbers<[1], [0], [0], [1], [0, 0, 1, 1], [], []>} : vector<4x32xf32>, vector<32x32xf32>, vector<4x32xf32> -> vector<4x32xf32>
    %41 = arith.addf %37, %40 : vector<4x32xf32>
    %42 = arith.negf %41 : vector<4x32xf32>
    %43 = math.exp %42 : vector<4x32xf32>
    %cst_43 = arith.constant 1.000000e+00 : f32
    %44 = vector.broadcast %cst_43 : f32 to vector<4x32xf32>
    %45 = arith.addf %44, %43 : vector<4x32xf32>
    %46 = arith.divf %44, %45 : vector<4x32xf32>
    %c1_44 = arith.constant 1 : index
    %47 = arith.index_cast %c0_i32_31 : i32 to index
    %c0_45 = arith.constant 0 : index
    %c0_46 = arith.constant 0 : index
    %48 = vector.load %arg10[%c1_44, %47, %c0_45, %c0_46] : memref<4x8x4x32xf32, #tpu.memory_space<vmem>>, vector<1x1x4x32xf32>
    %49 = vector.shape_cast %48 : vector<1x1x4x32xf32> to vector<4x32xf32>
    %c1_47 = arith.constant 1 : index
    %c0_48 = arith.constant 0 : index
    %c0_49 = arith.constant 0 : index
    %50 = vector.load %arg6[%c1_47, %c0_48, %c0_49] : memref<4x32x32xf32, #tpu.memory_space<vmem>>, vector<1x32x32xf32>
    %51 = vector.shape_cast %50 : vector<1x32x32xf32> to vector<32x32xf32>
    %cst_50 = arith.constant dense<0.000000e+00> : vector<4x32xf32>
    %52 = tpu.matmul %33, %51, %cst_50 {dimension_numbers = #tpu.dot_dimension_numbers<[1], [0], [0], [1], [0, 0, 1, 1], [], []>} : vector<4x32xf32>, vector<32x32xf32>, vector<4x32xf32> -> vector<4x32xf32>
    %53 = arith.addf %49, %52 : vector<4x32xf32>
    %54 = arith.negf %53 : vector<4x32xf32>
    %55 = math.exp %54 : vector<4x32xf32>
    %cst_51 = arith.constant 1.000000e+00 : f32
    %56 = vector.broadcast %cst_51 : f32 to vector<4x32xf32>
    %57 = arith.addf %56, %55 : vector<4x32xf32>
    %58 = arith.divf %56, %57 : vector<4x32xf32>
    %c2_52 = arith.constant 2 : index
    %59 = arith.index_cast %c0_i32_31 : i32 to index
    %c0_53 = arith.constant 0 : index
    %c0_54 = arith.constant 0 : index
    %60 = vector.load %arg10[%c2_52, %59, %c0_53, %c0_54] : memref<4x8x4x32xf32, #tpu.memory_space<vmem>>, vector<1x1x4x32xf32>
    %61 = vector.shape_cast %60 : vector<1x1x4x32xf32> to vector<4x32xf32>
    %c2_55 = arith.constant 2 : index
    %c0_56 = arith.constant 0 : index
    %c0_57 = arith.constant 0 : index
    %62 = vector.load %arg6[%c2_55, %c0_56, %c0_57] : memref<4x32x32xf32, #tpu.memory_space<vmem>>, vector<1x32x32xf32>
    %63 = vector.shape_cast %62 : vector<1x32x32xf32> to vector<32x32xf32>
    %cst_58 = arith.constant dense<0.000000e+00> : vector<4x32xf32>
    %64 = tpu.matmul %33, %63, %cst_58 {dimension_numbers = #tpu.dot_dimension_numbers<[1], [0], [0], [1], [0, 0, 1, 1], [], []>} : vector<4x32xf32>, vector<32x32xf32>, vector<4x32xf32> -> vector<4x32xf32>
    %65 = arith.addf %61, %64 : vector<4x32xf32>
    %66 = math.tanh %65 : vector<4x32xf32>
    %c3_59 = arith.constant 3 : index
    %67 = arith.index_cast %c0_i32_31 : i32 to index
    %c0_60 = arith.constant 0 : index
    %c0_61 = arith.constant 0 : index
    %68 = vector.load %arg10[%c3_59, %67, %c0_60, %c0_61] : memref<4x8x4x32xf32, #tpu.memory_space<vmem>>, vector<1x1x4x32xf32>
    %69 = vector.shape_cast %68 : vector<1x1x4x32xf32> to vector<4x32xf32>
    %c3_62 = arith.constant 3 : index
    %c0_63 = arith.constant 0 : index
    %c0_64 = arith.constant 0 : index
    %70 = vector.load %arg6[%c3_62, %c0_63, %c0_64] : memref<4x32x32xf32, #tpu.memory_space<vmem>>, vector<1x32x32xf32>
    %71 = vector.shape_cast %70 : vector<1x32x32xf32> to vector<32x32xf32>
    %cst_65 = arith.constant dense<0.000000e+00> : vector<4x32xf32>
    %72 = tpu.matmul %33, %71, %cst_65 {dimension_numbers = #tpu.dot_dimension_numbers<[1], [0], [0], [1], [0, 0, 1, 1], [], []>} : vector<4x32xf32>, vector<32x32xf32>, vector<4x32xf32> -> vector<4x32xf32>
    %73 = arith.addf %69, %72 : vector<4x32xf32>
    %74 = arith.negf %73 : vector<4x32xf32>
    %75 = math.exp %74 : vector<4x32xf32>
    %cst_66 = arith.constant 1.000000e+00 : f32
    %76 = vector.broadcast %cst_66 : f32 to vector<4x32xf32>
    %77 = arith.addf %76, %75 : vector<4x32xf32>
    %78 = arith.divf %76, %77 : vector<4x32xf32>
    %79 = arith.mulf %58, %34 : vector<4x32xf32>
    %80 = arith.mulf %46, %66 : vector<4x32xf32>
    %81 = arith.addf %79, %80 : vector<4x32xf32>
    %82 = math.tanh %81 : vector<4x32xf32>
    %83 = arith.mulf %78, %82 : vector<4x32xf32>
    %84 = arith.index_cast %c0_i32_31 : i32 to index
    %c0_67 = arith.constant 0 : index
    %c0_68 = arith.constant 0 : index
    %85 = vector.load %arg7[%84, %c0_67, %c0_68] : memref<8x4x32xf32, #tpu.memory_space<vmem>>, vector<1x4x32xf32>
    %86 = vector.shape_cast %85 : vector<1x4x32xf32> to vector<4x32xf32>
    %87 = vector.shape_cast %83 : vector<4x32xf32> to vector<1x4x32xf32>
    tpu.vector_store %arg7[%84, %c0_67, %c0_68], %87 {strides = array<i32>} : memref<8x4x32xf32, #tpu.memory_space<vmem>>, vector<1x4x32xf32>,
    %c0_69 = arith.constant 0 : index
    %c0_70 = arith.constant 0 : index
    %88 = vector.load %arg11[%c0_69, %c0_70] : memref<4x32xf32, #tpu.memory_space<vmem>>, vector<4x32xf32>
    tpu.vector_store %arg11[%c0_69, %c0_70], %83 {strides = array<i32>} : memref<4x32xf32, #tpu.memory_space<vmem>>, vector<4x32xf32>,
    %c0_71 = arith.constant 0 : index
    %c0_72 = arith.constant 0 : index
    %89 = vector.load %arg12[%c0_71, %c0_72] : memref<4x32xf32, #tpu.memory_space<vmem>>, vector<4x32xf32>
    tpu.vector_store %arg12[%c0_71, %c0_72], %81 {strides = array<i32>} : memref<4x32xf32, #tpu.memory_space<vmem>>, vector<4x32xf32>,
    %c1_i32 = arith.constant 1 : i32
    %c0_73 = arith.constant 0 : index
    %c0_74 = arith.constant 0 : index
    %90 = vector.load %arg11[%c0_73, %c0_74] : memref<4x32xf32, #tpu.memory_space<vmem>>, vector<4x32xf32>
    %c0_75 = arith.constant 0 : index
    %c0_76 = arith.constant 0 : index
    %91 = vector.load %arg12[%c0_75, %c0_76] : memref<4x32xf32, #tpu.memory_space<vmem>>, vector<4x32xf32>
    %c0_77 = arith.constant 0 : index
    %92 = arith.index_cast %c1_i32 : i32 to index
    %c0_78 = arith.constant 0 : index
    %c0_79 = arith.constant 0 : index
    %93 = vector.load %arg10[%c0_77, %92, %c0_78, %c0_79] : memref<4x8x4x32xf32, #tpu.memory_space<vmem>>, vector<1x1x4x32xf32>
    %94 = vector.shape_cast %93 : vector<1x1x4x32xf32> to vector<4x32xf32>
    %c0_80 = arith.constant 0 : index
    %c0_81 = arith.constant 0 : index
    %c0_82 = arith.constant 0 : index
    %95 = vector.load %arg6[%c0_80, %c0_81, %c0_82] : memref<4x32x32xf32, #tpu.memory_space<vmem>>, vector<1x32x32xf32>
    %96 = vector.shape_cast %95 : vector<1x32x32xf32> to vector<32x32xf32>
    %cst_83 = arith.constant dense<0.000000e+00> : vector<4x32xf32>
    %97 = tpu.matmul %90, %96, %cst_83 {dimension_numbers = #tpu.dot_dimension_numbers<[1], [0], [0], [1], [0, 0, 1, 1], [], []>} : vector<4x32xf32>, vector<32x32xf32>, vector<4x32xf32> -> vector<4x32xf32>
    %98 = arith.addf %94, %97 : vector<4x32xf32>
    %99 = arith.negf %98 : vector<4x32xf32>
    %100 = math.exp %99 : vector<4x32xf32>
    %cst_84 = arith.constant 1.000000e+00 : f32
    %101 = vector.broadcast %cst_84 : f32 to vector<4x32xf32>
    %102 = arith.addf %101, %100 : vector<4x32xf32>
    %103 = arith.divf %101, %102 : vector<4x32xf32>
    %c1_85 = arith.constant 1 : index
    %104 = arith.index_cast %c1_i32 : i32 to index
    %c0_86 = arith.constant 0 : index
    %c0_87 = arith.constant 0 : index
    %105 = vector.load %arg10[%c1_85, %104, %c0_86, %c0_87] : memref<4x8x4x32xf32, #tpu.memory_space<vmem>>, vector<1x1x4x32xf32>
    %106 = vector.shape_cast %105 : vector<1x1x4x32xf32> to vector<4x32xf32>
    %c1_88 = arith.constant 1 : index
    %c0_89 = arith.constant 0 : index
    %c0_90 = arith.constant 0 : index
    %107 = vector.load %arg6[%c1_88, %c0_89, %c0_90] : memref<4x32x32xf32, #tpu.memory_space<vmem>>, vector<1x32x32xf32>
    %108 = vector.shape_cast %107 : vector<1x32x32xf32> to vector<32x32xf32>
    %cst_91 = arith.constant dense<0.000000e+00> : vector<4x32xf32>
    %109 = tpu.matmul %90, %108, %cst_91 {dimension_numbers = #tpu.dot_dimension_numbers<[1], [0], [0], [1], [0, 0, 1, 1], [], []>} : vector<4x32xf32>, vector<32x32xf32>, vector<4x32xf32> -> vector<4x32xf32>
    %110 = arith.addf %106, %109 : vector<4x32xf32>
    %111 = arith.negf %110 : vector<4x32xf32>
    %112 = math.exp %111 : vector<4x32xf32>
    %cst_92 = arith.constant 1.000000e+00 : f32
    %113 = vector.broadcast %cst_92 : f32 to vector<4x32xf32>
    %114 = arith.addf %113, %112 : vector<4x32xf32>
    %115 = arith.divf %113, %114 : vector<4x32xf32>
    %c2_93 = arith.constant 2 : index
    %116 = arith.index_cast %c1_i32 : i32 to index
    %c0_94 = arith.constant 0 : index
    %c0_95 = arith.constant 0 : index
    %117 = vector.load %arg10[%c2_93, %116, %c0_94, %c0_95] : memref<4x8x4x32xf32, #tpu.memory_space<vmem>>, vector<1x1x4x32xf32>
    %118 = vector.shape_cast %117 : vector<1x1x4x32xf32> to vector<4x32xf32>
    %c2_96 = arith.constant 2 : index
    %c0_97 = arith.constant 0 : index
    %c0_98 = arith.constant 0 : index
    %119 = vector.load %arg6[%c2_96, %c0_97, %c0_98] : memref<4x32x32xf32, #tpu.memory_space<vmem>>, vector<1x32x32xf32>
    %120 = vector.shape_cast %119 : vector<1x32x32xf32> to vector<32x32xf32>
    %cst_99 = arith.constant dense<0.000000e+00> : vector<4x32xf32>
    %121 = tpu.matmul %90, %120, %cst_99 {dimension_numbers = #tpu.dot_dimension_numbers<[1], [0], [0], [1], [0, 0, 1, 1], [], []>} : vector<4x32xf32>, vector<32x32xf32>, vector<4x32xf32> -> vector<4x32xf32>
    %122 = arith.addf %118, %121 : vector<4x32xf32>
    %123 = math.tanh %122 : vector<4x32xf32>
    %c3_100 = arith.constant 3 : index
    %124 = arith.index_cast %c1_i32 : i32 to index
    %c0_101 = arith.constant 0 : index
    %c0_102 = arith.constant 0 : index
    %125 = vector.load %arg10[%c3_100, %124, %c0_101, %c0_102] : memref<4x8x4x32xf32, #tpu.memory_space<vmem>>, vector<1x1x4x32xf32>
    %126 = vector.shape_cast %125 : vector<1x1x4x32xf32> to vector<4x32xf32>
    %c3_103 = arith.constant 3 : index
    %c0_104 = arith.constant 0 : index
    %c0_105 = arith.constant 0 : index
    %127 = vector.load %arg6[%c3_103, %c0_104, %c0_105] : memref<4x32x32xf32, #tpu.memory_space<vmem>>, vector<1x32x32xf32>
    %128 = vector.shape_cast %127 : vector<1x32x32xf32> to vector<32x32xf32>
    %cst_106 = arith.constant dense<0.000000e+00> : vector<4x32xf32>
    %129 = tpu.matmul %90, %128, %cst_106 {dimension_numbers = #tpu.dot_dimension_numbers<[1], [0], [0], [1], [0, 0, 1, 1], [], []>} : vector<4x32xf32>, vector<32x32xf32>, vector<4x32xf32> -> vector<4x32xf32>
    %130 = arith.addf %126, %129 : vector<4x32xf32>
    %131 = arith.negf %130 : vector<4x32xf32>
    %132 = math.exp %131 : vector<4x32xf32>
    %cst_107 = arith.constant 1.000000e+00 : f32
    %133 = vector.broadcast %cst_107 : f32 to vector<4x32xf32>
    %134 = arith.addf %133, %132 : vector<4x32xf32>
    %135 = arith.divf %133, %134 : vector<4x32xf32>
    %136 = arith.mulf %115, %91 : vector<4x32xf32>
    %137 = arith.mulf %103, %123 : vector<4x32xf32>
    %138 = arith.addf %136, %137 : vector<4x32xf32>
    %139 = math.tanh %138 : vector<4x32xf32>
    %140 = arith.mulf %135, %139 : vector<4x32xf32>
    %141 = arith.index_cast %c1_i32 : i32 to index
    %c0_108 = arith.constant 0 : index
    %c0_109 = arith.constant 0 : index
    %142 = vector.load %arg7[%141, %c0_108, %c0_109] : memref<8x4x32xf32, #tpu.memory_space<vmem>>, vector<1x4x32xf32>
    %143 = vector.shape_cast %142 : vector<1x4x32xf32> to vector<4x32xf32>
    %144 = vector.shape_cast %140 : vector<4x32xf32> to vector<1x4x32xf32>
    tpu.vector_store %arg7[%141, %c0_108, %c0_109], %144 {strides = array<i32>} : memref<8x4x32xf32, #tpu.memory_space<vmem>>, vector<1x4x32xf32>,
    %c0_110 = arith.constant 0 : index
    %c0_111 = arith.constant 0 : index
    %145 = vector.load %arg11[%c0_110, %c0_111] : memref<4x32xf32, #tpu.memory_space<vmem>>, vector<4x32xf32>
    tpu.vector_store %arg11[%c0_110, %c0_111], %140 {strides = array<i32>} : memref<4x32xf32, #tpu.memory_space<vmem>>, vector<4x32xf32>,
    %c0_112 = arith.constant 0 : index
    %c0_113 = arith.constant 0 : index
    %146 = vector.load %arg12[%c0_112, %c0_113] : memref<4x32xf32, #tpu.memory_space<vmem>>, vector<4x32xf32>
    tpu.vector_store %arg12[%c0_112, %c0_113], %138 {strides = array<i32>} : memref<4x32xf32, #tpu.memory_space<vmem>>, vector<4x32xf32>,
    %c2_i32 = arith.constant 2 : i32
    %c0_114 = arith.constant 0 : index
    %c0_115 = arith.constant 0 : index
    %147 = vector.load %arg11[%c0_114, %c0_115] : memref<4x32xf32, #tpu.memory_space<vmem>>, vector<4x32xf32>
    %c0_116 = arith.constant 0 : index
    %c0_117 = arith.constant 0 : index
    %148 = vector.load %arg12[%c0_116, %c0_117] : memref<4x32xf32, #tpu.memory_space<vmem>>, vector<4x32xf32>
    %c0_118 = arith.constant 0 : index
    %149 = arith.index_cast %c2_i32 : i32 to index
    %c0_119 = arith.constant 0 : index
    %c0_120 = arith.constant 0 : index
    %150 = vector.load %arg10[%c0_118, %149, %c0_119, %c0_120] : memref<4x8x4x32xf32, #tpu.memory_space<vmem>>, vector<1x1x4x32xf32>
    %151 = vector.shape_cast %150 : vector<1x1x4x32xf32> to vector<4x32xf32>
    %c0_121 = arith.constant 0 : index
    %c0_122 = arith.constant 0 : index
    %c0_123 = arith.constant 0 : index
    %152 = vector.load %arg6[%c0_121, %c0_122, %c0_123] : memref<4x32x32xf32, #tpu.memory_space<vmem>>, vector<1x32x32xf32>
    %153 = vector.shape_cast %152 : vector<1x32x32xf32> to vector<32x32xf32>
    %cst_124 = arith.constant dense<0.000000e+00> : vector<4x32xf32>
    %154 = tpu.matmul %147, %153, %cst_124 {dimension_numbers = #tpu.dot_dimension_numbers<[1], [0], [0], [1], [0, 0, 1, 1], [], []>} : vector<4x32xf32>, vector<32x32xf32>, vector<4x32xf32> -> vector<4x32xf32>
    %155 = arith.addf %151, %154 : vector<4x32xf32>
    %156 = arith.negf %155 : vector<4x32xf32>
    %157 = math.exp %156 : vector<4x32xf32>
    %cst_125 = arith.constant 1.000000e+00 : f32
    %158 = vector.broadcast %cst_125 : f32 to vector<4x32xf32>
    %159 = arith.addf %158, %157 : vector<4x32xf32>
    %160 = arith.divf %158, %159 : vector<4x32xf32>
    %c1_126 = arith.constant 1 : index
    %161 = arith.index_cast %c2_i32 : i32 to index
    %c0_127 = arith.constant 0 : index
    %c0_128 = arith.constant 0 : index
    %162 = vector.load %arg10[%c1_126, %161, %c0_127, %c0_128] : memref<4x8x4x32xf32, #tpu.memory_space<vmem>>, vector<1x1x4x32xf32>
    %163 = vector.shape_cast %162 : vector<1x1x4x32xf32> to vector<4x32xf32>
    %c1_129 = arith.constant 1 : index
    %c0_130 = arith.constant 0 : index
    %c0_131 = arith.constant 0 : index
    %164 = vector.load %arg6[%c1_129, %c0_130, %c0_131] : memref<4x32x32xf32, #tpu.memory_space<vmem>>, vector<1x32x32xf32>
    %165 = vector.shape_cast %164 : vector<1x32x32xf32> to vector<32x32xf32>
    %cst_132 = arith.constant dense<0.000000e+00> : vector<4x32xf32>
    %166 = tpu.matmul %147, %165, %cst_132 {dimension_numbers = #tpu.dot_dimension_numbers<[1], [0], [0], [1], [0, 0, 1, 1], [], []>} : vector<4x32xf32>, vector<32x32xf32>, vector<4x32xf32> -> vector<4x32xf32>
    %167 = arith.addf %163, %166 : vector<4x32xf32>
    %168 = arith.negf %167 : vector<4x32xf32>
    %169 = math.exp %168 : vector<4x32xf32>
    %cst_133 = arith.constant 1.000000e+00 : f32
    %170 = vector.broadcast %cst_133 : f32 to vector<4x32xf32>
    %171 = arith.addf %170, %169 : vector<4x32xf32>
    %172 = arith.divf %170, %171 : vector<4x32xf32>
    %c2_134 = arith.constant 2 : index
    %173 = arith.index_cast %c2_i32 : i32 to index
    %c0_135 = arith.constant 0 : index
    %c0_136 = arith.constant 0 : index
    %174 = vector.load %arg10[%c2_134, %173, %c0_135, %c0_136] : memref<4x8x4x32xf32, #tpu.memory_space<vmem>>, vector<1x1x4x32xf32>
    %175 = vector.shape_cast %174 : vector<1x1x4x32xf32> to vector<4x32xf32>
    %c2_137 = arith.constant 2 : index
    %c0_138 = arith.constant 0 : index
    %c0_139 = arith.constant 0 : index
    %176 = vector.load %arg6[%c2_137, %c0_138, %c0_139] : memref<4x32x32xf32, #tpu.memory_space<vmem>>, vector<1x32x32xf32>
    %177 = vector.shape_cast %176 : vector<1x32x32xf32> to vector<32x32xf32>
    %cst_140 = arith.constant dense<0.000000e+00> : vector<4x32xf32>
    %178 = tpu.matmul %147, %177, %cst_140 {dimension_numbers = #tpu.dot_dimension_numbers<[1], [0], [0], [1], [0, 0, 1, 1], [], []>} : vector<4x32xf32>, vector<32x32xf32>, vector<4x32xf32> -> vector<4x32xf32>
    %179 = arith.addf %175, %178 : vector<4x32xf32>
    %180 = math.tanh %179 : vector<4x32xf32>
    %c3_141 = arith.constant 3 : index
    %181 = arith.index_cast %c2_i32 : i32 to index
    %c0_142 = arith.constant 0 : index
    %c0_143 = arith.constant 0 : index
    %182 = vector.load %arg10[%c3_141, %181, %c0_142, %c0_143] : memref<4x8x4x32xf32, #tpu.memory_space<vmem>>, vector<1x1x4x32xf32>
    %183 = vector.shape_cast %182 : vector<1x1x4x32xf32> to vector<4x32xf32>
    %c3_144 = arith.constant 3 : index
    %c0_145 = arith.constant 0 : index
    %c0_146 = arith.constant 0 : index
    %184 = vector.load %arg6[%c3_144, %c0_145, %c0_146] : memref<4x32x32xf32, #tpu.memory_space<vmem>>, vector<1x32x32xf32>
    %185 = vector.shape_cast %184 : vector<1x32x32xf32> to vector<32x32xf32>
    %cst_147 = arith.constant dense<0.000000e+00> : vector<4x32xf32>
    %186 = tpu.matmul %147, %185, %cst_147 {dimension_numbers = #tpu.dot_dimension_numbers<[1], [0], [0], [1], [0, 0, 1, 1], [], []>} : vector<4x32xf32>, vector<32x32xf32>, vector<4x32xf32> -> vector<4x32xf32>
    %187 = arith.addf %183, %186 : vector<4x32xf32>
    %188 = arith.negf %187 : vector<4x32xf32>
    %189 = math.exp %188 : vector<4x32xf32>
    %cst_148 = arith.constant 1.000000e+00 : f32
    %190 = vector.broadcast %cst_148 : f32 to vector<4x32xf32>
    %191 = arith.addf %190, %189 : vector<4x32xf32>
    %192 = arith.divf %190, %191 : vector<4x32xf32>
    %193 = arith.mulf %172, %148 : vector<4x32xf32>
    %194 = arith.mulf %160, %180 : vector<4x32xf32>
    %195 = arith.addf %193, %194 : vector<4x32xf32>
    %196 = math.tanh %195 : vector<4x32xf32>
    %197 = arith.mulf %192, %196 : vector<4x32xf32>
    %198 = arith.index_cast %c2_i32 : i32 to index
    %c0_149 = arith.constant 0 : index
    %c0_150 = arith.constant 0 : index
    %199 = vector.load %arg7[%198, %c0_149, %c0_150] : memref<8x4x32xf32, #tpu.memory_space<vmem>>, vector<1x4x32xf32>
    %200 = vector.shape_cast %199 : vector<1x4x32xf32> to vector<4x32xf32>
    %201 = vector.shape_cast %197 : vector<4x32xf32> to vector<1x4x32xf32>
    tpu.vector_store %arg7[%198, %c0_149, %c0_150], %201 {strides = array<i32>} : memref<8x4x32xf32, #tpu.memory_space<vmem>>, vector<1x4x32xf32>,
    %c0_151 = arith.constant 0 : index
    %c0_152 = arith.constant 0 : index
    %202 = vector.load %arg11[%c0_151, %c0_152] : memref<4x32xf32, #tpu.memory_space<vmem>>, vector<4x32xf32>
    tpu.vector_store %arg11[%c0_151, %c0_152], %197 {strides = array<i32>} : memref<4x32xf32, #tpu.memory_space<vmem>>, vector<4x32xf32>,
    %c0_153 = arith.constant 0 : index
    %c0_154 = arith.constant 0 : index
    %203 = vector.load %arg12[%c0_153, %c0_154] : memref<4x32xf32, #tpu.memory_space<vmem>>, vector<4x32xf32>
    tpu.vector_store %arg12[%c0_153, %c0_154], %195 {strides = array<i32>} : memref<4x32xf32, #tpu.memory_space<vmem>>, vector<4x32xf32>,
    %c3_i32 = arith.constant 3 : i32
    %c0_155 = arith.constant 0 : index
    %c0_156 = arith.constant 0 : index
    %204 = vector.load %arg11[%c0_155, %c0_156] : memref<4x32xf32, #tpu.memory_space<vmem>>, vector<4x32xf32>
    %c0_157 = arith.constant 0 : index
    %c0_158 = arith.constant 0 : index
    %205 = vector.load %arg12[%c0_157, %c0_158] : memref<4x32xf32, #tpu.memory_space<vmem>>, vector<4x32xf32>
    %c0_159 = arith.constant 0 : index
    %206 = arith.index_cast %c3_i32 : i32 to index
    %c0_160 = arith.constant 0 : index
    %c0_161 = arith.constant 0 : index
    %207 = vector.load %arg10[%c0_159, %206, %c0_160, %c0_161] : memref<4x8x4x32xf32, #tpu.memory_space<vmem>>, vector<1x1x4x32xf32>
    %208 = vector.shape_cast %207 : vector<1x1x4x32xf32> to vector<4x32xf32>
    %c0_162 = arith.constant 0 : index
    %c0_163 = arith.constant 0 : index
    %c0_164 = arith.constant 0 : index
    %209 = vector.load %arg6[%c0_162, %c0_163, %c0_164] : memref<4x32x32xf32, #tpu.memory_space<vmem>>, vector<1x32x32xf32>
    %210 = vector.shape_cast %209 : vector<1x32x32xf32> to vector<32x32xf32>
    %cst_165 = arith.constant dense<0.000000e+00> : vector<4x32xf32>
    %211 = tpu.matmul %204, %210, %cst_165 {dimension_numbers = #tpu.dot_dimension_numbers<[1], [0], [0], [1], [0, 0, 1, 1], [], []>} : vector<4x32xf32>, vector<32x32xf32>, vector<4x32xf32> -> vector<4x32xf32>
    %212 = arith.addf %208, %211 : vector<4x32xf32>
    %213 = arith.negf %212 : vector<4x32xf32>
    %214 = math.exp %213 : vector<4x32xf32>
    %cst_166 = arith.constant 1.000000e+00 : f32
    %215 = vector.broadcast %cst_166 : f32 to vector<4x32xf32>
    %216 = arith.addf %215, %214 : vector<4x32xf32>
    %217 = arith.divf %215, %216 : vector<4x32xf32>
    %c1_167 = arith.constant 1 : index
    %218 = arith.index_cast %c3_i32 : i32 to index
    %c0_168 = arith.constant 0 : index
    %c0_169 = arith.constant 0 : index
    %219 = vector.load %arg10[%c1_167, %218, %c0_168, %c0_169] : memref<4x8x4x32xf32, #tpu.memory_space<vmem>>, vector<1x1x4x32xf32>
    %220 = vector.shape_cast %219 : vector<1x1x4x32xf32> to vector<4x32xf32>
    %c1_170 = arith.constant 1 : index
    %c0_171 = arith.constant 0 : index
    %c0_172 = arith.constant 0 : index
    %221 = vector.load %arg6[%c1_170, %c0_171, %c0_172] : memref<4x32x32xf32, #tpu.memory_space<vmem>>, vector<1x32x32xf32>
    %222 = vector.shape_cast %221 : vector<1x32x32xf32> to vector<32x32xf32>
    %cst_173 = arith.constant dense<0.000000e+00> : vector<4x32xf32>
    %223 = tpu.matmul %204, %222, %cst_173 {dimension_numbers = #tpu.dot_dimension_numbers<[1], [0], [0], [1], [0, 0, 1, 1], [], []>} : vector<4x32xf32>, vector<32x32xf32>, vector<4x32xf32> -> vector<4x32xf32>
    %224 = arith.addf %220, %223 : vector<4x32xf32>
    %225 = arith.negf %224 : vector<4x32xf32>
    %226 = math.exp %225 : vector<4x32xf32>
    %cst_174 = arith.constant 1.000000e+00 : f32
    %227 = vector.broadcast %cst_174 : f32 to vector<4x32xf32>
    %228 = arith.addf %227, %226 : vector<4x32xf32>
    %229 = arith.divf %227, %228 : vector<4x32xf32>
    %c2_175 = arith.constant 2 : index
    %230 = arith.index_cast %c3_i32 : i32 to index
    %c0_176 = arith.constant 0 : index
    %c0_177 = arith.constant 0 : index
    %231 = vector.load %arg10[%c2_175, %230, %c0_176, %c0_177] : memref<4x8x4x32xf32, #tpu.memory_space<vmem>>, vector<1x1x4x32xf32>
    %232 = vector.shape_cast %231 : vector<1x1x4x32xf32> to vector<4x32xf32>
    %c2_178 = arith.constant 2 : index
    %c0_179 = arith.constant 0 : index
    %c0_180 = arith.constant 0 : index
    %233 = vector.load %arg6[%c2_178, %c0_179, %c0_180] : memref<4x32x32xf32, #tpu.memory_space<vmem>>, vector<1x32x32xf32>
    %234 = vector.shape_cast %233 : vector<1x32x32xf32> to vector<32x32xf32>
    %cst_181 = arith.constant dense<0.000000e+00> : vector<4x32xf32>
    %235 = tpu.matmul %204, %234, %cst_181 {dimension_numbers = #tpu.dot_dimension_numbers<[1], [0], [0], [1], [0, 0, 1, 1], [], []>} : vector<4x32xf32>, vector<32x32xf32>, vector<4x32xf32> -> vector<4x32xf32>
    %236 = arith.addf %232, %235 : vector<4x32xf32>
    %237 = math.tanh %236 : vector<4x32xf32>
    %c3_182 = arith.constant 3 : index
    %238 = arith.index_cast %c3_i32 : i32 to index
    %c0_183 = arith.constant 0 : index
    %c0_184 = arith.constant 0 : index
    %239 = vector.load %arg10[%c3_182, %238, %c0_183, %c0_184] : memref<4x8x4x32xf32, #tpu.memory_space<vmem>>, vector<1x1x4x32xf32>
    %240 = vector.shape_cast %239 : vector<1x1x4x32xf32> to vector<4x32xf32>
    %c3_185 = arith.constant 3 : index
    %c0_186 = arith.constant 0 : index
    %c0_187 = arith.constant 0 : index
    %241 = vector.load %arg6[%c3_185, %c0_186, %c0_187] : memref<4x32x32xf32, #tpu.memory_space<vmem>>, vector<1x32x32xf32>
    %242 = vector.shape_cast %241 : vector<1x32x32xf32> to vector<32x32xf32>
    %cst_188 = arith.constant dense<0.000000e+00> : vector<4x32xf32>
    %243 = tpu.matmul %204, %242, %cst_188 {dimension_numbers = #tpu.dot_dimension_numbers<[1], [0], [0], [1], [0, 0, 1, 1], [], []>} : vector<4x32xf32>, vector<32x32xf32>, vector<4x32xf32> -> vector<4x32xf32>
    %244 = arith.addf %240, %243 : vector<4x32xf32>
    %245 = arith.negf %244 : vector<4x32xf32>
    %246 = math.exp %245 : vector<4x32xf32>
    %cst_189 = arith.constant 1.000000e+00 : f32
    %247 = vector.broadcast %cst_189 : f32 to vector<4x32xf32>
    %248 = arith.addf %247, %246 : vector<4x32xf32>
    %249 = arith.divf %247, %248 : vector<4x32xf32>
    %250 = arith.mulf %229, %205 : vector<4x32xf32>
    %251 = arith.mulf %217, %237 : vector<4x32xf32>
    %252 = arith.addf %250, %251 : vector<4x32xf32>
    %253 = math.tanh %252 : vector<4x32xf32>
    %254 = arith.mulf %249, %253 : vector<4x32xf32>
    %255 = arith.index_cast %c3_i32 : i32 to index
    %c0_190 = arith.constant 0 : index
    %c0_191 = arith.constant 0 : index
    %256 = vector.load %arg7[%255, %c0_190, %c0_191] : memref<8x4x32xf32, #tpu.memory_space<vmem>>, vector<1x4x32xf32>
    %257 = vector.shape_cast %256 : vector<1x4x32xf32> to vector<4x32xf32>
    %258 = vector.shape_cast %254 : vector<4x32xf32> to vector<1x4x32xf32>
    tpu.vector_store %arg7[%255, %c0_190, %c0_191], %258 {strides = array<i32>} : memref<8x4x32xf32, #tpu.memory_space<vmem>>, vector<1x4x32xf32>,
    %c0_192 = arith.constant 0 : index
    %c0_193 = arith.constant 0 : index
    %259 = vector.load %arg11[%c0_192, %c0_193] : memref<4x32xf32, #tpu.memory_space<vmem>>, vector<4x32xf32>
    tpu.vector_store %arg11[%c0_192, %c0_193], %254 {strides = array<i32>} : memref<4x32xf32, #tpu.memory_space<vmem>>, vector<4x32xf32>,
    %c0_194 = arith.constant 0 : index
    %c0_195 = arith.constant 0 : index
    %260 = vector.load %arg12[%c0_194, %c0_195] : memref<4x32xf32, #tpu.memory_space<vmem>>, vector<4x32xf32>
    tpu.vector_store %arg12[%c0_194, %c0_195], %252 {strides = array<i32>} : memref<4x32xf32, #tpu.memory_space<vmem>>, vector<4x32xf32>,
    %c4_i32 = arith.constant 4 : i32
    %c0_196 = arith.constant 0 : index
    %c0_197 = arith.constant 0 : index
    %261 = vector.load %arg11[%c0_196, %c0_197] : memref<4x32xf32, #tpu.memory_space<vmem>>, vector<4x32xf32>
    %c0_198 = arith.constant 0 : index
    %c0_199 = arith.constant 0 : index
    %262 = vector.load %arg12[%c0_198, %c0_199] : memref<4x32xf32, #tpu.memory_space<vmem>>, vector<4x32xf32>
    %c0_200 = arith.constant 0 : index
    %263 = arith.index_cast %c4_i32 : i32 to index
    %c0_201 = arith.constant 0 : index
    %c0_202 = arith.constant 0 : index
    %264 = vector.load %arg10[%c0_200, %263, %c0_201, %c0_202] : memref<4x8x4x32xf32, #tpu.memory_space<vmem>>, vector<1x1x4x32xf32>
    %265 = vector.shape_cast %264 : vector<1x1x4x32xf32> to vector<4x32xf32>
    %c0_203 = arith.constant 0 : index
    %c0_204 = arith.constant 0 : index
    %c0_205 = arith.constant 0 : index
    %266 = vector.load %arg6[%c0_203, %c0_204, %c0_205] : memref<4x32x32xf32, #tpu.memory_space<vmem>>, vector<1x32x32xf32>
    %267 = vector.shape_cast %266 : vector<1x32x32xf32> to vector<32x32xf32>
    %cst_206 = arith.constant dense<0.000000e+00> : vector<4x32xf32>
    %268 = tpu.matmul %261, %267, %cst_206 {dimension_numbers = #tpu.dot_dimension_numbers<[1], [0], [0], [1], [0, 0, 1, 1], [], []>} : vector<4x32xf32>, vector<32x32xf32>, vector<4x32xf32> -> vector<4x32xf32>
    %269 = arith.addf %265, %268 : vector<4x32xf32>
    %270 = arith.negf %269 : vector<4x32xf32>
    %271 = math.exp %270 : vector<4x32xf32>
    %cst_207 = arith.constant 1.000000e+00 : f32
    %272 = vector.broadcast %cst_207 : f32 to vector<4x32xf32>
    %273 = arith.addf %272, %271 : vector<4x32xf32>
    %274 = arith.divf %272, %273 : vector<4x32xf32>
    %c1_208 = arith.constant 1 : index
    %275 = arith.index_cast %c4_i32 : i32 to index
    %c0_209 = arith.constant 0 : index
    %c0_210 = arith.constant 0 : index
    %276 = vector.load %arg10[%c1_208, %275, %c0_209, %c0_210] : memref<4x8x4x32xf32, #tpu.memory_space<vmem>>, vector<1x1x4x32xf32>
    %277 = vector.shape_cast %276 : vector<1x1x4x32xf32> to vector<4x32xf32>
    %c1_211 = arith.constant 1 : index
    %c0_212 = arith.constant 0 : index
    %c0_213 = arith.constant 0 : index
    %278 = vector.load %arg6[%c1_211, %c0_212, %c0_213] : memref<4x32x32xf32, #tpu.memory_space<vmem>>, vector<1x32x32xf32>
    %279 = vector.shape_cast %278 : vector<1x32x32xf32> to vector<32x32xf32>
    %cst_214 = arith.constant dense<0.000000e+00> : vector<4x32xf32>
    %280 = tpu.matmul %261, %279, %cst_214 {dimension_numbers = #tpu.dot_dimension_numbers<[1], [0], [0], [1], [0, 0, 1, 1], [], []>} : vector<4x32xf32>, vector<32x32xf32>, vector<4x32xf32> -> vector<4x32xf32>
    %281 = arith.addf %277, %280 : vector<4x32xf32>
    %282 = arith.negf %281 : vector<4x32xf32>
    %283 = math.exp %282 : vector<4x32xf32>
    %cst_215 = arith.constant 1.000000e+00 : f32
    %284 = vector.broadcast %cst_215 : f32 to vector<4x32xf32>
    %285 = arith.addf %284, %283 : vector<4x32xf32>
    %286 = arith.divf %284, %285 : vector<4x32xf32>
    %c2_216 = arith.constant 2 : index
    %287 = arith.index_cast %c4_i32 : i32 to index
    %c0_217 = arith.constant 0 : index
    %c0_218 = arith.constant 0 : index
    %288 = vector.load %arg10[%c2_216, %287, %c0_217, %c0_218] : memref<4x8x4x32xf32, #tpu.memory_space<vmem>>, vector<1x1x4x32xf32>
    %289 = vector.shape_cast %288 : vector<1x1x4x32xf32> to vector<4x32xf32>
    %c2_219 = arith.constant 2 : index
    %c0_220 = arith.constant 0 : index
    %c0_221 = arith.constant 0 : index
    %290 = vector.load %arg6[%c2_219, %c0_220, %c0_221] : memref<4x32x32xf32, #tpu.memory_space<vmem>>, vector<1x32x32xf32>
    %291 = vector.shape_cast %290 : vector<1x32x32xf32> to vector<32x32xf32>
    %cst_222 = arith.constant dense<0.000000e+00> : vector<4x32xf32>
    %292 = tpu.matmul %261, %291, %cst_222 {dimension_numbers = #tpu.dot_dimension_numbers<[1], [0], [0], [1], [0, 0, 1, 1], [], []>} : vector<4x32xf32>, vector<32x32xf32>, vector<4x32xf32> -> vector<4x32xf32>
    %293 = arith.addf %289, %292 : vector<4x32xf32>
    %294 = math.tanh %293 : vector<4x32xf32>
    %c3_223 = arith.constant 3 : index
    %295 = arith.index_cast %c4_i32 : i32 to index
    %c0_224 = arith.constant 0 : index
    %c0_225 = arith.constant 0 : index
    %296 = vector.load %arg10[%c3_223, %295, %c0_224, %c0_225] : memref<4x8x4x32xf32, #tpu.memory_space<vmem>>, vector<1x1x4x32xf32>
    %297 = vector.shape_cast %296 : vector<1x1x4x32xf32> to vector<4x32xf32>
    %c3_226 = arith.constant 3 : index
    %c0_227 = arith.constant 0 : index
    %c0_228 = arith.constant 0 : index
    %298 = vector.load %arg6[%c3_226, %c0_227, %c0_228] : memref<4x32x32xf32, #tpu.memory_space<vmem>>, vector<1x32x32xf32>
    %299 = vector.shape_cast %298 : vector<1x32x32xf32> to vector<32x32xf32>
    %cst_229 = arith.constant dense<0.000000e+00> : vector<4x32xf32>
    %300 = tpu.matmul %261, %299, %cst_229 {dimension_numbers = #tpu.dot_dimension_numbers<[1], [0], [0], [1], [0, 0, 1, 1], [], []>} : vector<4x32xf32>, vector<32x32xf32>, vector<4x32xf32> -> vector<4x32xf32>
    %301 = arith.addf %297, %300 : vector<4x32xf32>
    %302 = arith.negf %301 : vector<4x32xf32>
    %303 = math.exp %302 : vector<4x32xf32>
    %cst_230 = arith.constant 1.000000e+00 : f32
    %304 = vector.broadcast %cst_230 : f32 to vector<4x32xf32>
    %305 = arith.addf %304, %303 : vector<4x32xf32>
    %306 = arith.divf %304, %305 : vector<4x32xf32>
    %307 = arith.mulf %286, %262 : vector<4x32xf32>
    %308 = arith.mulf %274, %294 : vector<4x32xf32>
    %309 = arith.addf %307, %308 : vector<4x32xf32>
    %310 = math.tanh %309 : vector<4x32xf32>
    %311 = arith.mulf %306, %310 : vector<4x32xf32>
    %312 = arith.index_cast %c4_i32 : i32 to index
    %c0_231 = arith.constant 0 : index
    %c0_232 = arith.constant 0 : index
    %313 = vector.load %arg7[%312, %c0_231, %c0_232] : memref<8x4x32xf32, #tpu.memory_space<vmem>>, vector<1x4x32xf32>
    %314 = vector.shape_cast %313 : vector<1x4x32xf32> to vector<4x32xf32>
    %315 = vector.shape_cast %311 : vector<4x32xf32> to vector<1x4x32xf32>
    tpu.vector_store %arg7[%312, %c0_231, %c0_232], %315 {strides = array<i32>} : memref<8x4x32xf32, #tpu.memory_space<vmem>>, vector<1x4x32xf32>,
    %c0_233 = arith.constant 0 : index
    %c0_234 = arith.constant 0 : index
    %316 = vector.load %arg11[%c0_233, %c0_234] : memref<4x32xf32, #tpu.memory_space<vmem>>, vector<4x32xf32>
    tpu.vector_store %arg11[%c0_233, %c0_234], %311 {strides = array<i32>} : memref<4x32xf32, #tpu.memory_space<vmem>>, vector<4x32xf32>,
    %c0_235 = arith.constant 0 : index
    %c0_236 = arith.constant 0 : index
    %317 = vector.load %arg12[%c0_235, %c0_236] : memref<4x32xf32, #tpu.memory_space<vmem>>, vector<4x32xf32>
    tpu.vector_store %arg12[%c0_235, %c0_236], %309 {strides = array<i32>} : memref<4x32xf32, #tpu.memory_space<vmem>>, vector<4x32xf32>,
    %c5_i32 = arith.constant 5 : i32
    %c0_237 = arith.constant 0 : index
    %c0_238 = arith.constant 0 : index
    %318 = vector.load %arg11[%c0_237, %c0_238] : memref<4x32xf32, #tpu.memory_space<vmem>>, vector<4x32xf32>
    %c0_239 = arith.constant 0 : index
    %c0_240 = arith.constant 0 : index
    %319 = vector.load %arg12[%c0_239, %c0_240] : memref<4x32xf32, #tpu.memory_space<vmem>>, vector<4x32xf32>
    %c0_241 = arith.constant 0 : index
    %320 = arith.index_cast %c5_i32 : i32 to index
    %c0_242 = arith.constant 0 : index
    %c0_243 = arith.constant 0 : index
    %321 = vector.load %arg10[%c0_241, %320, %c0_242, %c0_243] : memref<4x8x4x32xf32, #tpu.memory_space<vmem>>, vector<1x1x4x32xf32>
    %322 = vector.shape_cast %321 : vector<1x1x4x32xf32> to vector<4x32xf32>
    %c0_244 = arith.constant 0 : index
    %c0_245 = arith.constant 0 : index
    %c0_246 = arith.constant 0 : index
    %323 = vector.load %arg6[%c0_244, %c0_245, %c0_246] : memref<4x32x32xf32, #tpu.memory_space<vmem>>, vector<1x32x32xf32>
    %324 = vector.shape_cast %323 : vector<1x32x32xf32> to vector<32x32xf32>
    %cst_247 = arith.constant dense<0.000000e+00> : vector<4x32xf32>
    %325 = tpu.matmul %318, %324, %cst_247 {dimension_numbers = #tpu.dot_dimension_numbers<[1], [0], [0], [1], [0, 0, 1, 1], [], []>} : vector<4x32xf32>, vector<32x32xf32>, vector<4x32xf32> -> vector<4x32xf32>
    %326 = arith.addf %322, %325 : vector<4x32xf32>
    %327 = arith.negf %326 : vector<4x32xf32>
    %328 = math.exp %327 : vector<4x32xf32>
    %cst_248 = arith.constant 1.000000e+00 : f32
    %329 = vector.broadcast %cst_248 : f32 to vector<4x32xf32>
    %330 = arith.addf %329, %328 : vector<4x32xf32>
    %331 = arith.divf %329, %330 : vector<4x32xf32>
    %c1_249 = arith.constant 1 : index
    %332 = arith.index_cast %c5_i32 : i32 to index
    %c0_250 = arith.constant 0 : index
    %c0_251 = arith.constant 0 : index
    %333 = vector.load %arg10[%c1_249, %332, %c0_250, %c0_251] : memref<4x8x4x32xf32, #tpu.memory_space<vmem>>, vector<1x1x4x32xf32>
    %334 = vector.shape_cast %333 : vector<1x1x4x32xf32> to vector<4x32xf32>
    %c1_252 = arith.constant 1 : index
    %c0_253 = arith.constant 0 : index
    %c0_254 = arith.constant 0 : index
    %335 = vector.load %arg6[%c1_252, %c0_253, %c0_254] : memref<4x32x32xf32, #tpu.memory_space<vmem>>, vector<1x32x32xf32>
    %336 = vector.shape_cast %335 : vector<1x32x32xf32> to vector<32x32xf32>
    %cst_255 = arith.constant dense<0.000000e+00> : vector<4x32xf32>
    %337 = tpu.matmul %318, %336, %cst_255 {dimension_numbers = #tpu.dot_dimension_numbers<[1], [0], [0], [1], [0, 0, 1, 1], [], []>} : vector<4x32xf32>, vector<32x32xf32>, vector<4x32xf32> -> vector<4x32xf32>
    %338 = arith.addf %334, %337 : vector<4x32xf32>
    %339 = arith.negf %338 : vector<4x32xf32>
    %340 = math.exp %339 : vector<4x32xf32>
    %cst_256 = arith.constant 1.000000e+00 : f32
    %341 = vector.broadcast %cst_256 : f32 to vector<4x32xf32>
    %342 = arith.addf %341, %340 : vector<4x32xf32>
    %343 = arith.divf %341, %342 : vector<4x32xf32>
    %c2_257 = arith.constant 2 : index
    %344 = arith.index_cast %c5_i32 : i32 to index
    %c0_258 = arith.constant 0 : index
    %c0_259 = arith.constant 0 : index
    %345 = vector.load %arg10[%c2_257, %344, %c0_258, %c0_259] : memref<4x8x4x32xf32, #tpu.memory_space<vmem>>, vector<1x1x4x32xf32>
    %346 = vector.shape_cast %345 : vector<1x1x4x32xf32> to vector<4x32xf32>
    %c2_260 = arith.constant 2 : index
    %c0_261 = arith.constant 0 : index
    %c0_262 = arith.constant 0 : index
    %347 = vector.load %arg6[%c2_260, %c0_261, %c0_262] : memref<4x32x32xf32, #tpu.memory_space<vmem>>, vector<1x32x32xf32>
    %348 = vector.shape_cast %347 : vector<1x32x32xf32> to vector<32x32xf32>
    %cst_263 = arith.constant dense<0.000000e+00> : vector<4x32xf32>
    %349 = tpu.matmul %318, %348, %cst_263 {dimension_numbers = #tpu.dot_dimension_numbers<[1], [0], [0], [1], [0, 0, 1, 1], [], []>} : vector<4x32xf32>, vector<32x32xf32>, vector<4x32xf32> -> vector<4x32xf32>
    %350 = arith.addf %346, %349 : vector<4x32xf32>
    %351 = math.tanh %350 : vector<4x32xf32>
    %c3_264 = arith.constant 3 : index
    %352 = arith.index_cast %c5_i32 : i32 to index
    %c0_265 = arith.constant 0 : index
    %c0_266 = arith.constant 0 : index
    %353 = vector.load %arg10[%c3_264, %352, %c0_265, %c0_266] : memref<4x8x4x32xf32, #tpu.memory_space<vmem>>, vector<1x1x4x32xf32>
    %354 = vector.shape_cast %353 : vector<1x1x4x32xf32> to vector<4x32xf32>
    %c3_267 = arith.constant 3 : index
    %c0_268 = arith.constant 0 : index
    %c0_269 = arith.constant 0 : index
    %355 = vector.load %arg6[%c3_267, %c0_268, %c0_269] : memref<4x32x32xf32, #tpu.memory_space<vmem>>, vector<1x32x32xf32>
    %356 = vector.shape_cast %355 : vector<1x32x32xf32> to vector<32x32xf32>
    %cst_270 = arith.constant dense<0.000000e+00> : vector<4x32xf32>
    %357 = tpu.matmul %318, %356, %cst_270 {dimension_numbers = #tpu.dot_dimension_numbers<[1], [0], [0], [1], [0, 0, 1, 1], [], []>} : vector<4x32xf32>, vector<32x32xf32>, vector<4x32xf32> -> vector<4x32xf32>
    %358 = arith.addf %354, %357 : vector<4x32xf32>
    %359 = arith.negf %358 : vector<4x32xf32>
    %360 = math.exp %359 : vector<4x32xf32>
    %cst_271 = arith.constant 1.000000e+00 : f32
    %361 = vector.broadcast %cst_271 : f32 to vector<4x32xf32>
    %362 = arith.addf %361, %360 : vector<4x32xf32>
    %363 = arith.divf %361, %362 : vector<4x32xf32>
    %364 = arith.mulf %343, %319 : vector<4x32xf32>
    %365 = arith.mulf %331, %351 : vector<4x32xf32>
    %366 = arith.addf %364, %365 : vector<4x32xf32>
    %367 = math.tanh %366 : vector<4x32xf32>
    %368 = arith.mulf %363, %367 : vector<4x32xf32>
    %369 = arith.index_cast %c5_i32 : i32 to index
    %c0_272 = arith.constant 0 : index
    %c0_273 = arith.constant 0 : index
    %370 = vector.load %arg7[%369, %c0_272, %c0_273] : memref<8x4x32xf32, #tpu.memory_space<vmem>>, vector<1x4x32xf32>
    %371 = vector.shape_cast %370 : vector<1x4x32xf32> to vector<4x32xf32>
    %372 = vector.shape_cast %368 : vector<4x32xf32> to vector<1x4x32xf32>
    tpu.vector_store %arg7[%369, %c0_272, %c0_273], %372 {strides = array<i32>} : memref<8x4x32xf32, #tpu.memory_space<vmem>>, vector<1x4x32xf32>,
    %c0_274 = arith.constant 0 : index
    %c0_275 = arith.constant 0 : index
    %373 = vector.load %arg11[%c0_274, %c0_275] : memref<4x32xf32, #tpu.memory_space<vmem>>, vector<4x32xf32>
    tpu.vector_store %arg11[%c0_274, %c0_275], %368 {strides = array<i32>} : memref<4x32xf32, #tpu.memory_space<vmem>>, vector<4x32xf32>,
    %c0_276 = arith.constant 0 : index
    %c0_277 = arith.constant 0 : index
    %374 = vector.load %arg12[%c0_276, %c0_277] : memref<4x32xf32, #tpu.memory_space<vmem>>, vector<4x32xf32>
    tpu.vector_store %arg12[%c0_276, %c0_277], %366 {strides = array<i32>} : memref<4x32xf32, #tpu.memory_space<vmem>>, vector<4x32xf32>,
    %c6_i32 = arith.constant 6 : i32
    %c0_278 = arith.constant 0 : index
    %c0_279 = arith.constant 0 : index
    %375 = vector.load %arg11[%c0_278, %c0_279] : memref<4x32xf32, #tpu.memory_space<vmem>>, vector<4x32xf32>
    %c0_280 = arith.constant 0 : index
    %c0_281 = arith.constant 0 : index
    %376 = vector.load %arg12[%c0_280, %c0_281] : memref<4x32xf32, #tpu.memory_space<vmem>>, vector<4x32xf32>
    %c0_282 = arith.constant 0 : index
    %377 = arith.index_cast %c6_i32 : i32 to index
    %c0_283 = arith.constant 0 : index
    %c0_284 = arith.constant 0 : index
    %378 = vector.load %arg10[%c0_282, %377, %c0_283, %c0_284] : memref<4x8x4x32xf32, #tpu.memory_space<vmem>>, vector<1x1x4x32xf32>
    %379 = vector.shape_cast %378 : vector<1x1x4x32xf32> to vector<4x32xf32>
    %c0_285 = arith.constant 0 : index
    %c0_286 = arith.constant 0 : index
    %c0_287 = arith.constant 0 : index
    %380 = vector.load %arg6[%c0_285, %c0_286, %c0_287] : memref<4x32x32xf32, #tpu.memory_space<vmem>>, vector<1x32x32xf32>
    %381 = vector.shape_cast %380 : vector<1x32x32xf32> to vector<32x32xf32>
    %cst_288 = arith.constant dense<0.000000e+00> : vector<4x32xf32>
    %382 = tpu.matmul %375, %381, %cst_288 {dimension_numbers = #tpu.dot_dimension_numbers<[1], [0], [0], [1], [0, 0, 1, 1], [], []>} : vector<4x32xf32>, vector<32x32xf32>, vector<4x32xf32> -> vector<4x32xf32>
    %383 = arith.addf %379, %382 : vector<4x32xf32>
    %384 = arith.negf %383 : vector<4x32xf32>
    %385 = math.exp %384 : vector<4x32xf32>
    %cst_289 = arith.constant 1.000000e+00 : f32
    %386 = vector.broadcast %cst_289 : f32 to vector<4x32xf32>
    %387 = arith.addf %386, %385 : vector<4x32xf32>
    %388 = arith.divf %386, %387 : vector<4x32xf32>
    %c1_290 = arith.constant 1 : index
    %389 = arith.index_cast %c6_i32 : i32 to index
    %c0_291 = arith.constant 0 : index
    %c0_292 = arith.constant 0 : index
    %390 = vector.load %arg10[%c1_290, %389, %c0_291, %c0_292] : memref<4x8x4x32xf32, #tpu.memory_space<vmem>>, vector<1x1x4x32xf32>
    %391 = vector.shape_cast %390 : vector<1x1x4x32xf32> to vector<4x32xf32>
    %c1_293 = arith.constant 1 : index
    %c0_294 = arith.constant 0 : index
    %c0_295 = arith.constant 0 : index
    %392 = vector.load %arg6[%c1_293, %c0_294, %c0_295] : memref<4x32x32xf32, #tpu.memory_space<vmem>>, vector<1x32x32xf32>
    %393 = vector.shape_cast %392 : vector<1x32x32xf32> to vector<32x32xf32>
    %cst_296 = arith.constant dense<0.000000e+00> : vector<4x32xf32>
    %394 = tpu.matmul %375, %393, %cst_296 {dimension_numbers = #tpu.dot_dimension_numbers<[1], [0], [0], [1], [0, 0, 1, 1], [], []>} : vector<4x32xf32>, vector<32x32xf32>, vector<4x32xf32> -> vector<4x32xf32>
    %395 = arith.addf %391, %394 : vector<4x32xf32>
    %396 = arith.negf %395 : vector<4x32xf32>
    %397 = math.exp %396 : vector<4x32xf32>
    %cst_297 = arith.constant 1.000000e+00 : f32
    %398 = vector.broadcast %cst_297 : f32 to vector<4x32xf32>
    %399 = arith.addf %398, %397 : vector<4x32xf32>
    %400 = arith.divf %398, %399 : vector<4x32xf32>
    %c2_298 = arith.constant 2 : index
    %401 = arith.index_cast %c6_i32 : i32 to index
    %c0_299 = arith.constant 0 : index
    %c0_300 = arith.constant 0 : index
    %402 = vector.load %arg10[%c2_298, %401, %c0_299, %c0_300] : memref<4x8x4x32xf32, #tpu.memory_space<vmem>>, vector<1x1x4x32xf32>
    %403 = vector.shape_cast %402 : vector<1x1x4x32xf32> to vector<4x32xf32>
    %c2_301 = arith.constant 2 : index
    %c0_302 = arith.constant 0 : index
    %c0_303 = arith.constant 0 : index
    %404 = vector.load %arg6[%c2_301, %c0_302, %c0_303] : memref<4x32x32xf32, #tpu.memory_space<vmem>>, vector<1x32x32xf32>
    %405 = vector.shape_cast %404 : vector<1x32x32xf32> to vector<32x32xf32>
    %cst_304 = arith.constant dense<0.000000e+00> : vector<4x32xf32>
    %406 = tpu.matmul %375, %405, %cst_304 {dimension_numbers = #tpu.dot_dimension_numbers<[1], [0], [0], [1], [0, 0, 1, 1], [], []>} : vector<4x32xf32>, vector<32x32xf32>, vector<4x32xf32> -> vector<4x32xf32>
    %407 = arith.addf %403, %406 : vector<4x32xf32>
    %408 = math.tanh %407 : vector<4x32xf32>
    %c3_305 = arith.constant 3 : index
    %409 = arith.index_cast %c6_i32 : i32 to index
    %c0_306 = arith.constant 0 : index
    %c0_307 = arith.constant 0 : index
    %410 = vector.load %arg10[%c3_305, %409, %c0_306, %c0_307] : memref<4x8x4x32xf32, #tpu.memory_space<vmem>>, vector<1x1x4x32xf32>
    %411 = vector.shape_cast %410 : vector<1x1x4x32xf32> to vector<4x32xf32>
    %c3_308 = arith.constant 3 : index
    %c0_309 = arith.constant 0 : index
    %c0_310 = arith.constant 0 : index
    %412 = vector.load %arg6[%c3_308, %c0_309, %c0_310] : memref<4x32x32xf32, #tpu.memory_space<vmem>>, vector<1x32x32xf32>
    %413 = vector.shape_cast %412 : vector<1x32x32xf32> to vector<32x32xf32>
    %cst_311 = arith.constant dense<0.000000e+00> : vector<4x32xf32>
    %414 = tpu.matmul %375, %413, %cst_311 {dimension_numbers = #tpu.dot_dimension_numbers<[1], [0], [0], [1], [0, 0, 1, 1], [], []>} : vector<4x32xf32>, vector<32x32xf32>, vector<4x32xf32> -> vector<4x32xf32>
    %415 = arith.addf %411, %414 : vector<4x32xf32>
    %416 = arith.negf %415 : vector<4x32xf32>
    %417 = math.exp %416 : vector<4x32xf32>
    %cst_312 = arith.constant 1.000000e+00 : f32
    %418 = vector.broadcast %cst_312 : f32 to vector<4x32xf32>
    %419 = arith.addf %418, %417 : vector<4x32xf32>
    %420 = arith.divf %418, %419 : vector<4x32xf32>
    %421 = arith.mulf %400, %376 : vector<4x32xf32>
    %422 = arith.mulf %388, %408 : vector<4x32xf32>
    %423 = arith.addf %421, %422 : vector<4x32xf32>
    %424 = math.tanh %423 : vector<4x32xf32>
    %425 = arith.mulf %420, %424 : vector<4x32xf32>
    %426 = arith.index_cast %c6_i32 : i32 to index
    %c0_313 = arith.constant 0 : index
    %c0_314 = arith.constant 0 : index
    %427 = vector.load %arg7[%426, %c0_313, %c0_314] : memref<8x4x32xf32, #tpu.memory_space<vmem>>, vector<1x4x32xf32>
    %428 = vector.shape_cast %427 : vector<1x4x32xf32> to vector<4x32xf32>
    %429 = vector.shape_cast %425 : vector<4x32xf32> to vector<1x4x32xf32>
    tpu.vector_store %arg7[%426, %c0_313, %c0_314], %429 {strides = array<i32>} : memref<8x4x32xf32, #tpu.memory_space<vmem>>, vector<1x4x32xf32>,
    %c0_315 = arith.constant 0 : index
    %c0_316 = arith.constant 0 : index
    %430 = vector.load %arg11[%c0_315, %c0_316] : memref<4x32xf32, #tpu.memory_space<vmem>>, vector<4x32xf32>
    tpu.vector_store %arg11[%c0_315, %c0_316], %425 {strides = array<i32>} : memref<4x32xf32, #tpu.memory_space<vmem>>, vector<4x32xf32>,
    %c0_317 = arith.constant 0 : index
    %c0_318 = arith.constant 0 : index
    %431 = vector.load %arg12[%c0_317, %c0_318] : memref<4x32xf32, #tpu.memory_space<vmem>>, vector<4x32xf32>
    tpu.vector_store %arg12[%c0_317, %c0_318], %423 {strides = array<i32>} : memref<4x32xf32, #tpu.memory_space<vmem>>, vector<4x32xf32>,
    %c7_i32 = arith.constant 7 : i32
    %c0_319 = arith.constant 0 : index
    %c0_320 = arith.constant 0 : index
    %432 = vector.load %arg11[%c0_319, %c0_320] : memref<4x32xf32, #tpu.memory_space<vmem>>, vector<4x32xf32>
    %c0_321 = arith.constant 0 : index
    %c0_322 = arith.constant 0 : index
    %433 = vector.load %arg12[%c0_321, %c0_322] : memref<4x32xf32, #tpu.memory_space<vmem>>, vector<4x32xf32>
    %c0_323 = arith.constant 0 : index
    %434 = arith.index_cast %c7_i32 : i32 to index
    %c0_324 = arith.constant 0 : index
    %c0_325 = arith.constant 0 : index
    %435 = vector.load %arg10[%c0_323, %434, %c0_324, %c0_325] : memref<4x8x4x32xf32, #tpu.memory_space<vmem>>, vector<1x1x4x32xf32>
    %436 = vector.shape_cast %435 : vector<1x1x4x32xf32> to vector<4x32xf32>
    %c0_326 = arith.constant 0 : index
    %c0_327 = arith.constant 0 : index
    %c0_328 = arith.constant 0 : index
    %437 = vector.load %arg6[%c0_326, %c0_327, %c0_328] : memref<4x32x32xf32, #tpu.memory_space<vmem>>, vector<1x32x32xf32>
    %438 = vector.shape_cast %437 : vector<1x32x32xf32> to vector<32x32xf32>
    %cst_329 = arith.constant dense<0.000000e+00> : vector<4x32xf32>
    %439 = tpu.matmul %432, %438, %cst_329 {dimension_numbers = #tpu.dot_dimension_numbers<[1], [0], [0], [1], [0, 0, 1, 1], [], []>} : vector<4x32xf32>, vector<32x32xf32>, vector<4x32xf32> -> vector<4x32xf32>
    %440 = arith.addf %436, %439 : vector<4x32xf32>
    %441 = arith.negf %440 : vector<4x32xf32>
    %442 = math.exp %441 : vector<4x32xf32>
    %cst_330 = arith.constant 1.000000e+00 : f32
    %443 = vector.broadcast %cst_330 : f32 to vector<4x32xf32>
    %444 = arith.addf %443, %442 : vector<4x32xf32>
    %445 = arith.divf %443, %444 : vector<4x32xf32>
    %c1_331 = arith.constant 1 : index
    %446 = arith.index_cast %c7_i32 : i32 to index
    %c0_332 = arith.constant 0 : index
    %c0_333 = arith.constant 0 : index
    %447 = vector.load %arg10[%c1_331, %446, %c0_332, %c0_333] : memref<4x8x4x32xf32, #tpu.memory_space<vmem>>, vector<1x1x4x32xf32>
    %448 = vector.shape_cast %447 : vector<1x1x4x32xf32> to vector<4x32xf32>
    %c1_334 = arith.constant 1 : index
    %c0_335 = arith.constant 0 : index
    %c0_336 = arith.constant 0 : index
    %449 = vector.load %arg6[%c1_334, %c0_335, %c0_336] : memref<4x32x32xf32, #tpu.memory_space<vmem>>, vector<1x32x32xf32>
    %450 = vector.shape_cast %449 : vector<1x32x32xf32> to vector<32x32xf32>
    %cst_337 = arith.constant dense<0.000000e+00> : vector<4x32xf32>
    %451 = tpu.matmul %432, %450, %cst_337 {dimension_numbers = #tpu.dot_dimension_numbers<[1], [0], [0], [1], [0, 0, 1, 1], [], []>} : vector<4x32xf32>, vector<32x32xf32>, vector<4x32xf32> -> vector<4x32xf32>
    %452 = arith.addf %448, %451 : vector<4x32xf32>
    %453 = arith.negf %452 : vector<4x32xf32>
    %454 = math.exp %453 : vector<4x32xf32>
    %cst_338 = arith.constant 1.000000e+00 : f32
    %455 = vector.broadcast %cst_338 : f32 to vector<4x32xf32>
    %456 = arith.addf %455, %454 : vector<4x32xf32>
    %457 = arith.divf %455, %456 : vector<4x32xf32>
    %c2_339 = arith.constant 2 : index
    %458 = arith.index_cast %c7_i32 : i32 to index
    %c0_340 = arith.constant 0 : index
    %c0_341 = arith.constant 0 : index
    %459 = vector.load %arg10[%c2_339, %458, %c0_340, %c0_341] : memref<4x8x4x32xf32, #tpu.memory_space<vmem>>, vector<1x1x4x32xf32>
    %460 = vector.shape_cast %459 : vector<1x1x4x32xf32> to vector<4x32xf32>
    %c2_342 = arith.constant 2 : index
    %c0_343 = arith.constant 0 : index
    %c0_344 = arith.constant 0 : index
    %461 = vector.load %arg6[%c2_342, %c0_343, %c0_344] : memref<4x32x32xf32, #tpu.memory_space<vmem>>, vector<1x32x32xf32>
    %462 = vector.shape_cast %461 : vector<1x32x32xf32> to vector<32x32xf32>
    %cst_345 = arith.constant dense<0.000000e+00> : vector<4x32xf32>
    %463 = tpu.matmul %432, %462, %cst_345 {dimension_numbers = #tpu.dot_dimension_numbers<[1], [0], [0], [1], [0, 0, 1, 1], [], []>} : vector<4x32xf32>, vector<32x32xf32>, vector<4x32xf32> -> vector<4x32xf32>
    %464 = arith.addf %460, %463 : vector<4x32xf32>
    %465 = math.tanh %464 : vector<4x32xf32>
    %c3_346 = arith.constant 3 : index
    %466 = arith.index_cast %c7_i32 : i32 to index
    %c0_347 = arith.constant 0 : index
    %c0_348 = arith.constant 0 : index
    %467 = vector.load %arg10[%c3_346, %466, %c0_347, %c0_348] : memref<4x8x4x32xf32, #tpu.memory_space<vmem>>, vector<1x1x4x32xf32>
    %468 = vector.shape_cast %467 : vector<1x1x4x32xf32> to vector<4x32xf32>
    %c3_349 = arith.constant 3 : index
    %c0_350 = arith.constant 0 : index
    %c0_351 = arith.constant 0 : index
    %469 = vector.load %arg6[%c3_349, %c0_350, %c0_351] : memref<4x32x32xf32, #tpu.memory_space<vmem>>, vector<1x32x32xf32>
    %470 = vector.shape_cast %469 : vector<1x32x32xf32> to vector<32x32xf32>
    %cst_352 = arith.constant dense<0.000000e+00> : vector<4x32xf32>
    %471 = tpu.matmul %432, %470, %cst_352 {dimension_numbers = #tpu.dot_dimension_numbers<[1], [0], [0], [1], [0, 0, 1, 1], [], []>} : vector<4x32xf32>, vector<32x32xf32>, vector<4x32xf32> -> vector<4x32xf32>
    %472 = arith.addf %468, %471 : vector<4x32xf32>
    %473 = arith.negf %472 : vector<4x32xf32>
    %474 = math.exp %473 : vector<4x32xf32>
    %cst_353 = arith.constant 1.000000e+00 : f32
    %475 = vector.broadcast %cst_353 : f32 to vector<4x32xf32>
    %476 = arith.addf %475, %474 : vector<4x32xf32>
    %477 = arith.divf %475, %476 : vector<4x32xf32>
    %478 = arith.mulf %457, %433 : vector<4x32xf32>
    %479 = arith.mulf %445, %465 : vector<4x32xf32>
    %480 = arith.addf %478, %479 : vector<4x32xf32>
    %481 = math.tanh %480 : vector<4x32xf32>
    %482 = arith.mulf %477, %481 : vector<4x32xf32>
    %483 = arith.index_cast %c7_i32 : i32 to index
    %c0_354 = arith.constant 0 : index
    %c0_355 = arith.constant 0 : index
    %484 = vector.load %arg7[%483, %c0_354, %c0_355] : memref<8x4x32xf32, #tpu.memory_space<vmem>>, vector<1x4x32xf32>
    %485 = vector.shape_cast %484 : vector<1x4x32xf32> to vector<4x32xf32>
    %486 = vector.shape_cast %482 : vector<4x32xf32> to vector<1x4x32xf32>
    tpu.vector_store %arg7[%483, %c0_354, %c0_355], %486 {strides = array<i32>} : memref<8x4x32xf32, #tpu.memory_space<vmem>>, vector<1x4x32xf32>,
    %c0_356 = arith.constant 0 : index
    %c0_357 = arith.constant 0 : index
    %487 = vector.load %arg11[%c0_356, %c0_357] : memref<4x32xf32, #tpu.memory_space<vmem>>, vector<4x32xf32>
    tpu.vector_store %arg11[%c0_356, %c0_357], %482 {strides = array<i32>} : memref<4x32xf32, #tpu.memory_space<vmem>>, vector<4x32xf32>,
    %c0_358 = arith.constant 0 : index
    %c0_359 = arith.constant 0 : index
    %488 = vector.load %arg12[%c0_358, %c0_359] : memref<4x32xf32, #tpu.memory_space<vmem>>, vector<4x32xf32>
    tpu.vector_store %arg12[%c0_358, %c0_359], %480 {strides = array<i32>} : memref<4x32xf32, #tpu.memory_space<vmem>>, vector<4x32xf32>,
    %c8_i32 = arith.constant 8 : i32
    %c0_i32_360 = arith.constant 0 : i32
    %489 = arith.cmpi eq, %arg1, %c0_i32_360 : i32
    %490 = arith.extui %489 : i1 to i32
    %c0_i32_361 = arith.constant 0 : i32
    %491 = arith.cmpi ne, %490, %c0_i32_361 : i32
    scf.if %491 {
      %c0_362 = arith.constant 0 : index
      %c0_363 = arith.constant 0 : index
      %492 = vector.load %arg11[%c0_362, %c0_363] : memref<4x32xf32, #tpu.memory_space<vmem>>, vector<4x32xf32>
      %c0_364 = arith.constant 0 : index
      %c0_365 = arith.constant 0 : index
      %c0_366 = arith.constant 0 : index
      %493 = vector.load %arg8[%c0_364, %c0_365, %c0_366] : memref<1x4x32xf32, #tpu.memory_space<vmem>>, vector<1x4x32xf32>
      %494 = vector.shape_cast %493 : vector<1x4x32xf32> to vector<4x32xf32>
      %495 = vector.shape_cast %492 : vector<4x32xf32> to vector<1x4x32xf32>
      tpu.vector_store %arg8[%c0_364, %c0_365, %c0_366], %495 {strides = array<i32>} : memref<1x4x32xf32, #tpu.memory_space<vmem>>, vector<1x4x32xf32>,
      %c0_367 = arith.constant 0 : index
      %c0_368 = arith.constant 0 : index
      %496 = vector.load %arg12[%c0_367, %c0_368] : memref<4x32xf32, #tpu.memory_space<vmem>>, vector<4x32xf32>
      %c0_369 = arith.constant 0 : index
      %c0_370 = arith.constant 0 : index
      %c0_371 = arith.constant 0 : index
      %497 = vector.load %arg9[%c0_369, %c0_370, %c0_371] : memref<1x4x32xf32, #tpu.memory_space<vmem>>, vector<1x4x32xf32>
      %498 = vector.shape_cast %497 : vector<1x4x32xf32> to vector<4x32xf32>
      %499 = vector.shape_cast %496 : vector<4x32xf32> to vector<1x4x32xf32>
      tpu.vector_store %arg9[%c0_369, %c0_370, %c0_371], %499 {strides = array<i32>} : memref<1x4x32xf32, #tpu.memory_space<vmem>>, vector<1x4x32xf32>,
    } else {
    }
    return
  }
  func.func @transform_0(%arg0: i32, %arg1: i32) -> (i32, i32, i32) {
    %c0_i32 = arith.constant 0 : i32
    %c0_i32_0 = arith.constant 0 : i32
    return %arg1, %arg0, %c0_i32 : i32, i32, i32
  }
  func.func @transform_1(%arg0: i32, %arg1: i32) -> (i32, i32, i32) {
    %c0_i32 = arith.constant 0 : i32
    %c0_i32_0 = arith.constant 0 : i32
    %c0_i32_1 = arith.constant 0 : i32
    return %c0_i32, %arg0, %c0_i32_0 : i32, i32, i32
  }
  func.func @transform_2(%arg0: i32, %arg1: i32) -> (i32, i32, i32) {
    %c0_i32 = arith.constant 0 : i32
    %c0_i32_0 = arith.constant 0 : i32
    %c0_i32_1 = arith.constant 0 : i32
    return %c0_i32, %arg0, %c0_i32_0 : i32, i32, i32
  }
  func.func @transform_3(%arg0: i32, %arg1: i32) -> (i32, i32, i32) {
    %c0_i32 = arith.constant 0 : i32
    %c0_i32_0 = arith.constant 0 : i32
    %c0_i32_1 = arith.constant 0 : i32
    %c0_i32_2 = arith.constant 0 : i32
    return %c0_i32, %c0_i32_0, %c0_i32_1 : i32, i32, i32
  }
  func.func @transform_4(%arg0: i32, %arg1: i32) -> (i32, i32, i32) {
    %c0_i32 = arith.constant 0 : i32
    %c0_i32_0 = arith.constant 0 : i32
    %c0_i32_1 = arith.constant 0 : i32
    %c0_i32_2 = arith.constant 0 : i32
    return %c0_i32, %c0_i32_0, %c0_i32_1 : i32, i32, i32
  }
  func.func @transform_5(%arg0: i32, %arg1: i32) -> (i32, i32, i32) {
    %c0_i32 = arith.constant 0 : i32
    %c0_i32_0 = arith.constant 0 : i32
    return %arg1, %arg0, %c0_i32 : i32, i32, i32
  }
  func.func @transform_6(%arg0: i32, %arg1: i32) -> (i32, i32, i32) {
    %c0_i32 = arith.constant 0 : i32
    %c0_i32_0 = arith.constant 0 : i32
    %c0_i32_1 = arith.constant 0 : i32
    return %c0_i32, %arg0, %c0_i32_0 : i32, i32, i32
  }
  func.func @transform_7(%arg0: i32, %arg1: i32) -> (i32, i32, i32) {
    %c0_i32 = arith.constant 0 : i32
    %c0_i32_0 = arith.constant 0 : i32
    %c0_i32_1 = arith.constant 0 : i32
    return %c0_i32, %arg0, %c0_i32_0 : i32, i32, i32
  }
}

</mosaic_0001>

<llo_original>
// kernel: tpu_custom_call.1
$region0: #{tpu_custom_call.1}
  #allocation0 [shape = 'u32[]', space=smem, size = 0x4, offset = 0x4, fixed_abs, tag = 'smem constant byte address 0x4 - core index']
  #allocation1 [shape = 'u32[144,128]{1,0:T(1,128)}', space=vmem, size = 0x12000, scoped, tag = 'internal scratch']
  #allocation2 [shape = 'f32[4,8,4,32]{3,2,1,0:T(4,128)}', space=vmem, size = 0x10000, scoped, tag = 'scratch operand']
  #allocation3 [shape = 'f32[4,32]{1,0:T(4,128)}', space=vmem, size = 0x800, scoped, tag = 'scratch operand']
  #allocation4 [shape = 'f32[4,32]{1,0:T(4,128)}', space=vmem, size = 0x800, scoped, tag = 'scratch operand']
  %s0 = inlined_call_operand.hbm [shape: f32[8,4,16], index: 0, kind: input, shape index: {}]
  %s1 = inlined_call_operand.hbm [shape: f32[1,4,32], index: 1, kind: input, shape index: {}]
  %s2 = inlined_call_operand.vmem [shape: f32[1,4,32], index: 2, kind: input, shape index: {}]
  %s3 = inlined_call_operand.hbm [shape: f32[4,16,32], index: 3, kind: input, shape index: {}]
  %s4 = inlined_call_operand.hbm [shape: f32[4,32,32], index: 4, kind: input, shape index: {}]
  %s5 = inlined_call_operand.hbm [shape: f32[8,4,32], index: 5, kind: output, shape index: {0}]
  %s6 = inlined_call_operand.hbm [shape: f32[1,4,32], index: 6, kind: output, shape index: {1}]
  %s7 = inlined_call_operand.hbm [shape: f32[1,4,32], index: 7, kind: output, shape index: {2}]
  %8 = xla_tuple %s5, %s6, %s7
  %s9 = sld [smem:[#allocation0]]
  $region70: #{tpu_custom_call.1} parent=0
    _
  %s11 = ssub.s32 1, %s9
  %s12 = scalar_select 0, %s11, %s9
  $region1: #{tpu_custom_call.1} parent=0
    #allocation5 [shape = 'u8[16384]{0}', space=vmem, size = 0x4000, scoped, tag = 'input window, operand 0, single buffered']
    #allocation6 [shape = 's32[1]{0}', space=sflag, size = 0x4, scoped, tag = 'scoped memory for tpu_custom_call.1']
    #allocation7 [shape = 's32[1]{0}', space=sflag, size = 0x4, scoped, tag = 'scoped memory for tpu_custom_call.1']
    #allocation8 [shape = 'u8[2048]{0}', space=vmem, size = 0x800, scoped, tag = 'input window, operand 1, single buffered']
    #allocation9 [shape = 's32[1]{0}', space=sflag, size = 0x4, scoped, tag = 'scoped memory for tpu_custom_call.1']
    #allocation10 [shape = 'u8[32768]{0}', space=vmem, size = 0x8000, scoped, tag = 'input window, operand 3, single buffered']
    #allocation11 [shape = 'u8[65536]{0}', space=vmem, size = 0x10000, scoped, tag = 'input window, operand 4, single buffered']
    #allocation12 [shape = 's32[1]{0}', space=sflag, size = 0x4, scoped, tag = 'scoped memory for tpu_custom_call.1']
    #allocation13 [shape = 'u8[16384]{0}', space=vmem, size = 0x4000, scoped, tag = 'output window, operand 0, single buffered']
    #allocation14 [shape = 'u8[2048]{0}', space=vmem, size = 0x800, scoped, tag = 'output window, operand 1, single buffered']
    #allocation15 [shape = 's32[1]{0}', space=sflag, size = 0x4, scoped, tag = 'scoped memory for tpu_custom_call.1']
    #allocation16 [shape = 'u8[2048]{0}', space=vmem, size = 0x800, scoped, tag = 'output window, operand 2, single buffered']
    %13 = vsyncpa [#allocation6], 0
    %14 = vsyncpa [#allocation9], 0
    %15 = vsyncpa [#allocation12], 0
    %16 = vsyncpa [#allocation7], 0
    %17 = vsyncpa [#allocation15], 0
    // Predicated region
    $region2: #{tpu_custom_call.1} parent=1 // pred_check
      _
    $region3: #{tpu_custom_call.1} parent=1 // pred_check_branch
      %19 = sbr.rel (0) target = $region5
    $region4: #{tpu_custom_call.1} parent=1 // pred_region
      %s21 = ssub.s32 512, 512
      %22 = vsyncadd [#allocation6], %s21
      %s23 = sshll.u32 [#allocation5], 4
      %s24 = int_to_ptr.vmem [resolvable:$true] %s23
      %29 = dma.hbm_to_vmem [thread:$0]  %s0, 512, %s24, [#allocation6], 64, 64, 4
    $region5: #{tpu_custom_call.1} parent=1 // pred_fallthru
      _
    // Predicated region
    $region6: #{tpu_custom_call.1} parent=1 // pred_check
      _
    $region7: #{tpu_custom_call.1} parent=1 // pred_check_branch
      %31 = sbr.rel (0) target = $region9
    $region8: #{tpu_custom_call.1} parent=1 // pred_region
      %s33 = ssub.s32 64, 64
      %34 = vsyncadd [#allocation9], %s33
      %s36 = sshll.u32 [#allocation8], 4
      %s37 = int_to_ptr.vmem [resolvable:$true] %s36
      %39 = dma.hbm_to_vmem [thread:$0]  %s1, 64, %s37, [#allocation9]
    $region9: #{tpu_custom_call.1} parent=1 // pred_fallthru
      _
    // Predicated region
    $region10: #{tpu_custom_call.1} parent=1 // pred_check
      _
    $region11: #{tpu_custom_call.1} parent=1 // pred_check_branch
      %41 = sbr.rel (0) target = $region13
    $region12: #{tpu_custom_call.1} parent=1 // pred_region
      _
    $region13: #{tpu_custom_call.1} parent=1 // pred_fallthru
      _
    // Predicated region
    $region14: #{tpu_custom_call.1} parent=1 // pred_check
      _
    $region15: #{tpu_custom_call.1} parent=1 // pred_check_branch
      %43 = sbr.rel (0) target = $region17
    $region16: #{tpu_custom_call.1} parent=1 // pred_region
      %s45 = ssub.s32 1024, 1024
      %46 = vsyncadd [#allocation9], %s45
      %s47 = sshll.u32 [#allocation10], 4
      %s48 = int_to_ptr.vmem [resolvable:$true] %s47
      %53 = dma.hbm_to_vmem [thread:$0]  %s3, 1024, %s48, [#allocation9], 128, 128, 8
    $region17: #{tpu_custom_call.1} parent=1 // pred_fallthru
      _
    // Predicated region
    $region18: #{tpu_custom_call.1} parent=1 // pred_check
      _
    $region19: #{tpu_custom_call.1} parent=1 // pred_check_branch
      %55 = sbr.rel (0) target = $region21
    $region20: #{tpu_custom_call.1} parent=1 // pred_region
      %s57 = ssub.s32 2048, 2048
      %58 = vsyncadd [#allocation12], %s57
      %s59 = sshll.u32 [#allocation11], 4
      %s60 = int_to_ptr.vmem [resolvable:$true] %s59
      %65 = dma.hbm_to_vmem [thread:$0]  %s4, 2048, %s60, [#allocation12], 128, 128, 8
    $region21: #{tpu_custom_call.1} parent=1 // pred_fallthru
      _
    // Predicated region
    $region22: #{tpu_custom_call.1} parent=1 // pred_check
      _
    $region23: #{tpu_custom_call.1} parent=1 // pred_check_branch
      %67 = sbr.rel (0) target = $region25
    $region24: #{tpu_custom_call.1} parent=1 // pred_region
      %68 = dma.done [#allocation6], 512
    $region25: #{tpu_custom_call.1} parent=1 // pred_fallthru
      _
    // Predicated region
    $region26: #{tpu_custom_call.1} parent=1 // pred_check
      _
    $region27: #{tpu_custom_call.1} parent=1 // pred_check_branch
      %70 = sbr.rel (0) target = $region29
    $region28: #{tpu_custom_call.1} parent=1 // pred_region
      %71 = dma.done [#allocation9], 64
    $region29: #{tpu_custom_call.1} parent=1 // pred_fallthru
      _
    // Predicated region
    $region30: #{tpu_custom_call.1} parent=1 // pred_check
      _
    $region31: #{tpu_custom_call.1} parent=1 // pred_check_branch
      %73 = sbr.rel (0) target = $region33
    $region32: #{tpu_custom_call.1} parent=1 // pred_region
      %74 = dma.done [#allocation9], 1024
    $region33: #{tpu_custom_call.1} parent=1 // pred_fallthru
      _
    // Predicated region
    $region34: #{tpu_custom_call.1} parent=1 // pred_check
      _
    $region35: #{tpu_custom_call.1} parent=1 // pred_check_branch
      %76 = sbr.rel (0) target = $region37
    $region36: #{tpu_custom_call.1} parent=1 // pred_region
      %77 = dma.done [#allocation12], 2048
    $region37: #{tpu_custom_call.1} parent=1 // pred_fallthru
      _
    %p78 = scmp.eq.s32.totalorder 0, 0
    // Predicated region
    $region38: #{tpu_custom_call.1} parent=1 // pred_check
      %p79 = pneg %p78
    $region39: #{tpu_custom_call.1} parent=1 // pred_check_branch
      %81 = sbr.rel (%p79) target = $region41
    $region40: #{tpu_custom_call.1} parent=1 // pred_region
      %v82 = vld [vmem:[#allocation8] sm:$0xf]
      %vm83 = vcmask 257024
      %84 = vst.msk [vmem:[#allocation3] sm:$0xf] %vm83, %v82
      %v85 = vld [vmem:[%s2] sm:$0xf]
      %86 = vst.msk [vmem:[#allocation4] sm:$0xf] %vm83, %v85
    $region41: #{tpu_custom_call.1} parent=1 // pred_fallthru
      _
    %v87 = vld [vmem:[#allocation5] sm:$0xf]
    %v88 = vld [vmem:[#allocation5 + $0x4] sm:$0xf]
    %v89 = vld [vmem:[#allocation5 + $0x8] sm:$0xf]
    %v90 = vld [vmem:[#allocation5 + $0xc] sm:$0xf]
    %v91 = vld [vmem:[#allocation5 + $0x10] sm:$0xf]
    %v92 = vld [vmem:[#allocation5 + $0x14] sm:$0xf]
    %v93 = vld [vmem:[#allocation5 + $0x18] sm:$0xf]
    %v94 = vld [vmem:[#allocation5 + $0x1c] sm:$0xf]
    %v95 = vld [vmem:[#allocation10] sm:$0xff]
    %v96 = vld [vmem:[#allocation10 + $0x8] sm:$0xff]
    %v105 = vcombine.low %v87, %v88
    %v106 = vcombine.low %v89, %v90
    %v107 = vcombine.low %v91, %v92
    %v108 = vcombine.low %v93, %v94
    %vm109 = vcmask 130048
    %v110 = vsel %vm109, %v105, 0
    %v112 = vsel %vm109, %v106, 0
    %v114 = vsel %vm109, %v107, 0
    %v116 = vsel %vm109, %v108, 0
    %118 = vmatprep.subr.mxu0 0.0
    %119 = vmatpush1.msra.mxu0 %v95
    %120 = vmatprep.subr.mxu0 0.0
    %121 = vmatpush1.msra.mxu0 %v96
    %122 = vmatprep.subr.mxu0 0.0
    %123 = vmatpush1.msra.mxu0 0.0
    %124 = vmatprep.subr.mxu0 0.0
    %125 = vmatpush1.msra.mxu0 0.0
    %126 = vmatprep.subr.mxu0 0.0
    %127 = vmatpush1.msra.mxu0 0.0
    %128 = vmatprep.subr.mxu0 0.0
    %129 = vmatpush1.msra.mxu0 0.0
    %130 = vmatprep.subr.mxu0 0.0
    %131 = vmatpush1.msra.mxu0 0.0
    %132 = vmatprep.subr.mxu0 0.0
    %133 = vmatpush1.msra.mxu0 0.0
    %134 = vmatprep.subr.mxu0 0.0
    %135 = vmatpush1.msra.mxu0 0.0
    %136 = vmatprep.subr.mxu0 0.0
    %137 = vmatpush1.msra.mxu0 0.0
    %138 = vmatprep.subr.mxu0 0.0
    %139 = vmatpush1.msra.mxu0 0.0
    %140 = vmatprep.subr.mxu0 0.0
    %141 = vmatpush1.msra.mxu0 0.0
    %142 = vmatprep.subr.mxu0 0.0
    %143 = vmatpush1.msra.mxu0 0.0
    %144 = vmatprep.subr.mxu0 0.0
    %145 = vmatpush1.msra.mxu0 0.0
    %146 = vmatprep.subr.mxu0 0.0
    %147 = vmatpush1.msra.mxu0 0.0
    %148 = vmatprep.subr.mxu0 0.0
    %149 = vmatpush1.msra.mxu0 0.0
    %150 = vmatprep.subr.mxu0 0.0
    %151 = vmatpush1.msra.mxu0 0.0
    %152 = vmatprep.subr.mxu0 0.0
    %153 = vmatpush1.msra.mxu0 0.0
    %154 = vmatprep.subr.mxu0 0.0
    %155 = vmatpush1.msra.mxu0 0.0
    %156 = vmatprep.subr.mxu0 0.0
    %157 = vmatpush1.msra.mxu0 0.0
    %158 = vmatprep.subr.mxu0 0.0
    %159 = vmatpush1.msra.mxu0 0.0
    %160 = vmatprep.subr.mxu0 0.0
    %161 = vmatpush1.msra.mxu0 0.0
    %162 = vmatprep.subr.mxu0 0.0
    %163 = vmatpush1.msra.mxu0 0.0
    %164 = vmatprep.subr.mxu0 0.0
    %165 = vmatpush1.msra.mxu0 0.0
    %166 = vmatprep.subr.mxu0 0.0
    %167 = vmatpush1.msra.mxu0 0.0
    %168 = vmatprep.subr.mxu0 0.0
    %169 = vmatpush1.msra.mxu0 0.0
    %170 = vmatprep.subr.mxu0 0.0
    %171 = vmatpush1.msra.mxu0 0.0
    %172 = vmatprep.subr.mxu0 0.0
    %173 = vmatpush1.msra.mxu0 0.0
    %174 = vmatprep.subr.mxu0 0.0
    %175 = vmatpush1.msra.mxu0 0.0
    %176 = vmatprep.subr.mxu0 0.0
    %177 = vmatpush1.msra.mxu0 0.0
    %178 = vmatprep.subr.mxu0 0.0
    %179 = vmatpush1.msra.mxu0 0.0
    %180 = vmatprep.subr.mxu0 0.0
    %181 = vmatpush1.msra.mxu0 0.0
    %182 = vmatprep.mubr.f32.mxu0 0.0
    %183 = vmatmul.mubr.f32.gmra.mrb[0].mxu0 %v110
    %v184 = vpop.f32.mrb[0].mxu0
    %v185 = vadd.f32 0.0, %v184
    %v186 = vpop.f32.mrb[0].mxu0
    %187 = vmatprep.mubr.f32.mxu0 0.0
    %188 = vmatmul.mubr.f32.gmra.mrb[0].mxu0 %v112
    %v189 = vpop.f32.mrb[0].mxu0
    %v190 = vadd.f32 0.0, %v189
    %v191 = vpop.f32.mrb[0].mxu0
    %192 = vmatprep.mubr.f32.mxu0 0.0
    %193 = vmatmul.mubr.f32.gmra.mrb[0].mxu0 %v114
    %v194 = vpop.f32.mrb[0].mxu0
    %v195 = vadd.f32 0.0, %v194
    %v196 = vpop.f32.mrb[0].mxu0
    %197 = vmatprep.mubr.f32.mxu0 0.0
    %198 = vmatmul.mubr.f32.gmra.mrb[0].mxu0 %v116
    %v199 = vpop.f32.mrb[0].mxu0
    %v200 = vadd.f32 0.0, %v199
    %v201 = vpop.f32.mrb[0].mxu0
    %202 = vdwg.mxu0
    %v207 = vcombine.high %v185, %v185
    %v208 = vcombine.high %v190, %v190
    %v209 = vcombine.high %v195, %v195
    %v210 = vcombine.high %v200, %v200
    %vm215 = vcmask 257024
    %216 = vst.msk [vmem:[#allocation2] sm:$0xf] %vm215, %v185
    %217 = vst.msk [vmem:[#allocation2 + $0x4] sm:$0xf] %vm215, %v207
    %218 = vst.msk [vmem:[#allocation2 + $0x8] sm:$0xf] %vm215, %v190
    %219 = vst.msk [vmem:[#allocation2 + $0xc] sm:$0xf] %vm215, %v208
    %220 = vst.msk [vmem:[#allocation2 + $0x10] sm:$0xf] %vm215, %v195
    %221 = vst.msk [vmem:[#allocation2 + $0x14] sm:$0xf] %vm215, %v209
    %222 = vst.msk [vmem:[#allocation2 + $0x18] sm:$0xf] %vm215, %v200
    %223 = vst.msk [vmem:[#allocation2 + $0x1c] sm:$0xf] %vm215, %v210
    %s224 = scalar_lea.vmem [#allocation10], 16
    %v225 = vld [vmem:[%s224] sm:$0xff]
    %v226 = vld [vmem:[%s224 + $0x8] sm:$0xff]
    %227 = vmatprep.subr.mxu0 0.0
    %228 = vmatpush1.msra.mxu0 %v225
    %229 = vmatprep.subr.mxu0 0.0
    %230 = vmatpush1.msra.mxu0 %v226
    %231 = vmatprep.subr.mxu0 0.0
    %232 = vmatpush1.msra.mxu0 0.0
    %233 = vmatprep.subr.mxu0 0.0
    %234 = vmatpush1.msra.mxu0 0.0
    %235 = vmatprep.subr.mxu0 0.0
    %236 = vmatpush1.msra.mxu0 0.0
    %237 = vmatprep.subr.mxu0 0.0
    %238 = vmatpush1.msra.mxu0 0.0
    %239 = vmatprep.subr.mxu0 0.0
    %240 = vmatpush1.msra.mxu0 0.0
    %241 = vmatprep.subr.mxu0 0.0
    %242 = vmatpush1.msra.mxu0 0.0
    %243 = vmatprep.subr.mxu0 0.0
    %244 = vmatpush1.msra.mxu0 0.0
    %245 = vmatprep.subr.mxu0 0.0
    %246 = vmatpush1.msra.mxu0 0.0
    %247 = vmatprep.subr.mxu0 0.0
    %248 = vmatpush1.msra.mxu0 0.0
    %249 = vmatprep.subr.mxu0 0.0
    %250 = vmatpush1.msra.mxu0 0.0
    %251 = vmatprep.subr.mxu0 0.0
    %252 = vmatpush1.msra.mxu0 0.0
    %253 = vmatprep.subr.mxu0 0.0
    %254 = vmatpush1.msra.mxu0 0.0
    %255 = vmatprep.subr.mxu0 0.0
    %256 = vmatpush1.msra.mxu0 0.0
    %257 = vmatprep.subr.mxu0 0.0
    %258 = vmatpush1.msra.mxu0 0.0
    %259 = vmatprep.subr.mxu0 0.0
    %260 = vmatpush1.msra.mxu0 0.0
    %261 = vmatprep.subr.mxu0 0.0
    %262 = vmatpush1.msra.mxu0 0.0
    %263 = vmatprep.subr.mxu0 0.0
    %264 = vmatpush1.msra.mxu0 0.0
    %265 = vmatprep.subr.mxu0 0.0
    %266 = vmatpush1.msra.mxu0 0.0
    %267 = vmatprep.subr.mxu0 0.0
    %268 = vmatpush1.msra.mxu0 0.0
    %269 = vmatprep.subr.mxu0 0.0
    %270 = vmatpush1.msra.mxu0 0.0
    %271 = vmatprep.subr.mxu0 0.0
    %272 = vmatpush1.msra.mxu0 0.0
    %273 = vmatprep.subr.mxu0 0.0
    %274 = vmatpush1.msra.mxu0 0.0
    %275 = vmatprep.subr.mxu0 0.0
    %276 = vmatpush1.msra.mxu0 0.0
    %277 = vmatprep.subr.mxu0 0.0
    %278 = vmatpush1.msra.mxu0 0.0
    %279 = vmatprep.subr.mxu0 0.0
    %280 = vmatpush1.msra.mxu0 0.0
    %281 = vmatprep.subr.mxu0 0.0
    %282 = vmatpush1.msra.mxu0 0.0
    %283 = vmatprep.subr.mxu0 0.0
    %284 = vmatpush1.msra.mxu0 0.0
    %285 = vmatprep.subr.mxu0 0.0
    %286 = vmatpush1.msra.mxu0 0.0
    %287 = vmatprep.subr.mxu0 0.0
    %288 = vmatpush1.msra.mxu0 0.0
    %289 = vmatprep.subr.mxu0 0.0
    %290 = vmatpush1.msra.mxu0 0.0
    %291 = vmatprep.mubr.f32.mxu0 0.0
    %292 = vmatmul.mubr.f32.gmra.mrb[0].mxu0 %v110
    %v293 = vpop.f32.mrb[0].mxu0
    %v294 = vadd.f32 0.0, %v293
    %v295 = vpop.f32.mrb[0].mxu0
    %296 = vmatprep.mubr.f32.mxu0 0.0
    %297 = vmatmul.mubr.f32.gmra.mrb[0].mxu0 %v112
    %v298 = vpop.f32.mrb[0].mxu0
    %v299 = vadd.f32 0.0, %v298
    %v300 = vpop.f32.mrb[0].mxu0
    %301 = vmatprep.mubr.f32.mxu0 0.0
    %302 = vmatmul.mubr.f32.gmra.mrb[0].mxu0 %v114
    %v303 = vpop.f32.mrb[0].mxu0
    %v304 = vadd.f32 0.0, %v303
    %v305 = vpop.f32.mrb[0].mxu0
    %306 = vmatprep.mubr.f32.mxu0 0.0
    %307 = vmatmul.mubr.f32.gmra.mrb[0].mxu0 %v116
    %v308 = vpop.f32.mrb[0].mxu0
    %v309 = vadd.f32 0.0, %v308
    %v310 = vpop.f32.mrb[0].mxu0
    %311 = vdwg.mxu0
    %v316 = vcombine.high %v294, %v294
    %v317 = vcombine.high %v299, %v299
    %v318 = vcombine.high %v304, %v304
    %v319 = vcombine.high %v309, %v309
    %s324 = scalar_lea.vmem [#allocation2], 32
    %325 = vst.msk [vmem:[%s324] sm:$0xf] %vm215, %v294
    %326 = vst.msk [vmem:[%s324 + $0x4] sm:$0xf] %vm215, %v316
    %327 = vst.msk [vmem:[%s324 + $0x8] sm:$0xf] %vm215, %v299
    %328 = vst.msk [vmem:[%s324 + $0xc] sm:$0xf] %vm215, %v317
    %329 = vst.msk [vmem:[%s324 + $0x10] sm:$0xf] %vm215, %v304
    %330 = vst.msk [vmem:[%s324 + $0x14] sm:$0xf] %vm215, %v318
    %331 = vst.msk [vmem:[%s324 + $0x18] sm:$0xf] %vm215, %v309
    %332 = vst.msk [vmem:[%s324 + $0x1c] sm:$0xf] %vm215, %v319
    %s333 = scalar_lea.vmem [#allocation10], 32
    %v334 = vld [vmem:[%s333] sm:$0xff]
    %v335 = vld [vmem:[%s333 + $0x8] sm:$0xff]
    %336 = vmatprep.subr.mxu0 0.0
    %337 = vmatpush1.msra.mxu0 %v334
    %338 = vmatprep.subr.mxu0 0.0
    %339 = vmatpush1.msra.mxu0 %v335
    %340 = vmatprep.subr.mxu0 0.0
    %341 = vmatpush1.msra.mxu0 0.0
    %342 = vmatprep.subr.mxu0 0.0
    %343 = vmatpush1.msra.mxu0 0.0
    %344 = vmatprep.subr.mxu0 0.0
    %345 = vmatpush1.msra.mxu0 0.0
    %346 = vmatprep.subr.mxu0 0.0
    %347 = vmatpush1.msra.mxu0 0.0
    %348 = vmatprep.subr.mxu0 0.0
    %349 = vmatpush1.msra.mxu0 0.0
    %350 = vmatprep.subr.mxu0 0.0
    %351 = vmatpush1.msra.mxu0 0.0
    %352 = vmatprep.subr.mxu0 0.0
    %353 = vmatpush1.msra.mxu0 0.0
    %354 = vmatprep.subr.mxu0 0.0
    %355 = vmatpush1.msra.mxu0 0.0
    %356 = vmatprep.subr.mxu0 0.0
    %357 = vmatpush1.msra.mxu0 0.0
    %358 = vmatprep.subr.mxu0 0.0
    %359 = vmatpush1.msra.mxu0 0.0
    %360 = vmatprep.subr.mxu0 0.0
    %361 = vmatpush1.msra.mxu0 0.0
    %362 = vmatprep.subr.mxu0 0.0
    %363 = vmatpush1.msra.mxu0 0.0
    %364 = vmatprep.subr.mxu0 0.0
    %365 = vmatpush1.msra.mxu0 0.0
    %366 = vmatprep.subr.mxu0 0.0
    %367 = vmatpush1.msra.mxu0 0.0
    %368 = vmatprep.subr.mxu0 0.0
    %369 = vmatpush1.msra.mxu0 0.0
    %370 = vmatprep.subr.mxu0 0.0
    %371 = vmatpush1.msra.mxu0 0.0
    %372 = vmatprep.subr.mxu0 0.0
    %373 = vmatpush1.msra.mxu0 0.0
    %374 = vmatprep.subr.mxu0 0.0
    %375 = vmatpush1.msra.mxu0 0.0
    %376 = vmatprep.subr.mxu0 0.0
    %377 = vmatpush1.msra.mxu0 0.0
    %378 = vmatprep.subr.mxu0 0.0
    %379 = vmatpush1.msra.mxu0 0.0
    %380 = vmatprep.subr.mxu0 0.0
    %381 = vmatpush1.msra.mxu0 0.0
    %382 = vmatprep.subr.mxu0 0.0
    %383 = vmatpush1.msra.mxu0 0.0
    %384 = vmatprep.subr.mxu0 0.0
    %385 = vmatpush1.msra.mxu0 0.0
    %386 = vmatprep.subr.mxu0 0.0
    %387 = vmatpush1.msra.mxu0 0.0
    %388 = vmatprep.subr.mxu0 0.0
    %389 = vmatpush1.msra.mxu0 0.0
    %390 = vmatprep.subr.mxu0 0.0
    %391 = vmatpush1.msra.mxu0 0.0
    %392 = vmatprep.subr.mxu0 0.0
    %393 = vmatpush1.msra.mxu0 0.0
    %394 = vmatprep.subr.mxu0 0.0
    %395 = vmatpush1.msra.mxu0 0.0
    %396 = vmatprep.subr.mxu0 0.0
    %397 = vmatpush1.msra.mxu0 0.0
    %398 = vmatprep.subr.mxu0 0.0
    %399 = vmatpush1.msra.mxu0 0.0
    %400 = vmatprep.mubr.f32.mxu0 0.0
    %401 = vmatmul.mubr.f32.gmra.mrb[0].mxu0 %v110
    %v402 = vpop.f32.mrb[0].mxu0
    %v403 = vadd.f32 0.0, %v402
    %v404 = vpop.f32.mrb[0].mxu0
    %405 = vmatprep.mubr.f32.mxu0 0.0
    %406 = vmatmul.mubr.f32.gmra.mrb[0].mxu0 %v112
    %v407 = vpop.f32.mrb[0].mxu0
    %v408 = vadd.f32 0.0, %v407
    %v409 = vpop.f32.mrb[0].mxu0
    %410 = vmatprep.mubr.f32.mxu0 0.0
    %411 = vmatmul.mubr.f32.gmra.mrb[0].mxu0 %v114
    %v412 = vpop.f32.mrb[0].mxu0
    %v413 = vadd.f32 0.0, %v412
    %v414 = vpop.f32.mrb[0].mxu0
    %415 = vmatprep.mubr.f32.mxu0 0.0
    %416 = vmatmul.mubr.f32.gmra.mrb[0].mxu0 %v116
    %v417 = vpop.f32.mrb[0].mxu0
    %v418 = vadd.f32 0.0, %v417
    %v419 = vpop.f32.mrb[0].mxu0
    %420 = vdwg.mxu0
    %v425 = vcombine.high %v403, %v403
    %v426 = vcombine.high %v408, %v408
    %v427 = vcombine.high %v413, %v413
    %v428 = vcombine.high %v418, %v418
    %s433 = scalar_lea.vmem [#allocation2], 64
    %434 = vst.msk [vmem:[%s433] sm:$0xf] %vm215, %v403
    %435 = vst.msk [vmem:[%s433 + $0x4] sm:$0xf] %vm215, %v425
    %436 = vst.msk [vmem:[%s433 + $0x8] sm:$0xf] %vm215, %v408
    %437 = vst.msk [vmem:[%s433 + $0xc] sm:$0xf] %vm215, %v426
    %438 = vst.msk [vmem:[%s433 + $0x10] sm:$0xf] %vm215, %v413
    %439 = vst.msk [vmem:[%s433 + $0x14] sm:$0xf] %vm215, %v427
    %440 = vst.msk [vmem:[%s433 + $0x18] sm:$0xf] %vm215, %v418
    %441 = vst.msk [vmem:[%s433 + $0x1c] sm:$0xf] %vm215, %v428
    %s442 = scalar_lea.vmem [#allocation10], 48
    %v443 = vld [vmem:[%s442] sm:$0xff]
    %v444 = vld [vmem:[%s442 + $0x8] sm:$0xff]
    %445 = vmatprep.subr.mxu0 0.0
    %446 = vmatpush1.msra.mxu0 %v443
    %447 = vmatprep.subr.mxu0 0.0
    %448 = vmatpush1.msra.mxu0 %v444
    %449 = vmatprep.subr.mxu0 0.0
    %450 = vmatpush1.msra.mxu0 0.0
    %451 = vmatprep.subr.mxu0 0.0
    %452 = vmatpush1.msra.mxu0 0.0
    %453 = vmatprep.subr.mxu0 0.0
    %454 = vmatpush1.msra.mxu0 0.0
    %455 = vmatprep.subr.mxu0 0.0
    %456 = vmatpush1.msra.mxu0 0.0
    %457 = vmatprep.subr.mxu0 0.0
    %458 = vmatpush1.msra.mxu0 0.0
    %459 = vmatprep.subr.mxu0 0.0
    %460 = vmatpush1.msra.mxu0 0.0
    %461 = vmatprep.subr.mxu0 0.0
    %462 = vmatpush1.msra.mxu0 0.0
    %463 = vmatprep.subr.mxu0 0.0
    %464 = vmatpush1.msra.mxu0 0.0
    %465 = vmatprep.subr.mxu0 0.0
    %466 = vmatpush1.msra.mxu0 0.0
    %467 = vmatprep.subr.mxu0 0.0
    %468 = vmatpush1.msra.mxu0 0.0
    %469 = vmatprep.subr.mxu0 0.0
    %470 = vmatpush1.msra.mxu0 0.0
    %471 = vmatprep.subr.mxu0 0.0
    %472 = vmatpush1.msra.mxu0 0.0
    %473 = vmatprep.subr.mxu0 0.0
    %474 = vmatpush1.msra.mxu0 0.0
    %475 = vmatprep.subr.mxu0 0.0
    %476 = vmatpush1.msra.mxu0 0.0
    %477 = vmatprep.subr.mxu0 0.0
    %478 = vmatpush1.msra.mxu0 0.0
    %479 = vmatprep.subr.mxu0 0.0
    %480 = vmatpush1.msra.mxu0 0.0
    %481 = vmatprep.subr.mxu0 0.0
    %482 = vmatpush1.msra.mxu0 0.0
    %483 = vmatprep.subr.mxu0 0.0
    %484 = vmatpush1.msra.mxu0 0.0
    %485 = vmatprep.subr.mxu0 0.0
    %486 = vmatpush1.msra.mxu0 0.0
    %487 = vmatprep.subr.mxu0 0.0
    %488 = vmatpush1.msra.mxu0 0.0
    %489 = vmatprep.subr.mxu0 0.0
    %490 = vmatpush1.msra.mxu0 0.0
    %491 = vmatprep.subr.mxu0 0.0
    %492 = vmatpush1.msra.mxu0 0.0
    %493 = vmatprep.subr.mxu0 0.0
    %494 = vmatpush1.msra.mxu0 0.0
    %495 = vmatprep.subr.mxu0 0.0
    %496 = vmatpush1.msra.mxu0 0.0
    %497 = vmatprep.subr.mxu0 0.0
    %498 = vmatpush1.msra.mxu0 0.0
    %499 = vmatprep.subr.mxu0 0.0
    %500 = vmatpush1.msra.mxu0 0.0
    %501 = vmatprep.subr.mxu0 0.0
    %502 = vmatpush1.msra.mxu0 0.0
    %503 = vmatprep.subr.mxu0 0.0
    %504 = vmatpush1.msra.mxu0 0.0
    %505 = vmatprep.subr.mxu0 0.0
    %506 = vmatpush1.msra.mxu0 0.0
    %507 = vmatprep.subr.mxu0 0.0
    %508 = vmatpush1.msra.mxu0 0.0
    %509 = vmatprep.mubr.f32.mxu0 0.0
    %510 = vmatmul.mubr.f32.gmra.mrb[0].mxu0 %v110
    %v511 = vpop.f32.mrb[0].mxu0
    %v512 = vadd.f32 0.0, %v511
    %v513 = vpop.f32.mrb[0].mxu0
    %514 = vmatprep.mubr.f32.mxu0 0.0
    %515 = vmatmul.mubr.f32.gmra.mrb[0].mxu0 %v112
    %v516 = vpop.f32.mrb[0].mxu0
    %v517 = vadd.f32 0.0, %v516
    %v518 = vpop.f32.mrb[0].mxu0
    %519 = vmatprep.mubr.f32.mxu0 0.0
    %520 = vmatmul.mubr.f32.gmra.mrb[0].mxu0 %v114
    %v521 = vpop.f32.mrb[0].mxu0
    %v522 = vadd.f32 0.0, %v521
    %v523 = vpop.f32.mrb[0].mxu0
    %524 = vmatprep.mubr.f32.mxu0 0.0
    %525 = vmatmul.mubr.f32.gmra.mrb[0].mxu0 %v116
    %v526 = vpop.f32.mrb[0].mxu0
    %v527 = vadd.f32 0.0, %v526
    %v528 = vpop.f32.mrb[0].mxu0
    %529 = vdwg.mxu0
    %v534 = vcombine.high %v512, %v512
    %v535 = vcombine.high %v517, %v517
    %v536 = vcombine.high %v522, %v522
    %v537 = vcombine.high %v527, %v527
    %s542 = scalar_lea.vmem [#allocation2], 96
    %543 = vst.msk [vmem:[%s542] sm:$0xf] %vm215, %v512
    %544 = vst.msk [vmem:[%s542 + $0x4] sm:$0xf] %vm215, %v534
    %545 = vst.msk [vmem:[%s542 + $0x8] sm:$0xf] %vm215, %v517
    %546 = vst.msk [vmem:[%s542 + $0xc] sm:$0xf] %vm215, %v535
    %547 = vst.msk [vmem:[%s542 + $0x10] sm:$0xf] %vm215, %v522
    %548 = vst.msk [vmem:[%s542 + $0x14] sm:$0xf] %vm215, %v536
    %549 = vst.msk [vmem:[%s542 + $0x18] sm:$0xf] %vm215, %v527
    %550 = vst.msk [vmem:[%s542 + $0x1c] sm:$0xf] %vm215, %v537
    %v551 = vld [vmem:[#allocation3] sm:$0xf]
    %v552 = vld [vmem:[#allocation4] sm:$0xf]
    %v553 = vld [vmem:[#allocation2] sm:$0xf]
    %v554 = vld [vmem:[#allocation11] sm:$0xff]
    %v555 = vld [vmem:[#allocation11 + $0x8] sm:$0xff]
    %v556 = vld [vmem:[#allocation11 + $0x10] sm:$0xff]
    %v557 = vld [vmem:[#allocation11 + $0x18] sm:$0xff]
    %vm558 = vcmask 261120
    %v560 = vsel %vm558, %v551, 0
    %562 = vmatprep.subr.mxu0 0.0
    %563 = vmatpush1.msra.mxu0 %v554
    %564 = vmatprep.subr.mxu0 0.0
    %565 = vmatpush1.msra.mxu0 %v555
    %566 = vmatprep.subr.mxu0 0.0
    %567 = vmatpush1.msra.mxu0 %v556
    %568 = vmatprep.subr.mxu0 0.0
    %569 = vmatpush1.msra.mxu0 %v557
    %570 = vmatprep.subr.mxu0 0.0
    %571 = vmatpush1.msra.mxu0 0.0
    %572 = vmatprep.subr.mxu0 0.0
    %573 = vmatpush1.msra.mxu0 0.0
    %574 = vmatprep.subr.mxu0 0.0
    %575 = vmatpush1.msra.mxu0 0.0
    %576 = vmatprep.subr.mxu0 0.0
    %577 = vmatpush1.msra.mxu0 0.0
    %578 = vmatprep.subr.mxu0 0.0
    %579 = vmatpush1.msra.mxu0 0.0
    %580 = vmatprep.subr.mxu0 0.0
    %581 = vmatpush1.msra.mxu0 0.0
    %582 = vmatprep.subr.mxu0 0.0
    %583 = vmatpush1.msra.mxu0 0.0
    %584 = vmatprep.subr.mxu0 0.0
    %585 = vmatpush1.msra.mxu0 0.0
    %586 = vmatprep.subr.mxu0 0.0
    %587 = vmatpush1.msra.mxu0 0.0
    %588 = vmatprep.subr.mxu0 0.0
    %589 = vmatpush1.msra.mxu0 0.0
    %590 = vmatprep.subr.mxu0 0.0
    %591 = vmatpush1.msra.mxu0 0.0
    %592 = vmatprep.subr.mxu0 0.0
    %593 = vmatpush1.msra.mxu0 0.0
    %594 = vmatprep.subr.mxu0 0.0
    %595 = vmatpush1.msra.mxu0 0.0
    %596 = vmatprep.subr.mxu0 0.0
    %597 = vmatpush1.msra.mxu0 0.0
    %598 = vmatprep.subr.mxu0 0.0
    %599 = vmatpush1.msra.mxu0 0.0
    %600 = vmatprep.subr.mxu0 0.0
    %601 = vmatpush1.msra.mxu0 0.0
    %602 = vmatprep.subr.mxu0 0.0
    %603 = vmatpush1.msra.mxu0 0.0
    %604 = vmatprep.subr.mxu0 0.0
    %605 = vmatpush1.msra.mxu0 0.0
    %606 = vmatprep.subr.mxu0 0.0
    %607 = vmatpush1.msra.mxu0 0.0
    %608 = vmatprep.subr.mxu0 0.0
    %609 = vmatpush1.msra.mxu0 0.0
    %610 = vmatprep.subr.mxu0 0.0
    %611 = vmatpush1.msra.mxu0 0.0
    %612 = vmatprep.subr.mxu0 0.0
    %613 = vmatpush1.msra.mxu0 0.0
    %614 = vmatprep.subr.mxu0 0.0
    %615 = vmatpush1.msra.mxu0 0.0
    %616 = vmatprep.subr.mxu0 0.0
    %617 = vmatpush1.msra.mxu0 0.0
    %618 = vmatprep.subr.mxu0 0.0
    %619 = vmatpush1.msra.mxu0 0.0
    %620 = vmatprep.subr.mxu0 0.0
    %621 = vmatpush1.msra.mxu0 0.0
    %622 = vmatprep.subr.mxu0 0.0
    %623 = vmatpush1.msra.mxu0 0.0
    %624 = vmatprep.subr.mxu0 0.0
    %625 = vmatpush1.msra.mxu0 0.0
    %626 = vmatprep.mubr.f32.mxu0 0.0
    %627 = vmatmul.mubr.f32.gmra.mrb[0].mxu0 %v560
    %v628 = vpop.f32.mrb[0].mxu0
    %v629 = vadd.f32 0.0, %v628
    %v630 = vpop.f32.mrb[0].mxu0
    %631 = vdwg.mxu0
    %v632 = vadd.f32 %v553, %v629
    %v633 = vxor.u32 %v632, 2147483648
    %v634 = vmul.f32 %v633, 1.442695
    %v635 = vpow.pop %v634
    %v636 = vadd.f32 %v635, 1.0
    %v637 = vrcp.pop %v636
    %v638 = vmul.f32 1.0, %v637
    %v639 = vld [vmem:[%s324] sm:$0xf]
    %s640 = scalar_lea.vmem [#allocation11], 32
    %v641 = vld [vmem:[%s640] sm:$0xff]
    %v642 = vld [vmem:[%s640 + $0x8] sm:$0xff]
    %v643 = vld [vmem:[%s640 + $0x10] sm:$0xff]
    %v644 = vld [vmem:[%s640 + $0x18] sm:$0xff]
    %645 = vmatprep.subr.mxu0 0.0
    %646 = vmatpush1.msra.mxu0 %v641
    %647 = vmatprep.subr.mxu0 0.0
    %648 = vmatpush1.msra.mxu0 %v642
    %649 = vmatprep.subr.mxu0 0.0
    %650 = vmatpush1.msra.mxu0 %v643
    %651 = vmatprep.subr.mxu0 0.0
    %652 = vmatpush1.msra.mxu0 %v644
    %653 = vmatprep.subr.mxu0 0.0
    %654 = vmatpush1.msra.mxu0 0.0
    %655 = vmatprep.subr.mxu0 0.0
    %656 = vmatpush1.msra.mxu0 0.0
    %657 = vmatprep.subr.mxu0 0.0
    %658 = vmatpush1.msra.mxu0 0.0
    %659 = vmatprep.subr.mxu0 0.0
    %660 = vmatpush1.msra.mxu0 0.0
    %661 = vmatprep.subr.mxu0 0.0
    %662 = vmatpush1.msra.mxu0 0.0
    %663 = vmatprep.subr.mxu0 0.0
    %664 = vmatpush1.msra.mxu0 0.0
    %665 = vmatprep.subr.mxu0 0.0
    %666 = vmatpush1.msra.mxu0 0.0
    %667 = vmatprep.subr.mxu0 0.0
    %668 = vmatpush1.msra.mxu0 0.0
    %669 = vmatprep.subr.mxu0 0.0
    %670 = vmatpush1.msra.mxu0 0.0
    %671 = vmatprep.subr.mxu0 0.0
    %672 = vmatpush1.msra.mxu0 0.0
    %673 = vmatprep.subr.mxu0 0.0
    %674 = vmatpush1.msra.mxu0 0.0
    %675 = vmatprep.subr.mxu0 0.0
    %676 = vmatpush1.msra.mxu0 0.0
    %677 = vmatprep.subr.mxu0 0.0
    %678 = vmatpush1.msra.mxu0 0.0
    %679 = vmatprep.subr.mxu0 0.0
    %680 = vmatpush1.msra.mxu0 0.0
    %681 = vmatprep.subr.mxu0 0.0
    %682 = vmatpush1.msra.mxu0 0.0
    %683 = vmatprep.subr.mxu0 0.0
    %684 = vmatpush1.msra.mxu0 0.0
    %685 = vmatprep.subr.mxu0 0.0
    %686 = vmatpush1.msra.mxu0 0.0
    %687 = vmatprep.subr.mxu0 0.0
    %688 = vmatpush1.msra.mxu0 0.0
    %689 = vmatprep.subr.mxu0 0.0
    %690 = vmatpush1.msra.mxu0 0.0
    %691 = vmatprep.subr.mxu0 0.0
    %692 = vmatpush1.msra.mxu0 0.0
    %693 = vmatprep.subr.mxu0 0.0
    %694 = vmatpush1.msra.mxu0 0.0
    %695 = vmatprep.subr.mxu0 0.0
    %696 = vmatpush1.msra.mxu0 0.0
    %697 = vmatprep.subr.mxu0 0.0
    %698 = vmatpush1.msra.mxu0 0.0
    %699 = vmatprep.subr.mxu0 0.0
    %700 = vmatpush1.msra.mxu0 0.0
    %701 = vmatprep.subr.mxu0 0.0
    %702 = vmatpush1.msra.mxu0 0.0
    %703 = vmatprep.subr.mxu0 0.0
    %704 = vmatpush1.msra.mxu0 0.0
    %705 = vmatprep.subr.mxu0 0.0
    %706 = vmatpush1.msra.mxu0 0.0
    %707 = vmatprep.subr.mxu0 0.0
    %708 = vmatpush1.msra.mxu0 0.0
    %709 = vmatprep.mubr.f32.mxu0 0.0
    %710 = vmatmul.mubr.f32.gmra.mrb[0].mxu0 %v560
    %v711 = vpop.f32.mrb[0].mxu0
    %v712 = vadd.f32 0.0, %v711
    %v713 = vpop.f32.mrb[0].mxu0
    %714 = vdwg.mxu0
    %v715 = vadd.f32 %v639, %v712
    %v716 = vxor.u32 %v715, 2147483648
    %v717 = vmul.f32 %v716, 1.442695
    %v718 = vpow.pop %v717
    %v719 = vadd.f32 %v718, 1.0
    %v720 = vrcp.pop %v719
    %v721 = vmul.f32 1.0, %v720
    %v722 = vld [vmem:[%s433] sm:$0xf]
    %s723 = scalar_lea.vmem [#allocation11], 64
    %v724 = vld [vmem:[%s723] sm:$0xff]
    %v725 = vld [vmem:[%s723 + $0x8] sm:$0xff]
    %v726 = vld [vmem:[%s723 + $0x10] sm:$0xff]
    %v727 = vld [vmem:[%s723 + $0x18] sm:$0xff]
    %728 = vmatprep.subr.mxu0 0.0
    %729 = vmatpush1.msra.mxu0 %v724
    %730 = vmatprep.subr.mxu0 0.0
    %731 = vmatpush1.msra.mxu0 %v725
    %732 = vmatprep.subr.mxu0 0.0
    %733 = vmatpush1.msra.mxu0 %v726
    %734 = vmatprep.subr.mxu0 0.0
    %735 = vmatpush1.msra.mxu0 %v727
    %736 = vmatprep.subr.mxu0 0.0
    %737 = vmatpush1.msra.mxu0 0.0
    %738 = vmatprep.subr.mxu0 0.0
    %739 = vmatpush1.msra.mxu0 0.0
    %740 = vmatprep.subr.mxu0 0.0
    %741 = vmatpush1.msra.mxu0 0.0
    %742 = vmatprep.subr.mxu0 0.0
    %743 = vmatpush1.msra.mxu0 0.0
    %744 = vmatprep.subr.mxu0 0.0
    %745 = vmatpush1.msra.mxu0 0.0
    %746 = vmatprep.subr.mxu0 0.0
    %747 = vmatpush1.msra.mxu0 0.0
    %748 = vmatprep.subr.mxu0 0.0
    %749 = vmatpush1.msra.mxu0 0.0
    %750 = vmatprep.subr.mxu0 0.0
    %751 = vmatpush1.msra.mxu0 0.0
    %752 = vmatprep.subr.mxu0 0.0
    %753 = vmatpush1.msra.mxu0 0.0
    %754 = vmatprep.subr.mxu0 0.0
    %755 = vmatpush1.msra.mxu0 0.0
    %756 = vmatprep.subr.mxu0 0.0
    %757 = vmatpush1.msra.mxu0 0.0
    %758 = vmatprep.subr.mxu0 0.0
    %759 = vmatpush1.msra.mxu0 0.0
    %760 = vmatprep.subr.mxu0 0.0
    %761 = vmatpush1.msra.mxu0 0.0
    %762 = vmatprep.subr.mxu0 0.0
    %763 = vmatpush1.msra.mxu0 0.0
    %764 = vmatprep.subr.mxu0 0.0
    %765 = vmatpush1.msra.mxu0 0.0
    %766 = vmatprep.subr.mxu0 0.0
    %767 = vmatpush1.msra.mxu0 0.0
    %768 = vmatprep.subr.mxu0 0.0
    %769 = vmatpush1.msra.mxu0 0.0
    %770 = vmatprep.subr.mxu0 0.0
    %771 = vmatpush1.msra.mxu0 0.0
    %772 = vmatprep.subr.mxu0 0.0
    %773 = vmatpush1.msra.mxu0 0.0
    %774 = vmatprep.subr.mxu0 0.0
    %775 = vmatpush1.msra.mxu0 0.0
    %776 = vmatprep.subr.mxu0 0.0
    %777 = vmatpush1.msra.mxu0 0.0
    %778 = vmatprep.subr.mxu0 0.0
    %779 = vmatpush1.msra.mxu0 0.0
    %780 = vmatprep.subr.mxu0 0.0
    %781 = vmatpush1.msra.mxu0 0.0
    %782 = vmatprep.subr.mxu0 0.0
    %783 = vmatpush1.msra.mxu0 0.0
    %784 = vmatprep.subr.mxu0 0.0
    %785 = vmatpush1.msra.mxu0 0.0
    %786 = vmatprep.subr.mxu0 0.0
    %787 = vmatpush1.msra.mxu0 0.0
    %788 = vmatprep.subr.mxu0 0.0
    %789 = vmatpush1.msra.mxu0 0.0
    %790 = vmatprep.subr.mxu0 0.0
    %791 = vmatpush1.msra.mxu0 0.0
    %792 = vmatprep.mubr.f32.mxu0 0.0
    %793 = vmatmul.mubr.f32.gmra.mrb[0].mxu0 %v560
    %v794 = vpop.f32.mrb[0].mxu0
    %v795 = vadd.f32 0.0, %v794
    %v796 = vpop.f32.mrb[0].mxu0
    %797 = vdwg.mxu0
    %v798 = vadd.f32 %v722, %v795
    %v799 = vtanh.pop %v798
    %v800 = vld [vmem:[%s542] sm:$0xf]
    %s801 = scalar_lea.vmem [#allocation11], 96
    %v802 = vld [vmem:[%s801] sm:$0xff]
    %v803 = vld [vmem:[%s801 + $0x8] sm:$0xff]
    %v804 = vld [vmem:[%s801 + $0x10] sm:$0xff]
    %v805 = vld [vmem:[%s801 + $0x18] sm:$0xff]
    %806 = vmatprep.subr.mxu0 0.0
    %807 = vmatpush1.msra.mxu0 %v802
    %808 = vmatprep.subr.mxu0 0.0
    %809 = vmatpush1.msra.mxu0 %v803
    %810 = vmatprep.subr.mxu0 0.0
    %811 = vmatpush1.msra.mxu0 %v804
    %812 = vmatprep.subr.mxu0 0.0
    %813 = vmatpush1.msra.mxu0 %v805
    %814 = vmatprep.subr.mxu0 0.0
    %815 = vmatpush1.msra.mxu0 0.0
    %816 = vmatprep.subr.mxu0 0.0
    %817 = vmatpush1.msra.mxu0 0.0
    %818 = vmatprep.subr.mxu0 0.0
    %819 = vmatpush1.msra.mxu0 0.0
    %820 = vmatprep.subr.mxu0 0.0
    %821 = vmatpush1.msra.mxu0 0.0
    %822 = vmatprep.subr.mxu0 0.0
    %823 = vmatpush1.msra.mxu0 0.0
    %824 = vmatprep.subr.mxu0 0.0
    %825 = vmatpush1.msra.mxu0 0.0
    %826 = vmatprep.subr.mxu0 0.0
    %827 = vmatpush1.msra.mxu0 0.0
    %828 = vmatprep.subr.mxu0 0.0
    %829 = vmatpush1.msra.mxu0 0.0
    %830 = vmatprep.subr.mxu0 0.0
    %831 = vmatpush1.msra.mxu0 0.0
    %832 = vmatprep.subr.mxu0 0.0
    %833 = vmatpush1.msra.mxu0 0.0
    %834 = vmatprep.subr.mxu0 0.0
    %835 = vmatpush1.msra.mxu0 0.0
    %836 = vmatprep.subr.mxu0 0.0
    %837 = vmatpush1.msra.mxu0 0.0
    %838 = vmatprep.subr.mxu0 0.0
    %839 = vmatpush1.msra.mxu0 0.0
    %840 = vmatprep.subr.mxu0 0.0
    %841 = vmatpush1.msra.mxu0 0.0
    %842 = vmatprep.subr.mxu0 0.0
    %843 = vmatpush1.msra.mxu0 0.0
    %844 = vmatprep.subr.mxu0 0.0
    %845 = vmatpush1.msra.mxu0 0.0
    %846 = vmatprep.subr.mxu0 0.0
    %847 = vmatpush1.msra.mxu0 0.0
    %848 = vmatprep.subr.mxu0 0.0
    %849 = vmatpush1.msra.mxu0 0.0
    %850 = vmatprep.subr.mxu0 0.0
    %851 = vmatpush1.msra.mxu0 0.0
    %852 = vmatprep.subr.mxu0 0.0
    %853 = vmatpush1.msra.mxu0 0.0
    %854 = vmatprep.subr.mxu0 0.0
    %855 = vmatpush1.msra.mxu0 0.0
    %856 = vmatprep.subr.mxu0 0.0
    %857 = vmatpush1.msra.mxu0 0.0
    %858 = vmatprep.subr.mxu0 0.0
    %859 = vmatpush1.msra.mxu0 0.0
    %860 = vmatprep.subr.mxu0 0.0
    %861 = vmatpush1.msra.mxu0 0.0
    %862 = vmatprep.subr.mxu0 0.0
    %863 = vmatpush1.msra.mxu0 0.0
    %864 = vmatprep.subr.mxu0 0.0
    %865 = vmatpush1.msra.mxu0 0.0
    %866 = vmatprep.subr.mxu0 0.0
    %867 = vmatpush1.msra.mxu0 0.0
    %868 = vmatprep.subr.mxu0 0.0
    %869 = vmatpush1.msra.mxu0 0.0
    %870 = vmatprep.mubr.f32.mxu0 0.0
    %871 = vmatmul.mubr.f32.gmra.mrb[0].mxu0 %v560
    %v872 = vpop.f32.mrb[0].mxu0
    %v873 = vadd.f32 0.0, %v872
    %v874 = vpop.f32.mrb[0].mxu0
    %875 = vdwg.mxu0
    %v876 = vadd.f32 %v800, %v873
    %v877 = vxor.u32 %v876, 2147483648
    %v878 = vmul.f32 %v877, 1.442695
    %v879 = vpow.pop %v878
    %v880 = vadd.f32 %v879, 1.0
    %v881 = vrcp.pop %v880
    %v882 = vmul.f32 1.0, %v881
    %v883 = vmul.f32 %v721, %v552
    %v884 = vmul.f32 %v638, %v799
    %v885 = vadd.f32 %v883, %v884
    %v886 = vtanh.pop %v885
    %v887 = vmul.f32 %v882, %v886
    %888 = vst.msk [vmem:[#allocation13] sm:$0xf] %vm215, %v887
    %889 = vst.msk [vmem:[#allocation3] sm:$0xf] %vm215, %v887
    %890 = vst.msk [vmem:[#allocation4] sm:$0xf] %vm215, %v885
    %v891 = vld [vmem:[#allocation3] sm:$0xf]
    %v892 = vld [vmem:[#allocation4] sm:$0xf]
    %s893 = scalar_lea.vmem [#allocation2], 4
    %v894 = vld [vmem:[%s893] sm:$0xf]
    %v895 = vld [vmem:[#allocation11] sm:$0xff]
    %v896 = vld [vmem:[#allocation11 + $0x8] sm:$0xff]
    %v897 = vld [vmem:[#allocation11 + $0x10] sm:$0xff]
    %v898 = vld [vmem:[#allocation11 + $0x18] sm:$0xff]
    %v900 = vsel %vm558, %v891, 0
    %902 = vmatprep.subr.mxu0 0.0
    %903 = vmatpush1.msra.mxu0 %v895
    %904 = vmatprep.subr.mxu0 0.0
    %905 = vmatpush1.msra.mxu0 %v896
    %906 = vmatprep.subr.mxu0 0.0
    %907 = vmatpush1.msra.mxu0 %v897
    %908 = vmatprep.subr.mxu0 0.0
    %909 = vmatpush1.msra.mxu0 %v898
    %910 = vmatprep.subr.mxu0 0.0
    %911 = vmatpush1.msra.mxu0 0.0
    %912 = vmatprep.subr.mxu0 0.0
    %913 = vmatpush1.msra.mxu0 0.0
    %914 = vmatprep.subr.mxu0 0.0
    %915 = vmatpush1.msra.mxu0 0.0
    %916 = vmatprep.subr.mxu0 0.0
    %917 = vmatpush1.msra.mxu0 0.0
    %918 = vmatprep.subr.mxu0 0.0
    %919 = vmatpush1.msra.mxu0 0.0
    %920 = vmatprep.subr.mxu0 0.0
    %921 = vmatpush1.msra.mxu0 0.0
    %922 = vmatprep.subr.mxu0 0.0
    %923 = vmatpush1.msra.mxu0 0.0
    %924 = vmatprep.subr.mxu0 0.0
    %925 = vmatpush1.msra.mxu0 0.0
    %926 = vmatprep.subr.mxu0 0.0
    %927 = vmatpush1.msra.mxu0 0.0
    %928 = vmatprep.subr.mxu0 0.0
    %929 = vmatpush1.msra.mxu0 0.0
    %930 = vmatprep.subr.mxu0 0.0
    %931 = vmatpush1.msra.mxu0 0.0
    %932 = vmatprep.subr.mxu0 0.0
    %933 = vmatpush1.msra.mxu0 0.0
    %934 = vmatprep.subr.mxu0 0.0
    %935 = vmatpush1.msra.mxu0 0.0
    %936 = vmatprep.subr.mxu0 0.0
    %937 = vmatpush1.msra.mxu0 0.0
    %938 = vmatprep.subr.mxu0 0.0
    %939 = vmatpush1.msra.mxu0 0.0
    %940 = vmatprep.subr.mxu0 0.0
    %941 = vmatpush1.msra.mxu0 0.0
    %942 = vmatprep.subr.mxu0 0.0
    %943 = vmatpush1.msra.mxu0 0.0
    %944 = vmatprep.subr.mxu0 0.0
    %945 = vmatpush1.msra.mxu0 0.0
    %946 = vmatprep.subr.mxu0 0.0
    %947 = vmatpush1.msra.mxu0 0.0
    %948 = vmatprep.subr.mxu0 0.0
    %949 = vmatpush1.msra.mxu0 0.0
    %950 = vmatprep.subr.mxu0 0.0
    %951 = vmatpush1.msra.mxu0 0.0
    %952 = vmatprep.subr.mxu0 0.0
    %953 = vmatpush1.msra.mxu0 0.0
    %954 = vmatprep.subr.mxu0 0.0
    %955 = vmatpush1.msra.mxu0 0.0
    %956 = vmatprep.subr.mxu0 0.0
    %957 = vmatpush1.msra.mxu0 0.0
    %958 = vmatprep.subr.mxu0 0.0
    %959 = vmatpush1.msra.mxu0 0.0
    %960 = vmatprep.subr.mxu0 0.0
    %961 = vmatpush1.msra.mxu0 0.0
    %962 = vmatprep.subr.mxu0 0.0
    %963 = vmatpush1.msra.mxu0 0.0
    %964 = vmatprep.subr.mxu0 0.0
    %965 = vmatpush1.msra.mxu0 0.0
    %966 = vmatprep.mubr.f32.mxu0 0.0
    %967 = vmatmul.mubr.f32.gmra.mrb[0].mxu0 %v900
    %v968 = vpop.f32.mrb[0].mxu0
    %v969 = vadd.f32 0.0, %v968
    %v970 = vpop.f32.mrb[0].mxu0
    %971 = vdwg.mxu0
    %v972 = vadd.f32 %v894, %v969
    %v973 = vxor.u32 %v972, 2147483648
    %v974 = vmul.f32 %v973, 1.442695
    %v975 = vpow.pop %v974
    %v976 = vadd.f32 %v975, 1.0
    %v977 = vrcp.pop %v976
    %v978 = vmul.f32 1.0, %v977
    %s979 = scalar_lea.vmem [#allocation2], 36
    %v980 = vld [vmem:[%s979] sm:$0xf]
    %v981 = vld [vmem:[%s640] sm:$0xff]
    %v982 = vld [vmem:[%s640 + $0x8] sm:$0xff]
    %v983 = vld [vmem:[%s640 + $0x10] sm:$0xff]
    %v984 = vld [vmem:[%s640 + $0x18] sm:$0xff]
    %985 = vmatprep.subr.mxu0 0.0
    %986 = vmatpush1.msra.mxu0 %v981
    %987 = vmatprep.subr.mxu0 0.0
    %988 = vmatpush1.msra.mxu0 %v982
    %989 = vmatprep.subr.mxu0 0.0
    %990 = vmatpush1.msra.mxu0 %v983
    %991 = vmatprep.subr.mxu0 0.0
    %992 = vmatpush1.msra.mxu0 %v984
    %993 = vmatprep.subr.mxu0 0.0
    %994 = vmatpush1.msra.mxu0 0.0
    %995 = vmatprep.subr.mxu0 0.0
    %996 = vmatpush1.msra.mxu0 0.0
    %997 = vmatprep.subr.mxu0 0.0
    %998 = vmatpush1.msra.mxu0 0.0
    %999 = vmatprep.subr.mxu0 0.0
    %1000 = vmatpush1.msra.mxu0 0.0
    %1001 = vmatprep.subr.mxu0 0.0
    %1002 = vmatpush1.msra.mxu0 0.0
    %1003 = vmatprep.subr.mxu0 0.0
    %1004 = vmatpush1.msra.mxu0 0.0
    %1005 = vmatprep.subr.mxu0 0.0
    %1006 = vmatpush1.msra.mxu0 0.0
    %1007 = vmatprep.subr.mxu0 0.0
    %1008 = vmatpush1.msra.mxu0 0.0
    %1009 = vmatprep.subr.mxu0 0.0
    %1010 = vmatpush1.msra.mxu0 0.0
    %1011 = vmatprep.subr.mxu0 0.0
    %1012 = vmatpush1.msra.mxu0 0.0
    %1013 = vmatprep.subr.mxu0 0.0
    %1014 = vmatpush1.msra.mxu0 0.0
    %1015 = vmatprep.subr.mxu0 0.0
    %1016 = vmatpush1.msra.mxu0 0.0
    %1017 = vmatprep.subr.mxu0 0.0
    %1018 = vmatpush1.msra.mxu0 0.0
    %1019 = vmatprep.subr.mxu0 0.0
    %1020 = vmatpush1.msra.mxu0 0.0
    %1021 = vmatprep.subr.mxu0 0.0
    %1022 = vmatpush1.msra.mxu0 0.0
    %1023 = vmatprep.subr.mxu0 0.0
    %1024 = vmatpush1.msra.mxu0 0.0
    %1025 = vmatprep.subr.mxu0 0.0
    %1026 = vmatpush1.msra.mxu0 0.0
    %1027 = vmatprep.subr.mxu0 0.0
    %1028 = vmatpush1.msra.mxu0 0.0
    %1029 = vmatprep.subr.mxu0 0.0
    %1030 = vmatpush1.msra.mxu0 0.0
    %1031 = vmatprep.subr.mxu0 0.0
    %1032 = vmatpush1.msra.mxu0 0.0
    %1033 = vmatprep.subr.mxu0 0.0
    %1034 = vmatpush1.msra.mxu0 0.0
    %1035 = vmatprep.subr.mxu0 0.0
    %1036 = vmatpush1.msra.mxu0 0.0
    %1037 = vmatprep.subr.mxu0 0.0
    %1038 = vmatpush1.msra.mxu0 0.0
    %1039 = vmatprep.subr.mxu0 0.0
    %1040 = vmatpush1.msra.mxu0 0.0
    %1041 = vmatprep.subr.mxu0 0.0
    %1042 = vmatpush1.msra.mxu0 0.0
    %1043 = vmatprep.subr.mxu0 0.0
    %1044 = vmatpush1.msra.mxu0 0.0
    %1045 = vmatprep.subr.mxu0 0.0
    %1046 = vmatpush1.msra.mxu0 0.0
    %1047 = vmatprep.subr.mxu0 0.0
    %1048 = vmatpush1.msra.mxu0 0.0
    %1049 = vmatprep.mubr.f32.mxu0 0.0
    %1050 = vmatmul.mubr.f32.gmra.mrb[0].mxu0 %v900
    %v1051 = vpop.f32.mrb[0].mxu0
    %v1052 = vadd.f32 0.0, %v1051
    %v1053 = vpop.f32.mrb[0].mxu0
    %1054 = vdwg.mxu0
    %v1055 = vadd.f32 %v980, %v1052
    %v1056 = vxor.u32 %v1055, 2147483648
    %v1057 = vmul.f32 %v1056, 1.442695
    %v1058 = vpow.pop %v1057
    %v1059 = vadd.f32 %v1058, 1.0
    %v1060 = vrcp.pop %v1059
    %v1061 = vmul.f32 1.0, %v1060
    %s1062 = scalar_lea.vmem [#allocation2], 68
    %v1063 = vld [vmem:[%s1062] sm:$0xf]
    %v1064 = vld [vmem:[%s723] sm:$0xff]
    %v1065 = vld [vmem:[%s723 + $0x8] sm:$0xff]
    %v1066 = vld [vmem:[%s723 + $0x10] sm:$0xff]
    %v1067 = vld [vmem:[%s723 + $0x18] sm:$0xff]
    %1068 = vmatprep.subr.mxu0 0.0
    %1069 = vmatpush1.msra.mxu0 %v1064
    %1070 = vmatprep.subr.mxu0 0.0
    %1071 = vmatpush1.msra.mxu0 %v1065
    %1072 = vmatprep.subr.mxu0 0.0
    %1073 = vmatpush1.msra.mxu0 %v1066
    %1074 = vmatprep.subr.mxu0 0.0
    %1075 = vmatpush1.msra.mxu0 %v1067
    %1076 = vmatprep.subr.mxu0 0.0
    %1077 = vmatpush1.msra.mxu0 0.0
    %1078 = vmatprep.subr.mxu0 0.0
    %1079 = vmatpush1.msra.mxu0 0.0
    %1080 = vmatprep.subr.mxu0 0.0
    %1081 = vmatpush1.msra.mxu0 0.0
    %1082 = vmatprep.subr.mxu0 0.0
    %1083 = vmatpush1.msra.mxu0 0.0
    %1084 = vmatprep.subr.mxu0 0.0
    %1085 = vmatpush1.msra.mxu0 0.0
    %1086 = vmatprep.subr.mxu0 0.0
    %1087 = vmatpush1.msra.mxu0 0.0
    %1088 = vmatprep.subr.mxu0 0.0
    %1089 = vmatpush1.msra.mxu0 0.0
    %1090 = vmatprep.subr.mxu0 0.0
    %1091 = vmatpush1.msra.mxu0 0.0
    %1092 = vmatprep.subr.mxu0 0.0
    %1093 = vmatpush1.msra.mxu0 0.0
    %1094 = vmatprep.subr.mxu0 0.0
    %1095 = vmatpush1.msra.mxu0 0.0
    %1096 = vmatprep.subr.mxu0 0.0
    %1097 = vmatpush1.msra.mxu0 0.0
    %1098 = vmatprep.subr.mxu0 0.0
    %1099 = vmatpush1.msra.mxu0 0.0
    %1100 = vmatprep.subr.mxu0 0.0
    %1101 = vmatpush1.msra.mxu0 0.0
    %1102 = vmatprep.subr.mxu0 0.0
    %1103 = vmatpush1.msra.mxu0 0.0
    %1104 = vmatprep.subr.mxu0 0.0
    %1105 = vmatpush1.msra.mxu0 0.0
    %1106 = vmatprep.subr.mxu0 0.0
    %1107 = vmatpush1.msra.mxu0 0.0
    %1108 = vmatprep.subr.mxu0 0.0
    %1109 = vmatpush1.msra.mxu0 0.0
    %1110 = vmatprep.subr.mxu0 0.0
    %1111 = vmatpush1.msra.mxu0 0.0
    %1112 = vmatprep.subr.mxu0 0.0
    %1113 = vmatpush1.msra.mxu0 0.0
    %1114 = vmatprep.subr.mxu0 0.0
    %1115 = vmatpush1.msra.mxu0 0.0
    %1116 = vmatprep.subr.mxu0 0.0
    %1117 = vmatpush1.msra.mxu0 0.0
    %1118 = vmatprep.subr.mxu0 0.0
    %1119 = vmatpush1.msra.mxu0 0.0
    %1120 = vmatprep.subr.mxu0 0.0
    %1121 = vmatpush1.msra.mxu0 0.0
    %1122 = vmatprep.subr.mxu0 0.0
    %1123 = vmatpush1.msra.mxu0 0.0
    %1124 = vmatprep.subr.mxu0 0.0
    %1125 = vmatpush1.msra.mxu0 0.0
    %1126 = vmatprep.subr.mxu0 0.0
    %1127 = vmatpush1.msra.mxu0 0.0
    %1128 = vmatprep.subr.mxu0 0.0
    %1129 = vmatpush1.msra.mxu0 0.0
    %1130 = vmatprep.subr.mxu0 0.0
    %1131 = vmatpush1.msra.mxu0 0.0
    %1132 = vmatprep.mubr.f32.mxu0 0.0
    %1133 = vmatmul.mubr.f32.gmra.mrb[0].mxu0 %v900
    %v1134 = vpop.f32.mrb[0].mxu0
    %v1135 = vadd.f32 0.0, %v1134
    %v1136 = vpop.f32.mrb[0].mxu0
    %1137 = vdwg.mxu0
    %v1138 = vadd.f32 %v1063, %v1135
    %v1139 = vtanh.pop %v1138
    %s1140 = scalar_lea.vmem [#allocation2], 100
    %v1141 = vld [vmem:[%s1140] sm:$0xf]
    %v1142 = vld [vmem:[%s801] sm:$0xff]
    %v1143 = vld [vmem:[%s801 + $0x8] sm:$0xff]
    %v1144 = vld [vmem:[%s801 + $0x10] sm:$0xff]
    %v1145 = vld [vmem:[%s801 + $0x18] sm:$0xff]
    %1146 = vmatprep.subr.mxu0 0.0
    %1147 = vmatpush1.msra.mxu0 %v1142
    %1148 = vmatprep.subr.mxu0 0.0
    %1149 = vmatpush1.msra.mxu0 %v1143
    %1150 = vmatprep.subr.mxu0 0.0
    %1151 = vmatpush1.msra.mxu0 %v1144
    %1152 = vmatprep.subr.mxu0 0.0
    %1153 = vmatpush1.msra.mxu0 %v1145
    %1154 = vmatprep.subr.mxu0 0.0
    %1155 = vmatpush1.msra.mxu0 0.0
    %1156 = vmatprep.subr.mxu0 0.0
    %1157 = vmatpush1.msra.mxu0 0.0
    %1158 = vmatprep.subr.mxu0 0.0
    %1159 = vmatpush1.msra.mxu0 0.0
    %1160 = vmatprep.subr.mxu0 0.0
    %1161 = vmatpush1.msra.mxu0 0.0
    %1162 = vmatprep.subr.mxu0 0.0
    %1163 = vmatpush1.msra.mxu0 0.0
    %1164 = vmatprep.subr.mxu0 0.0
    %1165 = vmatpush1.msra.mxu0 0.0
    %1166 = vmatprep.subr.mxu0 0.0
    %1167 = vmatpush1.msra.mxu0 0.0
    %1168 = vmatprep.subr.mxu0 0.0
    %1169 = vmatpush1.msra.mxu0 0.0
    %1170 = vmatprep.subr.mxu0 0.0
    %1171 = vmatpush1.msra.mxu0 0.0
    %1172 = vmatprep.subr.mxu0 0.0
    %1173 = vmatpush1.msra.mxu0 0.0
    %1174 = vmatprep.subr.mxu0 0.0
    %1175 = vmatpush1.msra.mxu0 0.0
    %1176 = vmatprep.subr.mxu0 0.0
    %1177 = vmatpush1.msra.mxu0 0.0
    %1178 = vmatprep.subr.mxu0 0.0
    %1179 = vmatpush1.msra.mxu0 0.0
    %1180 = vmatprep.subr.mxu0 0.0
    %1181 = vmatpush1.msra.mxu0 0.0
    %1182 = vmatprep.subr.mxu0 0.0
    %1183 = vmatpush1.msra.mxu0 0.0
    %1184 = vmatprep.subr.mxu0 0.0
    %1185 = vmatpush1.msra.mxu0 0.0
    %1186 = vmatprep.subr.mxu0 0.0
    %1187 = vmatpush1.msra.mxu0 0.0
    %1188 = vmatprep.subr.mxu0 0.0
    %1189 = vmatpush1.msra.mxu0 0.0
    %1190 = vmatprep.subr.mxu0 0.0
    %1191 = vmatpush1.msra.mxu0 0.0
    %1192 = vmatprep.subr.mxu0 0.0
    %1193 = vmatpush1.msra.mxu0 0.0
    %1194 = vmatprep.subr.mxu0 0.0
    %1195 = vmatpush1.msra.mxu0 0.0
    %1196 = vmatprep.subr.mxu0 0.0
    %1197 = vmatpush1.msra.mxu0 0.0
    %1198 = vmatprep.subr.mxu0 0.0
    %1199 = vmatpush1.msra.mxu0 0.0
    %1200 = vmatprep.subr.mxu0 0.0
    %1201 = vmatpush1.msra.mxu0 0.0
    %1202 = vmatprep.subr.mxu0 0.0
    %1203 = vmatpush1.msra.mxu0 0.0
    %1204 = vmatprep.subr.mxu0 0.0
    %1205 = vmatpush1.msra.mxu0 0.0
    %1206 = vmatprep.subr.mxu0 0.0
    %1207 = vmatpush1.msra.mxu0 0.0
    %1208 = vmatprep.subr.mxu0 0.0
    %1209 = vmatpush1.msra.mxu0 0.0
    %1210 = vmatprep.mubr.f32.mxu0 0.0
    %1211 = vmatmul.mubr.f32.gmra.mrb[0].mxu0 %v900
    %v1212 = vpop.f32.mrb[0].mxu0
    %v1213 = vadd.f32 0.0, %v1212
    %v1214 = vpop.f32.mrb[0].mxu0
    %1215 = vdwg.mxu0
    %v1216 = vadd.f32 %v1141, %v1213
    %v1217 = vxor.u32 %v1216, 2147483648
    %v1218 = vmul.f32 %v1217, 1.442695
    %v1219 = vpow.pop %v1218
    %v1220 = vadd.f32 %v1219, 1.0
    %v1221 = vrcp.pop %v1220
    %v1222 = vmul.f32 1.0, %v1221
    %v1223 = vmul.f32 %v1061, %v892
    %v1224 = vmul.f32 %v978, %v1139
    %v1225 = vadd.f32 %v1223, %v1224
    %v1226 = vtanh.pop %v1225
    %v1227 = vmul.f32 %v1222, %v1226
    %s1228 = scalar_lea.vmem [#allocation13], 4
    %1229 = vst.msk [vmem:[%s1228] sm:$0xf] %vm215, %v1227
    %1230 = vst.msk [vmem:[#allocation3] sm:$0xf] %vm215, %v1227
    %1231 = vst.msk [vmem:[#allocation4] sm:$0xf] %vm215, %v1225
    %v1232 = vld [vmem:[#allocation3] sm:$0xf]
    %v1233 = vld [vmem:[#allocation4] sm:$0xf]
    %s1234 = scalar_lea.vmem [#allocation2], 8
    %v1235 = vld [vmem:[%s1234] sm:$0xf]
    %v1236 = vld [vmem:[#allocation11] sm:$0xff]
    %v1237 = vld [vmem:[#allocation11 + $0x8] sm:$0xff]
    %v1238 = vld [vmem:[#allocation11 + $0x10] sm:$0xff]
    %v1239 = vld [vmem:[#allocation11 + $0x18] sm:$0xff]
    %v1241 = vsel %vm558, %v1232, 0
    %1243 = vmatprep.subr.mxu0 0.0
    %1244 = vmatpush1.msra.mxu0 %v1236
    %1245 = vmatprep.subr.mxu0 0.0
    %1246 = vmatpush1.msra.mxu0 %v1237
    %1247 = vmatprep.subr.mxu0 0.0
    %1248 = vmatpush1.msra.mxu0 %v1238
    %1249 = vmatprep.subr.mxu0 0.0
    %1250 = vmatpush1.msra.mxu0 %v1239
    %1251 = vmatprep.subr.mxu0 0.0
    %1252 = vmatpush1.msra.mxu0 0.0
    %1253 = vmatprep.subr.mxu0 0.0
    %1254 = vmatpush1.msra.mxu0 0.0
    %1255 = vmatprep.subr.mxu0 0.0
    %1256 = vmatpush1.msra.mxu0 0.0
    %1257 = vmatprep.subr.mxu0 0.0
    %1258 = vmatpush1.msra.mxu0 0.0
    %1259 = vmatprep.subr.mxu0 0.0
    %1260 = vmatpush1.msra.mxu0 0.0
    %1261 = vmatprep.subr.mxu0 0.0
    %1262 = vmatpush1.msra.mxu0 0.0
    %1263 = vmatprep.subr.mxu0 0.0
    %1264 = vmatpush1.msra.mxu0 0.0
    %1265 = vmatprep.subr.mxu0 0.0
    %1266 = vmatpush1.msra.mxu0 0.0
    %1267 = vmatprep.subr.mxu0 0.0
    %1268 = vmatpush1.msra.mxu0 0.0
    %1269 = vmatprep.subr.mxu0 0.0
    %1270 = vmatpush1.msra.mxu0 0.0
    %1271 = vmatprep.subr.mxu0 0.0
    %1272 = vmatpush1.msra.mxu0 0.0
    %1273 = vmatprep.subr.mxu0 0.0
    %1274 = vmatpush1.msra.mxu0 0.0
    %1275 = vmatprep.subr.mxu0 0.0
    %1276 = vmatpush1.msra.mxu0 0.0
    %1277 = vmatprep.subr.mxu0 0.0
    %1278 = vmatpush1.msra.mxu0 0.0
    %1279 = vmatprep.subr.mxu0 0.0
    %1280 = vmatpush1.msra.mxu0 0.0
    %1281 = vmatprep.subr.mxu0 0.0
    %1282 = vmatpush1.msra.mxu0 0.0
    %1283 = vmatprep.subr.mxu0 0.0
    %1284 = vmatpush1.msra.mxu0 0.0
    %1285 = vmatprep.subr.mxu0 0.0
    %1286 = vmatpush1.msra.mxu0 0.0
    %1287 = vmatprep.subr.mxu0 0.0
    %1288 = vmatpush1.msra.mxu0 0.0
    %1289 = vmatprep.subr.mxu0 0.0
    %1290 = vmatpush1.msra.mxu0 0.0
    %1291 = vmatprep.subr.mxu0 0.0
    %1292 = vmatpush1.msra.mxu0 0.0
    %1293 = vmatprep.subr.mxu0 0.0
    %1294 = vmatpush1.msra.mxu0 0.0
    %1295 = vmatprep.subr.mxu0 0.0
    %1296 = vmatpush1.msra.mxu0 0.0
    %1297 = vmatprep.subr.mxu0 0.0
    %1298 = vmatpush1.msra.mxu0 0.0
    %1299 = vmatprep.subr.mxu0 0.0
    %1300 = vmatpush1.msra.mxu0 0.0
    %1301 = vmatprep.subr.mxu0 0.0
    %1302 = vmatpush1.msra.mxu0 0.0
    %1303 = vmatprep.subr.mxu0 0.0
    %1304 = vmatpush1.msra.mxu0 0.0
    %1305 = vmatprep.subr.mxu0 0.0
    %1306 = vmatpush1.msra.mxu0 0.0
    %1307 = vmatprep.mubr.f32.mxu0 0.0
    %1308 = vmatmul.mubr.f32.gmra.mrb[0].mxu0 %v1241
    %v1309 = vpop.f32.mrb[0].mxu0
    %v1310 = vadd.f32 0.0, %v1309
    %v1311 = vpop.f32.mrb[0].mxu0
    %1312 = vdwg.mxu0
    %v1313 = vadd.f32 %v1235, %v1310
    %v1314 = vxor.u32 %v1313, 2147483648
    %v1315 = vmul.f32 %v1314, 1.442695
    %v1316 = vpow.pop %v1315
    %v1317 = vadd.f32 %v1316, 1.0
    %v1318 = vrcp.pop %v1317
    %v1319 = vmul.f32 1.0, %v1318
    %s1320 = scalar_lea.vmem [#allocation2], 40
    %v1321 = vld [vmem:[%s1320] sm:$0xf]
    %v1322 = vld [vmem:[%s640] sm:$0xff]
    %v1323 = vld [vmem:[%s640 + $0x8] sm:$0xff]
    %v1324 = vld [vmem:[%s640 + $0x10] sm:$0xff]
    %v1325 = vld [vmem:[%s640 + $0x18] sm:$0xff]
    %1326 = vmatprep.subr.mxu0 0.0
    %1327 = vmatpush1.msra.mxu0 %v1322
    %1328 = vmatprep.subr.mxu0 0.0
    %1329 = vmatpush1.msra.mxu0 %v1323
    %1330 = vmatprep.subr.mxu0 0.0
    %1331 = vmatpush1.msra.mxu0 %v1324
    %1332 = vmatprep.subr.mxu0 0.0
    %1333 = vmatpush1.msra.mxu0 %v1325
    %1334 = vmatprep.subr.mxu0 0.0
    %1335 = vmatpush1.msra.mxu0 0.0
    %1336 = vmatprep.subr.mxu0 0.0
    %1337 = vmatpush1.msra.mxu0 0.0
    %1338 = vmatprep.subr.mxu0 0.0
    %1339 = vmatpush1.msra.mxu0 0.0
    %1340 = vmatprep.subr.mxu0 0.0
    %1341 = vmatpush1.msra.mxu0 0.0
    %1342 = vmatprep.subr.mxu0 0.0
    %1343 = vmatpush1.msra.mxu0 0.0
    %1344 = vmatprep.subr.mxu0 0.0
    %1345 = vmatpush1.msra.mxu0 0.0
    %1346 = vmatprep.subr.mxu0 0.0
    %1347 = vmatpush1.msra.mxu0 0.0
    %1348 = vmatprep.subr.mxu0 0.0
    %1349 = vmatpush1.msra.mxu0 0.0
    %1350 = vmatprep.subr.mxu0 0.0
    %1351 = vmatpush1.msra.mxu0 0.0
    %1352 = vmatprep.subr.mxu0 0.0
    %1353 = vmatpush1.msra.mxu0 0.0
    %1354 = vmatprep.subr.mxu0 0.0
    %1355 = vmatpush1.msra.mxu0 0.0
    %1356 = vmatprep.subr.mxu0 0.0
    %1357 = vmatpush1.msra.mxu0 0.0
    %1358 = vmatprep.subr.mxu0 0.0
    %1359 = vmatpush1.msra.mxu0 0.0
    %1360 = vmatprep.subr.mxu0 0.0
    %1361 = vmatpush1.msra.mxu0 0.0
    %1362 = vmatprep.subr.mxu0 0.0
    %1363 = vmatpush1.msra.mxu0 0.0
    %1364 = vmatprep.subr.mxu0 0.0
    %1365 = vmatpush1.msra.mxu0 0.0
    %1366 = vmatprep.subr.mxu0 0.0
    %1367 = vmatpush1.msra.mxu0 0.0
    %1368 = vmatprep.subr.mxu0 0.0
    %1369 = vmatpush1.msra.mxu0 0.0
    %1370 = vmatprep.subr.mxu0 0.0
    %1371 = vmatpush1.msra.mxu0 0.0
    %1372 = vmatprep.subr.mxu0 0.0
    %1373 = vmatpush1.msra.mxu0 0.0
    %1374 = vmatprep.subr.mxu0 0.0
    %1375 = vmatpush1.msra.mxu0 0.0
    %1376 = vmatprep.subr.mxu0 0.0
    %1377 = vmatpush1.msra.mxu0 0.0
    %1378 = vmatprep.subr.mxu0 0.0
    %1379 = vmatpush1.msra.mxu0 0.0
    %1380 = vmatprep.subr.mxu0 0.0
    %1381 = vmatpush1.msra.mxu0 0.0
    %1382 = vmatprep.subr.mxu0 0.0
    %1383 = vmatpush1.msra.mxu0 0.0
    %1384 = vmatprep.subr.mxu0 0.0
    %1385 = vmatpush1.msra.mxu0 0.0
    %1386 = vmatprep.subr.mxu0 0.0
    %1387 = vmatpush1.msra.mxu0 0.0
    %1388 = vmatprep.subr.mxu0 0.0
    %1389 = vmatpush1.msra.mxu0 0.0
    %1390 = vmatprep.mubr.f32.mxu0 0.0
    %1391 = vmatmul.mubr.f32.gmra.mrb[0].mxu0 %v1241
    %v1392 = vpop.f32.mrb[0].mxu0
    %v1393 = vadd.f32 0.0, %v1392
    %v1394 = vpop.f32.mrb[0].mxu0
    %1395 = vdwg.mxu0
    %v1396 = vadd.f32 %v1321, %v1393
    %v1397 = vxor.u32 %v1396, 2147483648
    %v1398 = vmul.f32 %v1397, 1.442695
    %v1399 = vpow.pop %v1398
    %v1400 = vadd.f32 %v1399, 1.0
    %v1401 = vrcp.pop %v1400
    %v1402 = vmul.f32 1.0, %v1401
    %s1403 = scalar_lea.vmem [#allocation2], 72
    %v1404 = vld [vmem:[%s1403] sm:$0xf]
    %v1405 = vld [vmem:[%s723] sm:$0xff]
    %v1406 = vld [vmem:[%s723 + $0x8] sm:$0xff]
    %v1407 = vld [vmem:[%s723 + $0x10] sm:$0xff]
    %v1408 = vld [vmem:[%s723 + $0x18] sm:$0xff]
    %1409 = vmatprep.subr.mxu0 0.0
    %1410 = vmatpush1.msra.mxu0 %v1405
    %1411 = vmatprep.subr.mxu0 0.0
    %1412 = vmatpush1.msra.mxu0 %v1406
    %1413 = vmatprep.subr.mxu0 0.0
    %1414 = vmatpush1.msra.mxu0 %v1407
    %1415 = vmatprep.subr.mxu0 0.0
    %1416 = vmatpush1.msra.mxu0 %v1408
    %1417 = vmatprep.subr.mxu0 0.0
    %1418 = vmatpush1.msra.mxu0 0.0
    %1419 = vmatprep.subr.mxu0 0.0
    %1420 = vmatpush1.msra.mxu0 0.0
    %1421 = vmatprep.subr.mxu0 0.0
    %1422 = vmatpush1.msra.mxu0 0.0
    %1423 = vmatprep.subr.mxu0 0.0
    %1424 = vmatpush1.msra.mxu0 0.0
    %1425 = vmatprep.subr.mxu0 0.0
    %1426 = vmatpush1.msra.mxu0 0.0
    %1427 = vmatprep.subr.mxu0 0.0
    %1428 = vmatpush1.msra.mxu0 0.0
    %1429 = vmatprep.subr.mxu0 0.0
    %1430 = vmatpush1.msra.mxu0 0.0
    %1431 = vmatprep.subr.mxu0 0.0
    %1432 = vmatpush1.msra.mxu0 0.0
    %1433 = vmatprep.subr.mxu0 0.0
    %1434 = vmatpush1.msra.mxu0 0.0
    %1435 = vmatprep.subr.mxu0 0.0
    %1436 = vmatpush1.msra.mxu0 0.0
    %1437 = vmatprep.subr.mxu0 0.0
    %1438 = vmatpush1.msra.mxu0 0.0
    %1439 = vmatprep.subr.mxu0 0.0
    %1440 = vmatpush1.msra.mxu0 0.0
    %1441 = vmatprep.subr.mxu0 0.0
    %1442 = vmatpush1.msra.mxu0 0.0
    %1443 = vmatprep.subr.mxu0 0.0
    %1444 = vmatpush1.msra.mxu0 0.0
    %1445 = vmatprep.subr.mxu0 0.0
    %1446 = vmatpush1.msra.mxu0 0.0
    %1447 = vmatprep.subr.mxu0 0.0
    %1448 = vmatpush1.msra.mxu0 0.0
    %1449 = vmatprep.subr.mxu0 0.0
    %1450 = vmatpush1.msra.mxu0 0.0
    %1451 = vmatprep.subr.mxu0 0.0
    %1452 = vmatpush1.msra.mxu0 0.0
    %1453 = vmatprep.subr.mxu0 0.0
    %1454 = vmatpush1.msra.mxu0 0.0
    %1455 = vmatprep.subr.mxu0 0.0
    %1456 = vmatpush1.msra.mxu0 0.0
    %1457 = vmatprep.subr.mxu0 0.0
    %1458 = vmatpush1.msra.mxu0 0.0
    %1459 = vmatprep.subr.mxu0 0.0
    %1460 = vmatpush1.msra.mxu0 0.0
    %1461 = vmatprep.subr.mxu0 0.0
    %1462 = vmatpush1.msra.mxu0 0.0
    %1463 = vmatprep.subr.mxu0 0.0
    %1464 = vmatpush1.msra.mxu0 0.0
    %1465 = vmatprep.subr.mxu0 0.0
    %1466 = vmatpush1.msra.mxu0 0.0
    %1467 = vmatprep.subr.mxu0 0.0
    %1468 = vmatpush1.msra.mxu0 0.0
    %1469 = vmatprep.subr.mxu0 0.0
    %1470 = vmatpush1.msra.mxu0 0.0
    %1471 = vmatprep.subr.mxu0 0.0
    %1472 = vmatpush1.msra.mxu0 0.0
    %1473 = vmatprep.mubr.f32.mxu0 0.0
    %1474 = vmatmul.mubr.f32.gmra.mrb[0].mxu0 %v1241
    %v1475 = vpop.f32.mrb[0].mxu0
    %v1476 = vadd.f32 0.0, %v1475
    %v1477 = vpop.f32.mrb[0].mxu0
    %1478 = vdwg.mxu0
    %v1479 = vadd.f32 %v1404, %v1476
    %v1480 = vtanh.pop %v1479
    %s1481 = scalar_lea.vmem [#allocation2], 104
    %v1482 = vld [vmem:[%s1481] sm:$0xf]
    %v1483 = vld [vmem:[%s801] sm:$0xff]
    %v1484 = vld [vmem:[%s801 + $0x8] sm:$0xff]
    %v1485 = vld [vmem:[%s801 + $0x10] sm:$0xff]
    %v1486 = vld [vmem:[%s801 + $0x18] sm:$0xff]
    %1487 = vmatprep.subr.mxu0 0.0
    %1488 = vmatpush1.msra.mxu0 %v1483
    %1489 = vmatprep.subr.mxu0 0.0
    %1490 = vmatpush1.msra.mxu0 %v1484
    %1491 = vmatprep.subr.mxu0 0.0
    %1492 = vmatpush1.msra.mxu0 %v1485
    %1493 = vmatprep.subr.mxu0 0.0
    %1494 = vmatpush1.msra.mxu0 %v1486
    %1495 = vmatprep.subr.mxu0 0.0
    %1496 = vmatpush1.msra.mxu0 0.0
    %1497 = vmatprep.subr.mxu0 0.0
    %1498 = vmatpush1.msra.mxu0 0.0
    %1499 = vmatprep.subr.mxu0 0.0
    %1500 = vmatpush1.msra.mxu0 0.0
    %1501 = vmatprep.subr.mxu0 0.0
    %1502 = vmatpush1.msra.mxu0 0.0
    %1503 = vmatprep.subr.mxu0 0.0
    %1504 = vmatpush1.msra.mxu0 0.0
    %1505 = vmatprep.subr.mxu0 0.0
    %1506 = vmatpush1.msra.mxu0 0.0
    %1507 = vmatprep.subr.mxu0 0.0
    %1508 = vmatpush1.msra.mxu0 0.0
    %1509 = vmatprep.subr.mxu0 0.0
    %1510 = vmatpush1.msra.mxu0 0.0
    %1511 = vmatprep.subr.mxu0 0.0
    %1512 = vmatpush1.msra.mxu0 0.0
    %1513 = vmatprep.subr.mxu0 0.0
    %1514 = vmatpush1.msra.mxu0 0.0
    %1515 = vmatprep.subr.mxu0 0.0
    %1516 = vmatpush1.msra.mxu0 0.0
    %1517 = vmatprep.subr.mxu0 0.0
    %1518 = vmatpush1.msra.mxu0 0.0
    %1519 = vmatprep.subr.mxu0 0.0
    %1520 = vmatpush1.msra.mxu0 0.0
    %1521 = vmatprep.subr.mxu0 0.0
    %1522 = vmatpush1.msra.mxu0 0.0
    %1523 = vmatprep.subr.mxu0 0.0
    %1524 = vmatpush1.msra.mxu0 0.0
    %1525 = vmatprep.subr.mxu0 0.0
    %1526 = vmatpush1.msra.mxu0 0.0
    %1527 = vmatprep.subr.mxu0 0.0
    %1528 = vmatpush1.msra.mxu0 0.0
    %1529 = vmatprep.subr.mxu0 0.0
    %1530 = vmatpush1.msra.mxu0 0.0
    %1531 = vmatprep.subr.mxu0 0.0
    %1532 = vmatpush1.msra.mxu0 0.0
    %1533 = vmatprep.subr.mxu0 0.0
    %1534 = vmatpush1.msra.mxu0 0.0
    %1535 = vmatprep.subr.mxu0 0.0
    %1536 = vmatpush1.msra.mxu0 0.0
    %1537 = vmatprep.subr.mxu0 0.0
    %1538 = vmatpush1.msra.mxu0 0.0
    %1539 = vmatprep.subr.mxu0 0.0
    %1540 = vmatpush1.msra.mxu0 0.0
    %1541 = vmatprep.subr.mxu0 0.0
    %1542 = vmatpush1.msra.mxu0 0.0
    %1543 = vmatprep.subr.mxu0 0.0
    %1544 = vmatpush1.msra.mxu0 0.0
    %1545 = vmatprep.subr.mxu0 0.0
    %1546 = vmatpush1.msra.mxu0 0.0
    %1547 = vmatprep.subr.mxu0 0.0
    %1548 = vmatpush1.msra.mxu0 0.0
    %1549 = vmatprep.subr.mxu0 0.0
    %1550 = vmatpush1.msra.mxu0 0.0
    %1551 = vmatprep.mubr.f32.mxu0 0.0
    %1552 = vmatmul.mubr.f32.gmra.mrb[0].mxu0 %v1241
    %v1553 = vpop.f32.mrb[0].mxu0
    %v1554 = vadd.f32 0.0, %v1553
    %v1555 = vpop.f32.mrb[0].mxu0
    %1556 = vdwg.mxu0
    %v1557 = vadd.f32 %v1482, %v1554
    %v1558 = vxor.u32 %v1557, 2147483648
    %v1559 = vmul.f32 %v1558, 1.442695
    %v1560 = vpow.pop %v1559
    %v1561 = vadd.f32 %v1560, 1.0
    %v1562 = vrcp.pop %v1561
    %v1563 = vmul.f32 1.0, %v1562
    %v1564 = vmul.f32 %v1402, %v1233
    %v1565 = vmul.f32 %v1319, %v1480
    %v1566 = vadd.f32 %v1564, %v1565
    %v1567 = vtanh.pop %v1566
    %v1568 = vmul.f32 %v1563, %v1567
    %s1569 = scalar_lea.vmem [#allocation13], 8
    %1570 = vst.msk [vmem:[%s1569] sm:$0xf] %vm215, %v1568
    %1571 = vst.msk [vmem:[#allocation3] sm:$0xf] %vm215, %v1568
    %1572 = vst.msk [vmem:[#allocation4] sm:$0xf] %vm215, %v1566
    %v1573 = vld [vmem:[#allocation3] sm:$0xf]
    %v1574 = vld [vmem:[#allocation4] sm:$0xf]
    %s1575 = scalar_lea.vmem [#allocation2], 12
    %v1576 = vld [vmem:[%s1575] sm:$0xf]
    %v1577 = vld [vmem:[#allocation11] sm:$0xff]
    %v1578 = vld [vmem:[#allocation11 + $0x8] sm:$0xff]
    %v1579 = vld [vmem:[#allocation11 + $0x10] sm:$0xff]
    %v1580 = vld [vmem:[#allocation11 + $0x18] sm:$0xff]
    %v1582 = vsel %vm558, %v1573, 0
    %1584 = vmatprep.subr.mxu0 0.0
    %1585 = vmatpush1.msra.mxu0 %v1577
    %1586 = vmatprep.subr.mxu0 0.0
    %1587 = vmatpush1.msra.mxu0 %v1578
    %1588 = vmatprep.subr.mxu0 0.0
    %1589 = vmatpush1.msra.mxu0 %v1579
    %1590 = vmatprep.subr.mxu0 0.0
    %1591 = vmatpush1.msra.mxu0 %v1580
    %1592 = vmatprep.subr.mxu0 0.0
    %1593 = vmatpush1.msra.mxu0 0.0
    %1594 = vmatprep.subr.mxu0 0.0
    %1595 = vmatpush1.msra.mxu0 0.0
    %1596 = vmatprep.subr.mxu0 0.0
    %1597 = vmatpush1.msra.mxu0 0.0
    %1598 = vmatprep.subr.mxu0 0.0
    %1599 = vmatpush1.msra.mxu0 0.0
    %1600 = vmatprep.subr.mxu0 0.0
    %1601 = vmatpush1.msra.mxu0 0.0
    %1602 = vmatprep.subr.mxu0 0.0
    %1603 = vmatpush1.msra.mxu0 0.0
    %1604 = vmatprep.subr.mxu0 0.0
    %1605 = vmatpush1.msra.mxu0 0.0
    %1606 = vmatprep.subr.mxu0 0.0
    %1607 = vmatpush1.msra.mxu0 0.0
    %1608 = vmatprep.subr.mxu0 0.0
    %1609 = vmatpush1.msra.mxu0 0.0
    %1610 = vmatprep.subr.mxu0 0.0
    %1611 = vmatpush1.msra.mxu0 0.0
    %1612 = vmatprep.subr.mxu0 0.0
    %1613 = vmatpush1.msra.mxu0 0.0
    %1614 = vmatprep.subr.mxu0 0.0
    %1615 = vmatpush1.msra.mxu0 0.0
    %1616 = vmatprep.subr.mxu0 0.0
    %1617 = vmatpush1.msra.mxu0 0.0
    %1618 = vmatprep.subr.mxu0 0.0
    %1619 = vmatpush1.msra.mxu0 0.0
    %1620 = vmatprep.subr.mxu0 0.0
    %1621 = vmatpush1.msra.mxu0 0.0
    %1622 = vmatprep.subr.mxu0 0.0
    %1623 = vmatpush1.msra.mxu0 0.0
    %1624 = vmatprep.subr.mxu0 0.0
    %1625 = vmatpush1.msra.mxu0 0.0
    %1626 = vmatprep.subr.mxu0 0.0
    %1627 = vmatpush1.msra.mxu0 0.0
    %1628 = vmatprep.subr.mxu0 0.0
    %1629 = vmatpush1.msra.mxu0 0.0
    %1630 = vmatprep.subr.mxu0 0.0
    %1631 = vmatpush1.msra.mxu0 0.0
    %1632 = vmatprep.subr.mxu0 0.0
    %1633 = vmatpush1.msra.mxu0 0.0
    %1634 = vmatprep.subr.mxu0 0.0
    %1635 = vmatpush1.msra.mxu0 0.0
    %1636 = vmatprep.subr.mxu0 0.0
    %1637 = vmatpush1.msra.mxu0 0.0
    %1638 = vmatprep.subr.mxu0 0.0
    %1639 = vmatpush1.msra.mxu0 0.0
    %1640 = vmatprep.subr.mxu0 0.0
    %1641 = vmatpush1.msra.mxu0 0.0
    %1642 = vmatprep.subr.mxu0 0.0
    %1643 = vmatpush1.msra.mxu0 0.0
    %1644 = vmatprep.subr.mxu0 0.0
    %1645 = vmatpush1.msra.mxu0 0.0
    %1646 = vmatprep.subr.mxu0 0.0
    %1647 = vmatpush1.msra.mxu0 0.0
    %1648 = vmatprep.mubr.f32.mxu0 0.0
    %1649 = vmatmul.mubr.f32.gmra.mrb[0].mxu0 %v1582
    %v1650 = vpop.f32.mrb[0].mxu0
    %v1651 = vadd.f32 0.0, %v1650
    %v1652 = vpop.f32.mrb[0].mxu0
    %1653 = vdwg.mxu0
    %v1654 = vadd.f32 %v1576, %v1651
    %v1655 = vxor.u32 %v1654, 2147483648
    %v1656 = vmul.f32 %v1655, 1.442695
    %v1657 = vpow.pop %v1656
    %v1658 = vadd.f32 %v1657, 1.0
    %v1659 = vrcp.pop %v1658
    %v1660 = vmul.f32 1.0, %v1659
    %s1661 = scalar_lea.vmem [#allocation2], 44
    %v1662 = vld [vmem:[%s1661] sm:$0xf]
    %v1663 = vld [vmem:[%s640] sm:$0xff]
    %v1664 = vld [vmem:[%s640 + $0x8] sm:$0xff]
    %v1665 = vld [vmem:[%s640 + $0x10] sm:$0xff]
    %v1666 = vld [vmem:[%s640 + $0x18] sm:$0xff]
    %1667 = vmatprep.subr.mxu0 0.0
    %1668 = vmatpush1.msra.mxu0 %v1663
    %1669 = vmatprep.subr.mxu0 0.0
    %1670 = vmatpush1.msra.mxu0 %v1664
    %1671 = vmatprep.subr.mxu0 0.0
    %1672 = vmatpush1.msra.mxu0 %v1665
    %1673 = vmatprep.subr.mxu0 0.0
    %1674 = vmatpush1.msra.mxu0 %v1666
    %1675 = vmatprep.subr.mxu0 0.0
    %1676 = vmatpush1.msra.mxu0 0.0
    %1677 = vmatprep.subr.mxu0 0.0
    %1678 = vmatpush1.msra.mxu0 0.0
    %1679 = vmatprep.subr.mxu0 0.0
    %1680 = vmatpush1.msra.mxu0 0.0
    %1681 = vmatprep.subr.mxu0 0.0
    %1682 = vmatpush1.msra.mxu0 0.0
    %1683 = vmatprep.subr.mxu0 0.0
    %1684 = vmatpush1.msra.mxu0 0.0
    %1685 = vmatprep.subr.mxu0 0.0
    %1686 = vmatpush1.msra.mxu0 0.0
    %1687 = vmatprep.subr.mxu0 0.0
    %1688 = vmatpush1.msra.mxu0 0.0
    %1689 = vmatprep.subr.mxu0 0.0
    %1690 = vmatpush1.msra.mxu0 0.0
    %1691 = vmatprep.subr.mxu0 0.0
    %1692 = vmatpush1.msra.mxu0 0.0
    %1693 = vmatprep.subr.mxu0 0.0
    %1694 = vmatpush1.msra.mxu0 0.0
    %1695 = vmatprep.subr.mxu0 0.0
    %1696 = vmatpush1.msra.mxu0 0.0
    %1697 = vmatprep.subr.mxu0 0.0
    %1698 = vmatpush1.msra.mxu0 0.0
    %1699 = vmatprep.subr.mxu0 0.0
    %1700 = vmatpush1.msra.mxu0 0.0
    %1701 = vmatprep.subr.mxu0 0.0
    %1702 = vmatpush1.msra.mxu0 0.0
    %1703 = vmatprep.subr.mxu0 0.0
    %1704 = vmatpush1.msra.mxu0 0.0
    %1705 = vmatprep.subr.mxu0 0.0
    %1706 = vmatpush1.msra.mxu0 0.0
    %1707 = vmatprep.subr.mxu0 0.0
    %1708 = vmatpush1.msra.mxu0 0.0
    %1709 = vmatprep.subr.mxu0 0.0
    %1710 = vmatpush1.msra.mxu0 0.0
    %1711 = vmatprep.subr.mxu0 0.0
    %1712 = vmatpush1.msra.mxu0 0.0
    %1713 = vmatprep.subr.mxu0 0.0
    %1714 = vmatpush1.msra.mxu0 0.0
    %1715 = vmatprep.subr.mxu0 0.0
    %1716 = vmatpush1.msra.mxu0 0.0
    %1717 = vmatprep.subr.mxu0 0.0
    %1718 = vmatpush1.msra.mxu0 0.0
    %1719 = vmatprep.subr.mxu0 0.0
    %1720 = vmatpush1.msra.mxu0 0.0
    %1721 = vmatprep.subr.mxu0 0.0
    %1722 = vmatpush1.msra.mxu0 0.0
    %1723 = vmatprep.subr.mxu0 0.0
    %1724 = vmatpush1.msra.mxu0 0.0
    %1725 = vmatprep.subr.mxu0 0.0
    %1726 = vmatpush1.msra.mxu0 0.0
    %1727 = vmatprep.subr.mxu0 0.0
    %1728 = vmatpush1.msra.mxu0 0.0
    %1729 = vmatprep.subr.mxu0 0.0
    %1730 = vmatpush1.msra.mxu0 0.0
    %1731 = vmatprep.mubr.f32.mxu0 0.0
    %1732 = vmatmul.mubr.f32.gmra.mrb[0].mxu0 %v1582
    %v1733 = vpop.f32.mrb[0].mxu0
    %v1734 = vadd.f32 0.0, %v1733
    %v1735 = vpop.f32.mrb[0].mxu0
    %1736 = vdwg.mxu0
    %v1737 = vadd.f32 %v1662, %v1734
    %v1738 = vxor.u32 %v1737, 2147483648
    %v1739 = vmul.f32 %v1738, 1.442695
    %v1740 = vpow.pop %v1739
    %v1741 = vadd.f32 %v1740, 1.0
    %v1742 = vrcp.pop %v1741
    %v1743 = vmul.f32 1.0, %v1742
    %s1744 = scalar_lea.vmem [#allocation2], 76
    %v1745 = vld [vmem:[%s1744] sm:$0xf]
    %v1746 = vld [vmem:[%s723] sm:$0xff]
    %v1747 = vld [vmem:[%s723 + $0x8] sm:$0xff]
    %v1748 = vld [vmem:[%s723 + $0x10] sm:$0xff]
    %v1749 = vld [vmem:[%s723 + $0x18] sm:$0xff]
    %1750 = vmatprep.subr.mxu0 0.0
    %1751 = vmatpush1.msra.mxu0 %v1746
    %1752 = vmatprep.subr.mxu0 0.0
    %1753 = vmatpush1.msra.mxu0 %v1747
    %1754 = vmatprep.subr.mxu0 0.0
    %1755 = vmatpush1.msra.mxu0 %v1748
    %1756 = vmatprep.subr.mxu0 0.0
    %1757 = vmatpush1.msra.mxu0 %v1749
    %1758 = vmatprep.subr.mxu0 0.0
    %1759 = vmatpush1.msra.mxu0 0.0
    %1760 = vmatprep.subr.mxu0 0.0
    %1761 = vmatpush1.msra.mxu0 0.0
    %1762 = vmatprep.subr.mxu0 0.0
    %1763 = vmatpush1.msra.mxu0 0.0
    %1764 = vmatprep.subr.mxu0 0.0
    %1765 = vmatpush1.msra.mxu0 0.0
    %1766 = vmatprep.subr.mxu0 0.0
    %1767 = vmatpush1.msra.mxu0 0.0
    %1768 = vmatprep.subr.mxu0 0.0
    %1769 = vmatpush1.msra.mxu0 0.0
    %1770 = vmatprep.subr.mxu0 0.0
    %1771 = vmatpush1.msra.mxu0 0.0
    %1772 = vmatprep.subr.mxu0 0.0
    %1773 = vmatpush1.msra.mxu0 0.0
    %1774 = vmatprep.subr.mxu0 0.0
    %1775 = vmatpush1.msra.mxu0 0.0
    %1776 = vmatprep.subr.mxu0 0.0
    %1777 = vmatpush1.msra.mxu0 0.0
    %1778 = vmatprep.subr.mxu0 0.0
    %1779 = vmatpush1.msra.mxu0 0.0
    %1780 = vmatprep.subr.mxu0 0.0
    %1781 = vmatpush1.msra.mxu0 0.0
    %1782 = vmatprep.subr.mxu0 0.0
    %1783 = vmatpush1.msra.mxu0 0.0
    %1784 = vmatprep.subr.mxu0 0.0
    %1785 = vmatpush1.msra.mxu0 0.0
    %1786 = vmatprep.subr.mxu0 0.0
    %1787 = vmatpush1.msra.mxu0 0.0
    %1788 = vmatprep.subr.mxu0 0.0
    %1789 = vmatpush1.msra.mxu0 0.0
    %1790 = vmatprep.subr.mxu0 0.0
    %1791 = vmatpush1.msra.mxu0 0.0
    %1792 = vmatprep.subr.mxu0 0.0
    %1793 = vmatpush1.msra.mxu0 0.0
    %1794 = vmatprep.subr.mxu0 0.0
    %1795 = vmatpush1.msra.mxu0 0.0
    %1796 = vmatprep.subr.mxu0 0.0
    %1797 = vmatpush1.msra.mxu0 0.0
    %1798 = vmatprep.subr.mxu0 0.0
    %1799 = vmatpush1.msra.mxu0 0.0
    %1800 = vmatprep.subr.mxu0 0.0
    %1801 = vmatpush1.msra.mxu0 0.0
    %1802 = vmatprep.subr.mxu0 0.0
    %1803 = vmatpush1.msra.mxu0 0.0
    %1804 = vmatprep.subr.mxu0 0.0
    %1805 = vmatpush1.msra.mxu0 0.0
    %1806 = vmatprep.subr.mxu0 0.0
    %1807 = vmatpush1.msra.mxu0 0.0
    %1808 = vmatprep.subr.mxu0 0.0
    %1809 = vmatpush1.msra.mxu0 0.0
    %1810 = vmatprep.subr.mxu0 0.0
    %1811 = vmatpush1.msra.mxu0 0.0
    %1812 = vmatprep.subr.mxu0 0.0
    %1813 = vmatpush1.msra.mxu0 0.0
    %1814 = vmatprep.mubr.f32.mxu0 0.0
    %1815 = vmatmul.mubr.f32.gmra.mrb[0].mxu0 %v1582
    %v1816 = vpop.f32.mrb[0].mxu0
    %v1817 = vadd.f32 0.0, %v1816
    %v1818 = vpop.f32.mrb[0].mxu0
    %1819 = vdwg.mxu0
    %v1820 = vadd.f32 %v1745, %v1817
    %v1821 = vtanh.pop %v1820
    %s1822 = scalar_lea.vmem [#allocation2], 108
    %v1823 = vld [vmem:[%s1822] sm:$0xf]
    %v1824 = vld [vmem:[%s801] sm:$0xff]
    %v1825 = vld [vmem:[%s801 + $0x8] sm:$0xff]
    %v1826 = vld [vmem:[%s801 + $0x10] sm:$0xff]
    %v1827 = vld [vmem:[%s801 + $0x18] sm:$0xff]
    %1828 = vmatprep.subr.mxu0 0.0
    %1829 = vmatpush1.msra.mxu0 %v1824
    %1830 = vmatprep.subr.mxu0 0.0
    %1831 = vmatpush1.msra.mxu0 %v1825
    %1832 = vmatprep.subr.mxu0 0.0
    %1833 = vmatpush1.msra.mxu0 %v1826
    %1834 = vmatprep.subr.mxu0 0.0
    %1835 = vmatpush1.msra.mxu0 %v1827
    %1836 = vmatprep.subr.mxu0 0.0
    %1837 = vmatpush1.msra.mxu0 0.0
    %1838 = vmatprep.subr.mxu0 0.0
    %1839 = vmatpush1.msra.mxu0 0.0
    %1840 = vmatprep.subr.mxu0 0.0
    %1841 = vmatpush1.msra.mxu0 0.0
    %1842 = vmatprep.subr.mxu0 0.0
    %1843 = vmatpush1.msra.mxu0 0.0
    %1844 = vmatprep.subr.mxu0 0.0
    %1845 = vmatpush1.msra.mxu0 0.0
    %1846 = vmatprep.subr.mxu0 0.0
    %1847 = vmatpush1.msra.mxu0 0.0
    %1848 = vmatprep.subr.mxu0 0.0
    %1849 = vmatpush1.msra.mxu0 0.0
    %1850 = vmatprep.subr.mxu0 0.0
    %1851 = vmatpush1.msra.mxu0 0.0
    %1852 = vmatprep.subr.mxu0 0.0
    %1853 = vmatpush1.msra.mxu0 0.0
    %1854 = vmatprep.subr.mxu0 0.0
    %1855 = vmatpush1.msra.mxu0 0.0
    %1856 = vmatprep.subr.mxu0 0.0
    %1857 = vmatpush1.msra.mxu0 0.0
    %1858 = vmatprep.subr.mxu0 0.0
    %1859 = vmatpush1.msra.mxu0 0.0
    %1860 = vmatprep.subr.mxu0 0.0
    %1861 = vmatpush1.msra.mxu0 0.0
    %1862 = vmatprep.subr.mxu0 0.0
    %1863 = vmatpush1.msra.mxu0 0.0
    %1864 = vmatprep.subr.mxu0 0.0
    %1865 = vmatpush1.msra.mxu0 0.0
    %1866 = vmatprep.subr.mxu0 0.0
    %1867 = vmatpush1.msra.mxu0 0.0
    %1868 = vmatprep.subr.mxu0 0.0
    %1869 = vmatpush1.msra.mxu0 0.0
    %1870 = vmatprep.subr.mxu0 0.0
    %1871 = vmatpush1.msra.mxu0 0.0
    %1872 = vmatprep.subr.mxu0 0.0
    %1873 = vmatpush1.msra.mxu0 0.0
    %1874 = vmatprep.subr.mxu0 0.0
    %1875 = vmatpush1.msra.mxu0 0.0
    %1876 = vmatprep.subr.mxu0 0.0
    %1877 = vmatpush1.msra.mxu0 0.0
    %1878 = vmatprep.subr.mxu0 0.0
    %1879 = vmatpush1.msra.mxu0 0.0
    %1880 = vmatprep.subr.mxu0 0.0
    %1881 = vmatpush1.msra.mxu0 0.0
    %1882 = vmatprep.subr.mxu0 0.0
    %1883 = vmatpush1.msra.mxu0 0.0
    %1884 = vmatprep.subr.mxu0 0.0
    %1885 = vmatpush1.msra.mxu0 0.0
    %1886 = vmatprep.subr.mxu0 0.0
    %1887 = vmatpush1.msra.mxu0 0.0
    %1888 = vmatprep.subr.mxu0 0.0
    %1889 = vmatpush1.msra.mxu0 0.0
    %1890 = vmatprep.subr.mxu0 0.0
    %1891 = vmatpush1.msra.mxu0 0.0
    %1892 = vmatprep.mubr.f32.mxu0 0.0
    %1893 = vmatmul.mubr.f32.gmra.mrb[0].mxu0 %v1582
    %v1894 = vpop.f32.mrb[0].mxu0
    %v1895 = vadd.f32 0.0, %v1894
    %v1896 = vpop.f32.mrb[0].mxu0
    %1897 = vdwg.mxu0
    %v1898 = vadd.f32 %v1823, %v1895
    %v1899 = vxor.u32 %v1898, 2147483648
    %v1900 = vmul.f32 %v1899, 1.442695
    %v1901 = vpow.pop %v1900
    %v1902 = vadd.f32 %v1901, 1.0
    %v1903 = vrcp.pop %v1902
    %v1904 = vmul.f32 1.0, %v1903
    %v1905 = vmul.f32 %v1743, %v1574
    %v1906 = vmul.f32 %v1660, %v1821
    %v1907 = vadd.f32 %v1905, %v1906
    %v1908 = vtanh.pop %v1907
    %v1909 = vmul.f32 %v1904, %v1908
    %s1910 = scalar_lea.vmem [#allocation13], 12
    %1911 = vst.msk [vmem:[%s1910] sm:$0xf] %vm215, %v1909
    %1912 = vst.msk [vmem:[#allocation3] sm:$0xf] %vm215, %v1909
    %1913 = vst.msk [vmem:[#allocation4] sm:$0xf] %vm215, %v1907
    %v1914 = vld [vmem:[#allocation3] sm:$0xf]
    %v1915 = vld [vmem:[#allocation4] sm:$0xf]
    %s1916 = scalar_lea.vmem [#allocation2], 16
    %v1917 = vld [vmem:[%s1916] sm:$0xf]
    %v1918 = vld [vmem:[#allocation11] sm:$0xff]
    %v1919 = vld [vmem:[#allocation11 + $0x8] sm:$0xff]
    %v1920 = vld [vmem:[#allocation11 + $0x10] sm:$0xff]
    %v1921 = vld [vmem:[#allocation11 + $0x18] sm:$0xff]
    %v1923 = vsel %vm558, %v1914, 0
    %1925 = vmatprep.subr.mxu0 0.0
    %1926 = vmatpush1.msra.mxu0 %v1918
    %1927 = vmatprep.subr.mxu0 0.0
    %1928 = vmatpush1.msra.mxu0 %v1919
    %1929 = vmatprep.subr.mxu0 0.0
    %1930 = vmatpush1.msra.mxu0 %v1920
    %1931 = vmatprep.subr.mxu0 0.0
    %1932 = vmatpush1.msra.mxu0 %v1921
    %1933 = vmatprep.subr.mxu0 0.0
    %1934 = vmatpush1.msra.mxu0 0.0
    %1935 = vmatprep.subr.mxu0 0.0
    %1936 = vmatpush1.msra.mxu0 0.0
    %1937 = vmatprep.subr.mxu0 0.0
    %1938 = vmatpush1.msra.mxu0 0.0
    %1939 = vmatprep.subr.mxu0 0.0
    %1940 = vmatpush1.msra.mxu0 0.0
    %1941 = vmatprep.subr.mxu0 0.0
    %1942 = vmatpush1.msra.mxu0 0.0
    %1943 = vmatprep.subr.mxu0 0.0
    %1944 = vmatpush1.msra.mxu0 0.0
    %1945 = vmatprep.subr.mxu0 0.0
    %1946 = vmatpush1.msra.mxu0 0.0
    %1947 = vmatprep.subr.mxu0 0.0
    %1948 = vmatpush1.msra.mxu0 0.0
    %1949 = vmatprep.subr.mxu0 0.0
    %1950 = vmatpush1.msra.mxu0 0.0
    %1951 = vmatprep.subr.mxu0 0.0
    %1952 = vmatpush1.msra.mxu0 0.0
    %1953 = vmatprep.subr.mxu0 0.0
    %1954 = vmatpush1.msra.mxu0 0.0
    %1955 = vmatprep.subr.mxu0 0.0
    %1956 = vmatpush1.msra.mxu0 0.0
    %1957 = vmatprep.subr.mxu0 0.0
    %1958 = vmatpush1.msra.mxu0 0.0
    %1959 = vmatprep.subr.mxu0 0.0
    %1960 = vmatpush1.msra.mxu0 0.0
    %1961 = vmatprep.subr.mxu0 0.0
    %1962 = vmatpush1.msra.mxu0 0.0
    %1963 = vmatprep.subr.mxu0 0.0
    %1964 = vmatpush1.msra.mxu0 0.0
    %1965 = vmatprep.subr.mxu0 0.0
    %1966 = vmatpush1.msra.mxu0 0.0
    %1967 = vmatprep.subr.mxu0 0.0
    %1968 = vmatpush1.msra.mxu0 0.0
    %1969 = vmatprep.subr.mxu0 0.0
    %1970 = vmatpush1.msra.mxu0 0.0
    %1971 = vmatprep.subr.mxu0 0.0
    %1972 = vmatpush1.msra.mxu0 0.0
    %1973 = vmatprep.subr.mxu0 0.0
    %1974 = vmatpush1.msra.mxu0 0.0
    %1975 = vmatprep.subr.mxu0 0.0
    %1976 = vmatpush1.msra.mxu0 0.0
    %1977 = vmatprep.subr.mxu0 0.0
    %1978 = vmatpush1.msra.mxu0 0.0
    %1979 = vmatprep.subr.mxu0 0.0
    %1980 = vmatpush1.msra.mxu0 0.0
    %1981 = vmatprep.subr.mxu0 0.0
    %1982 = vmatpush1.msra.mxu0 0.0
    %1983 = vmatprep.subr.mxu0 0.0
    %1984 = vmatpush1.msra.mxu0 0.0
    %1985 = vmatprep.subr.mxu0 0.0
    %1986 = vmatpush1.msra.mxu0 0.0
    %1987 = vmatprep.subr.mxu0 0.0
    %1988 = vmatpush1.msra.mxu0 0.0
    %1989 = vmatprep.mubr.f32.mxu0 0.0
    %1990 = vmatmul.mubr.f32.gmra.mrb[0].mxu0 %v1923
    %v1991 = vpop.f32.mrb[0].mxu0
    %v1992 = vadd.f32 0.0, %v1991
    %v1993 = vpop.f32.mrb[0].mxu0
    %1994 = vdwg.mxu0
    %v1995 = vadd.f32 %v1917, %v1992
    %v1996 = vxor.u32 %v1995, 2147483648
    %v1997 = vmul.f32 %v1996, 1.442695
    %v1998 = vpow.pop %v1997
    %v1999 = vadd.f32 %v1998, 1.0
    %v2000 = vrcp.pop %v1999
    %v2001 = vmul.f32 1.0, %v2000
    %s2002 = scalar_lea.vmem [#allocation2], 48
    %v2003 = vld [vmem:[%s2002] sm:$0xf]
    %v2004 = vld [vmem:[%s640] sm:$0xff]
    %v2005 = vld [vmem:[%s640 + $0x8] sm:$0xff]
    %v2006 = vld [vmem:[%s640 + $0x10] sm:$0xff]
    %v2007 = vld [vmem:[%s640 + $0x18] sm:$0xff]
    %2008 = vmatprep.subr.mxu0 0.0
    %2009 = vmatpush1.msra.mxu0 %v2004
    %2010 = vmatprep.subr.mxu0 0.0
    %2011 = vmatpush1.msra.mxu0 %v2005
    %2012 = vmatprep.subr.mxu0 0.0
    %2013 = vmatpush1.msra.mxu0 %v2006
    %2014 = vmatprep.subr.mxu0 0.0
    %2015 = vmatpush1.msra.mxu0 %v2007
    %2016 = vmatprep.subr.mxu0 0.0
    %2017 = vmatpush1.msra.mxu0 0.0
    %2018 = vmatprep.subr.mxu0 0.0
    %2019 = vmatpush1.msra.mxu0 0.0
    %2020 = vmatprep.subr.mxu0 0.0
    %2021 = vmatpush1.msra.mxu0 0.0
    %2022 = vmatprep.subr.mxu0 0.0
    %2023 = vmatpush1.msra.mxu0 0.0
    %2024 = vmatprep.subr.mxu0 0.0
    %2025 = vmatpush1.msra.mxu0 0.0
    %2026 = vmatprep.subr.mxu0 0.0
    %2027 = vmatpush1.msra.mxu0 0.0
    %2028 = vmatprep.subr.mxu0 0.0
    %2029 = vmatpush1.msra.mxu0 0.0
    %2030 = vmatprep.subr.mxu0 0.0
    %2031 = vmatpush1.msra.mxu0 0.0
    %2032 = vmatprep.subr.mxu0 0.0
    %2033 = vmatpush1.msra.mxu0 0.0
    %2034 = vmatprep.subr.mxu0 0.0
    %2035 = vmatpush1.msra.mxu0 0.0
    %2036 = vmatprep.subr.mxu0 0.0
    %2037 = vmatpush1.msra.mxu0 0.0
    %2038 = vmatprep.subr.mxu0 0.0
    %2039 = vmatpush1.msra.mxu0 0.0
    %2040 = vmatprep.subr.mxu0 0.0
    %2041 = vmatpush1.msra.mxu0 0.0
    %2042 = vmatprep.subr.mxu0 0.0
    %2043 = vmatpush1.msra.mxu0 0.0
    %2044 = vmatprep.subr.mxu0 0.0
    %2045 = vmatpush1.msra.mxu0 0.0
    %2046 = vmatprep.subr.mxu0 0.0
    %2047 = vmatpush1.msra.mxu0 0.0
    %2048 = vmatprep.subr.mxu0 0.0
    %2049 = vmatpush1.msra.mxu0 0.0
    %2050 = vmatprep.subr.mxu0 0.0
    %2051 = vmatpush1.msra.mxu0 0.0
    %2052 = vmatprep.subr.mxu0 0.0
    %2053 = vmatpush1.msra.mxu0 0.0
    %2054 = vmatprep.subr.mxu0 0.0
    %2055 = vmatpush1.msra.mxu0 0.0
    %2056 = vmatprep.subr.mxu0 0.0
    %2057 = vmatpush1.msra.mxu0 0.0
    %2058 = vmatprep.subr.mxu0 0.0
    %2059 = vmatpush1.msra.mxu0 0.0
    %2060 = vmatprep.subr.mxu0 0.0
    %2061 = vmatpush1.msra.mxu0 0.0
    %2062 = vmatprep.subr.mxu0 0.0
    %2063 = vmatpush1.msra.mxu0 0.0
    %2064 = vmatprep.subr.mxu0 0.0
    %2065 = vmatpush1.msra.mxu0 0.0
    %2066 = vmatprep.subr.mxu0 0.0
    %2067 = vmatpush1.msra.mxu0 0.0
    %2068 = vmatprep.subr.mxu0 0.0
    %2069 = vmatpush1.msra.mxu0 0.0
    %2070 = vmatprep.subr.mxu0 0.0
    %2071 = vmatpush1.msra.mxu0 0.0
    %2072 = vmatprep.mubr.f32.mxu0 0.0
    %2073 = vmatmul.mubr.f32.gmra.mrb[0].mxu0 %v1923
    %v2074 = vpop.f32.mrb[0].mxu0
    %v2075 = vadd.f32 0.0, %v2074
    %v2076 = vpop.f32.mrb[0].mxu0
    %2077 = vdwg.mxu0
    %v2078 = vadd.f32 %v2003, %v2075
    %v2079 = vxor.u32 %v2078, 2147483648
    %v2080 = vmul.f32 %v2079, 1.442695
    %v2081 = vpow.pop %v2080
    %v2082 = vadd.f32 %v2081, 1.0
    %v2083 = vrcp.pop %v2082
    %v2084 = vmul.f32 1.0, %v2083
    %s2085 = scalar_lea.vmem [#allocation2], 80
    %v2086 = vld [vmem:[%s2085] sm:$0xf]
    %v2087 = vld [vmem:[%s723] sm:$0xff]
    %v2088 = vld [vmem:[%s723 + $0x8] sm:$0xff]
    %v2089 = vld [vmem:[%s723 + $0x10] sm:$0xff]
    %v2090 = vld [vmem:[%s723 + $0x18] sm:$0xff]
    %2091 = vmatprep.subr.mxu0 0.0
    %2092 = vmatpush1.msra.mxu0 %v2087
    %2093 = vmatprep.subr.mxu0 0.0
    %2094 = vmatpush1.msra.mxu0 %v2088
    %2095 = vmatprep.subr.mxu0 0.0
    %2096 = vmatpush1.msra.mxu0 %v2089
    %2097 = vmatprep.subr.mxu0 0.0
    %2098 = vmatpush1.msra.mxu0 %v2090
    %2099 = vmatprep.subr.mxu0 0.0
    %2100 = vmatpush1.msra.mxu0 0.0
    %2101 = vmatprep.subr.mxu0 0.0
    %2102 = vmatpush1.msra.mxu0 0.0
    %2103 = vmatprep.subr.mxu0 0.0
    %2104 = vmatpush1.msra.mxu0 0.0
    %2105 = vmatprep.subr.mxu0 0.0
    %2106 = vmatpush1.msra.mxu0 0.0
    %2107 = vmatprep.subr.mxu0 0.0
    %2108 = vmatpush1.msra.mxu0 0.0
    %2109 = vmatprep.subr.mxu0 0.0
    %2110 = vmatpush1.msra.mxu0 0.0
    %2111 = vmatprep.subr.mxu0 0.0
    %2112 = vmatpush1.msra.mxu0 0.0
    %2113 = vmatprep.subr.mxu0 0.0
    %2114 = vmatpush1.msra.mxu0 0.0
    %2115 = vmatprep.subr.mxu0 0.0
    %2116 = vmatpush1.msra.mxu0 0.0
    %2117 = vmatprep.subr.mxu0 0.0
    %2118 = vmatpush1.msra.mxu0 0.0
    %2119 = vmatprep.subr.mxu0 0.0
    %2120 = vmatpush1.msra.mxu0 0.0
    %2121 = vmatprep.subr.mxu0 0.0
    %2122 = vmatpush1.msra.mxu0 0.0
    %2123 = vmatprep.subr.mxu0 0.0
    %2124 = vmatpush1.msra.mxu0 0.0
    %2125 = vmatprep.subr.mxu0 0.0
    %2126 = vmatpush1.msra.mxu0 0.0
    %2127 = vmatprep.subr.mxu0 0.0
    %2128 = vmatpush1.msra.mxu0 0.0
    %2129 = vmatprep.subr.mxu0 0.0
    %2130 = vmatpush1.msra.mxu0 0.0
    %2131 = vmatprep.subr.mxu0 0.0
    %2132 = vmatpush1.msra.mxu0 0.0
    %2133 = vmatprep.subr.mxu0 0.0
    %2134 = vmatpush1.msra.mxu0 0.0
    %2135 = vmatprep.subr.mxu0 0.0
    %2136 = vmatpush1.msra.mxu0 0.0
    %2137 = vmatprep.subr.mxu0 0.0
    %2138 = vmatpush1.msra.mxu0 0.0
    %2139 = vmatprep.subr.mxu0 0.0
    %2140 = vmatpush1.msra.mxu0 0.0
    %2141 = vmatprep.subr.mxu0 0.0
    %2142 = vmatpush1.msra.mxu0 0.0
    %2143 = vmatprep.subr.mxu0 0.0
    %2144 = vmatpush1.msra.mxu0 0.0
    %2145 = vmatprep.subr.mxu0 0.0
    %2146 = vmatpush1.msra.mxu0 0.0
    %2147 = vmatprep.subr.mxu0 0.0
    %2148 = vmatpush1.msra.mxu0 0.0
    %2149 = vmatprep.subr.mxu0 0.0
    %2150 = vmatpush1.msra.mxu0 0.0
    %2151 = vmatprep.subr.mxu0 0.0
    %2152 = vmatpush1.msra.mxu0 0.0
    %2153 = vmatprep.subr.mxu0 0.0
    %2154 = vmatpush1.msra.mxu0 0.0
    %2155 = vmatprep.mubr.f32.mxu0 0.0
    %2156 = vmatmul.mubr.f32.gmra.mrb[0].mxu0 %v1923
    %v2157 = vpop.f32.mrb[0].mxu0
    %v2158 = vadd.f32 0.0, %v2157
    %v2159 = vpop.f32.mrb[0].mxu0
    %2160 = vdwg.mxu0
    %v2161 = vadd.f32 %v2086, %v2158
    %v2162 = vtanh.pop %v2161
    %s2163 = scalar_lea.vmem [#allocation2], 112
    %v2164 = vld [vmem:[%s2163] sm:$0xf]
    %v2165 = vld [vmem:[%s801] sm:$0xff]
    %v2166 = vld [vmem:[%s801 + $0x8] sm:$0xff]
    %v2167 = vld [vmem:[%s801 + $0x10] sm:$0xff]
    %v2168 = vld [vmem:[%s801 + $0x18] sm:$0xff]
    %2169 = vmatprep.subr.mxu0 0.0
    %2170 = vmatpush1.msra.mxu0 %v2165
    %2171 = vmatprep.subr.mxu0 0.0
    %2172 = vmatpush1.msra.mxu0 %v2166
    %2173 = vmatprep.subr.mxu0 0.0
    %2174 = vmatpush1.msra.mxu0 %v2167
    %2175 = vmatprep.subr.mxu0 0.0
    %2176 = vmatpush1.msra.mxu0 %v2168
    %2177 = vmatprep.subr.mxu0 0.0
    %2178 = vmatpush1.msra.mxu0 0.0
    %2179 = vmatprep.subr.mxu0 0.0
    %2180 = vmatpush1.msra.mxu0 0.0
    %2181 = vmatprep.subr.mxu0 0.0
    %2182 = vmatpush1.msra.mxu0 0.0
    %2183 = vmatprep.subr.mxu0 0.0
    %2184 = vmatpush1.msra.mxu0 0.0
    %2185 = vmatprep.subr.mxu0 0.0
    %2186 = vmatpush1.msra.mxu0 0.0
    %2187 = vmatprep.subr.mxu0 0.0
    %2188 = vmatpush1.msra.mxu0 0.0
    %2189 = vmatprep.subr.mxu0 0.0
    %2190 = vmatpush1.msra.mxu0 0.0
    %2191 = vmatprep.subr.mxu0 0.0
    %2192 = vmatpush1.msra.mxu0 0.0
    %2193 = vmatprep.subr.mxu0 0.0
    %2194 = vmatpush1.msra.mxu0 0.0
    %2195 = vmatprep.subr.mxu0 0.0
    %2196 = vmatpush1.msra.mxu0 0.0
    %2197 = vmatprep.subr.mxu0 0.0
    %2198 = vmatpush1.msra.mxu0 0.0
    %2199 = vmatprep.subr.mxu0 0.0
    %2200 = vmatpush1.msra.mxu0 0.0
    %2201 = vmatprep.subr.mxu0 0.0
    %2202 = vmatpush1.msra.mxu0 0.0
    %2203 = vmatprep.subr.mxu0 0.0
    %2204 = vmatpush1.msra.mxu0 0.0
    %2205 = vmatprep.subr.mxu0 0.0
    %2206 = vmatpush1.msra.mxu0 0.0
    %2207 = vmatprep.subr.mxu0 0.0
    %2208 = vmatpush1.msra.mxu0 0.0
    %2209 = vmatprep.subr.mxu0 0.0
    %2210 = vmatpush1.msra.mxu0 0.0
    %2211 = vmatprep.subr.mxu0 0.0
    %2212 = vmatpush1.msra.mxu0 0.0
    %2213 = vmatprep.subr.mxu0 0.0
    %2214 = vmatpush1.msra.mxu0 0.0
    %2215 = vmatprep.subr.mxu0 0.0
    %2216 = vmatpush1.msra.mxu0 0.0
    %2217 = vmatprep.subr.mxu0 0.0
    %2218 = vmatpush1.msra.mxu0 0.0
    %2219 = vmatprep.subr.mxu0 0.0
    %2220 = vmatpush1.msra.mxu0 0.0
    %2221 = vmatprep.subr.mxu0 0.0
    %2222 = vmatpush1.msra.mxu0 0.0
    %2223 = vmatprep.subr.mxu0 0.0
    %2224 = vmatpush1.msra.mxu0 0.0
    %2225 = vmatprep.subr.mxu0 0.0
    %2226 = vmatpush1.msra.mxu0 0.0
    %2227 = vmatprep.subr.mxu0 0.0
    %2228 = vmatpush1.msra.mxu0 0.0
    %2229 = vmatprep.subr.mxu0 0.0
    %2230 = vmatpush1.msra.mxu0 0.0
    %2231 = vmatprep.subr.mxu0 0.0
    %2232 = vmatpush1.msra.mxu0 0.0
    %2233 = vmatprep.mubr.f32.mxu0 0.0
    %2234 = vmatmul.mubr.f32.gmra.mrb[0].mxu0 %v1923
    %v2235 = vpop.f32.mrb[0].mxu0
    %v2236 = vadd.f32 0.0, %v2235
    %v2237 = vpop.f32.mrb[0].mxu0
    %2238 = vdwg.mxu0
    %v2239 = vadd.f32 %v2164, %v2236
    %v2240 = vxor.u32 %v2239, 2147483648
    %v2241 = vmul.f32 %v2240, 1.442695
    %v2242 = vpow.pop %v2241
    %v2243 = vadd.f32 %v2242, 1.0
    %v2244 = vrcp.pop %v2243
    %v2245 = vmul.f32 1.0, %v2244
    %v2246 = vmul.f32 %v2084, %v1915
    %v2247 = vmul.f32 %v2001, %v2162
    %v2248 = vadd.f32 %v2246, %v2247
    %v2249 = vtanh.pop %v2248
    %v2250 = vmul.f32 %v2245, %v2249
    %s2251 = scalar_lea.vmem [#allocation13], 16
    %2252 = vst.msk [vmem:[%s2251] sm:$0xf] %vm215, %v2250
    %2253 = vst.msk [vmem:[#allocation3] sm:$0xf] %vm215, %v2250
    %2254 = vst.msk [vmem:[#allocation4] sm:$0xf] %vm215, %v2248
    %v2255 = vld [vmem:[#allocation3] sm:$0xf]
    %v2256 = vld [vmem:[#allocation4] sm:$0xf]
    %s2257 = scalar_lea.vmem [#allocation2], 20
    %v2258 = vld [vmem:[%s2257] sm:$0xf]
    %v2259 = vld [vmem:[#allocation11] sm:$0xff]
    %v2260 = vld [vmem:[#allocation11 + $0x8] sm:$0xff]
    %v2261 = vld [vmem:[#allocation11 + $0x10] sm:$0xff]
    %v2262 = vld [vmem:[#allocation11 + $0x18] sm:$0xff]
    %v2264 = vsel %vm558, %v2255, 0
    %2266 = vmatprep.subr.mxu0 0.0
    %2267 = vmatpush1.msra.mxu0 %v2259
    %2268 = vmatprep.subr.mxu0 0.0
    %2269 = vmatpush1.msra.mxu0 %v2260
    %2270 = vmatprep.subr.mxu0 0.0
    %2271 = vmatpush1.msra.mxu0 %v2261
    %2272 = vmatprep.subr.mxu0 0.0
    %2273 = vmatpush1.msra.mxu0 %v2262
    %2274 = vmatprep.subr.mxu0 0.0
    %2275 = vmatpush1.msra.mxu0 0.0
    %2276 = vmatprep.subr.mxu0 0.0
    %2277 = vmatpush1.msra.mxu0 0.0
    %2278 = vmatprep.subr.mxu0 0.0
    %2279 = vmatpush1.msra.mxu0 0.0
    %2280 = vmatprep.subr.mxu0 0.0
    %2281 = vmatpush1.msra.mxu0 0.0
    %2282 = vmatprep.subr.mxu0 0.0
    %2283 = vmatpush1.msra.mxu0 0.0
    %2284 = vmatprep.subr.mxu0 0.0
    %2285 = vmatpush1.msra.mxu0 0.0
    %2286 = vmatprep.subr.mxu0 0.0
    %2287 = vmatpush1.msra.mxu0 0.0
    %2288 = vmatprep.subr.mxu0 0.0
    %2289 = vmatpush1.msra.mxu0 0.0
    %2290 = vmatprep.subr.mxu0 0.0
    %2291 = vmatpush1.msra.mxu0 0.0
    %2292 = vmatprep.subr.mxu0 0.0
    %2293 = vmatpush1.msra.mxu0 0.0
    %2294 = vmatprep.subr.mxu0 0.0
    %2295 = vmatpush1.msra.mxu0 0.0
    %2296 = vmatprep.subr.mxu0 0.0
    %2297 = vmatpush1.msra.mxu0 0.0
    %2298 = vmatprep.subr.mxu0 0.0
    %2299 = vmatpush1.msra.mxu0 0.0
    %2300 = vmatprep.subr.mxu0 0.0
    %2301 = vmatpush1.msra.mxu0 0.0
    %2302 = vmatprep.subr.mxu0 0.0
    %2303 = vmatpush1.msra.mxu0 0.0
    %2304 = vmatprep.subr.mxu0 0.0
    %2305 = vmatpush1.msra.mxu0 0.0
    %2306 = vmatprep.subr.mxu0 0.0
    %2307 = vmatpush1.msra.mxu0 0.0
    %2308 = vmatprep.subr.mxu0 0.0
    %2309 = vmatpush1.msra.mxu0 0.0
    %2310 = vmatprep.subr.mxu0 0.0
    %2311 = vmatpush1.msra.mxu0 0.0
    %2312 = vmatprep.subr.mxu0 0.0
    %2313 = vmatpush1.msra.mxu0 0.0
    %2314 = vmatprep.subr.mxu0 0.0
    %2315 = vmatpush1.msra.mxu0 0.0
    %2316 = vmatprep.subr.mxu0 0.0
    %2317 = vmatpush1.msra.mxu0 0.0
    %2318 = vmatprep.subr.mxu0 0.0
    %2319 = vmatpush1.msra.mxu0 0.0
    %2320 = vmatprep.subr.mxu0 0.0
    %2321 = vmatpush1.msra.mxu0 0.0
    %2322 = vmatprep.subr.mxu0 0.0
    %2323 = vmatpush1.msra.mxu0 0.0
    %2324 = vmatprep.subr.mxu0 0.0
    %2325 = vmatpush1.msra.mxu0 0.0
    %2326 = vmatprep.subr.mxu0 0.0
    %2327 = vmatpush1.msra.mxu0 0.0
    %2328 = vmatprep.subr.mxu0 0.0
    %2329 = vmatpush1.msra.mxu0 0.0
    %2330 = vmatprep.mubr.f32.mxu0 0.0
    %2331 = vmatmul.mubr.f32.gmra.mrb[0].mxu0 %v2264
    %v2332 = vpop.f32.mrb[0].mxu0
    %v2333 = vadd.f32 0.0, %v2332
    %v2334 = vpop.f32.mrb[0].mxu0
    %2335 = vdwg.mxu0
    %v2336 = vadd.f32 %v2258, %v2333
    %v2337 = vxor.u32 %v2336, 2147483648
    %v2338 = vmul.f32 %v2337, 1.442695
    %v2339 = vpow.pop %v2338
    %v2340 = vadd.f32 %v2339, 1.0
    %v2341 = vrcp.pop %v2340
    %v2342 = vmul.f32 1.0, %v2341
    %s2343 = scalar_lea.vmem [#allocation2], 52
    %v2344 = vld [vmem:[%s2343] sm:$0xf]
    %v2345 = vld [vmem:[%s640] sm:$0xff]
    %v2346 = vld [vmem:[%s640 + $0x8] sm:$0xff]
    %v2347 = vld [vmem:[%s640 + $0x10] sm:$0xff]
    %v2348 = vld [vmem:[%s640 + $0x18] sm:$0xff]
    %2349 = vmatprep.subr.mxu0 0.0
    %2350 = vmatpush1.msra.mxu0 %v2345
    %2351 = vmatprep.subr.mxu0 0.0
    %2352 = vmatpush1.msra.mxu0 %v2346
    %2353 = vmatprep.subr.mxu0 0.0
    %2354 = vmatpush1.msra.mxu0 %v2347
    %2355 = vmatprep.subr.mxu0 0.0
    %2356 = vmatpush1.msra.mxu0 %v2348
    %2357 = vmatprep.subr.mxu0 0.0
    %2358 = vmatpush1.msra.mxu0 0.0
    %2359 = vmatprep.subr.mxu0 0.0
    %2360 = vmatpush1.msra.mxu0 0.0
    %2361 = vmatprep.subr.mxu0 0.0
    %2362 = vmatpush1.msra.mxu0 0.0
    %2363 = vmatprep.subr.mxu0 0.0
    %2364 = vmatpush1.msra.mxu0 0.0
    %2365 = vmatprep.subr.mxu0 0.0
    %2366 = vmatpush1.msra.mxu0 0.0
    %2367 = vmatprep.subr.mxu0 0.0
    %2368 = vmatpush1.msra.mxu0 0.0
    %2369 = vmatprep.subr.mxu0 0.0
    %2370 = vmatpush1.msra.mxu0 0.0
    %2371 = vmatprep.subr.mxu0 0.0
    %2372 = vmatpush1.msra.mxu0 0.0
    %2373 = vmatprep.subr.mxu0 0.0
    %2374 = vmatpush1.msra.mxu0 0.0
    %2375 = vmatprep.subr.mxu0 0.0
    %2376 = vmatpush1.msra.mxu0 0.0
    %2377 = vmatprep.subr.mxu0 0.0
    %2378 = vmatpush1.msra.mxu0 0.0
    %2379 = vmatprep.subr.mxu0 0.0
    %2380 = vmatpush1.msra.mxu0 0.0
    %2381 = vmatprep.subr.mxu0 0.0
    %2382 = vmatpush1.msra.mxu0 0.0
    %2383 = vmatprep.subr.mxu0 0.0
    %2384 = vmatpush1.msra.mxu0 0.0
    %2385 = vmatprep.subr.mxu0 0.0
    %2386 = vmatpush1.msra.mxu0 0.0
    %2387 = vmatprep.subr.mxu0 0.0
    %2388 = vmatpush1.msra.mxu0 0.0
    %2389 = vmatprep.subr.mxu0 0.0
    %2390 = vmatpush1.msra.mxu0 0.0
    %2391 = vmatprep.subr.mxu0 0.0
    %2392 = vmatpush1.msra.mxu0 0.0
    %2393 = vmatprep.subr.mxu0 0.0
    %2394 = vmatpush1.msra.mxu0 0.0
    %2395 = vmatprep.subr.mxu0 0.0
    %2396 = vmatpush1.msra.mxu0 0.0
    %2397 = vmatprep.subr.mxu0 0.0
    %2398 = vmatpush1.msra.mxu0 0.0
    %2399 = vmatprep.subr.mxu0 0.0
    %2400 = vmatpush1.msra.mxu0 0.0
    %2401 = vmatprep.subr.mxu0 0.0
    %2402 = vmatpush1.msra.mxu0 0.0
    %2403 = vmatprep.subr.mxu0 0.0
    %2404 = vmatpush1.msra.mxu0 0.0
    %2405 = vmatprep.subr.mxu0 0.0
    %2406 = vmatpush1.msra.mxu0 0.0
    %2407 = vmatprep.subr.mxu0 0.0
    %2408 = vmatpush1.msra.mxu0 0.0
    %2409 = vmatprep.subr.mxu0 0.0
    %2410 = vmatpush1.msra.mxu0 0.0
    %2411 = vmatprep.subr.mxu0 0.0
    %2412 = vmatpush1.msra.mxu0 0.0
    %2413 = vmatprep.mubr.f32.mxu0 0.0
    %2414 = vmatmul.mubr.f32.gmra.mrb[0].mxu0 %v2264
    %v2415 = vpop.f32.mrb[0].mxu0
    %v2416 = vadd.f32 0.0, %v2415
    %v2417 = vpop.f32.mrb[0].mxu0
    %2418 = vdwg.mxu0
    %v2419 = vadd.f32 %v2344, %v2416
    %v2420 = vxor.u32 %v2419, 2147483648
    %v2421 = vmul.f32 %v2420, 1.442695
    %v2422 = vpow.pop %v2421
    %v2423 = vadd.f32 %v2422, 1.0
    %v2424 = vrcp.pop %v2423
    %v2425 = vmul.f32 1.0, %v2424
    %s2426 = scalar_lea.vmem [#allocation2], 84
    %v2427 = vld [vmem:[%s2426] sm:$0xf]
    %v2428 = vld [vmem:[%s723] sm:$0xff]
    %v2429 = vld [vmem:[%s723 + $0x8] sm:$0xff]
    %v2430 = vld [vmem:[%s723 + $0x10] sm:$0xff]
    %v2431 = vld [vmem:[%s723 + $0x18] sm:$0xff]
    %2432 = vmatprep.subr.mxu0 0.0
    %2433 = vmatpush1.msra.mxu0 %v2428
    %2434 = vmatprep.subr.mxu0 0.0
    %2435 = vmatpush1.msra.mxu0 %v2429
    %2436 = vmatprep.subr.mxu0 0.0
    %2437 = vmatpush1.msra.mxu0 %v2430
    %2438 = vmatprep.subr.mxu0 0.0
    %2439 = vmatpush1.msra.mxu0 %v2431
    %2440 = vmatprep.subr.mxu0 0.0
    %2441 = vmatpush1.msra.mxu0 0.0
    %2442 = vmatprep.subr.mxu0 0.0
    %2443 = vmatpush1.msra.mxu0 0.0
    %2444 = vmatprep.subr.mxu0 0.0
    %2445 = vmatpush1.msra.mxu0 0.0
    %2446 = vmatprep.subr.mxu0 0.0
    %2447 = vmatpush1.msra.mxu0 0.0
    %2448 = vmatprep.subr.mxu0 0.0
    %2449 = vmatpush1.msra.mxu0 0.0
    %2450 = vmatprep.subr.mxu0 0.0
    %2451 = vmatpush1.msra.mxu0 0.0
    %2452 = vmatprep.subr.mxu0 0.0
    %2453 = vmatpush1.msra.mxu0 0.0
    %2454 = vmatprep.subr.mxu0 0.0
    %2455 = vmatpush1.msra.mxu0 0.0
    %2456 = vmatprep.subr.mxu0 0.0
    %2457 = vmatpush1.msra.mxu0 0.0
    %2458 = vmatprep.subr.mxu0 0.0
    %2459 = vmatpush1.msra.mxu0 0.0
    %2460 = vmatprep.subr.mxu0 0.0
    %2461 = vmatpush1.msra.mxu0 0.0
    %2462 = vmatprep.subr.mxu0 0.0
    %2463 = vmatpush1.msra.mxu0 0.0
    %2464 = vmatprep.subr.mxu0 0.0
    %2465 = vmatpush1.msra.mxu0 0.0
    %2466 = vmatprep.subr.mxu0 0.0
    %2467 = vmatpush1.msra.mxu0 0.0
    %2468 = vmatprep.subr.mxu0 0.0
    %2469 = vmatpush1.msra.mxu0 0.0
    %2470 = vmatprep.subr.mxu0 0.0
    %2471 = vmatpush1.msra.mxu0 0.0
    %2472 = vmatprep.subr.mxu0 0.0
    %2473 = vmatpush1.msra.mxu0 0.0
    %2474 = vmatprep.subr.mxu0 0.0
    %2475 = vmatpush1.msra.mxu0 0.0
    %2476 = vmatprep.subr.mxu0 0.0
    %2477 = vmatpush1.msra.mxu0 0.0
    %2478 = vmatprep.subr.mxu0 0.0
    %2479 = vmatpush1.msra.mxu0 0.0
    %2480 = vmatprep.subr.mxu0 0.0
    %2481 = vmatpush1.msra.mxu0 0.0
    %2482 = vmatprep.subr.mxu0 0.0
    %2483 = vmatpush1.msra.mxu0 0.0
    %2484 = vmatprep.subr.mxu0 0.0
    %2485 = vmatpush1.msra.mxu0 0.0
    %2486 = vmatprep.subr.mxu0 0.0
    %2487 = vmatpush1.msra.mxu0 0.0
    %2488 = vmatprep.subr.mxu0 0.0
    %2489 = vmatpush1.msra.mxu0 0.0
    %2490 = vmatprep.subr.mxu0 0.0
    %2491 = vmatpush1.msra.mxu0 0.0
    %2492 = vmatprep.subr.mxu0 0.0
    %2493 = vmatpush1.msra.mxu0 0.0
    %2494 = vmatprep.subr.mxu0 0.0
    %2495 = vmatpush1.msra.mxu0 0.0
    %2496 = vmatprep.mubr.f32.mxu0 0.0
    %2497 = vmatmul.mubr.f32.gmra.mrb[0].mxu0 %v2264
    %v2498 = vpop.f32.mrb[0].mxu0
    %v2499 = vadd.f32 0.0, %v2498
    %v2500 = vpop.f32.mrb[0].mxu0
    %2501 = vdwg.mxu0
    %v2502 = vadd.f32 %v2427, %v2499
    %v2503 = vtanh.pop %v2502
    %s2504 = scalar_lea.vmem [#allocation2], 116
    %v2505 = vld [vmem:[%s2504] sm:$0xf]
    %v2506 = vld [vmem:[%s801] sm:$0xff]
    %v2507 = vld [vmem:[%s801 + $0x8] sm:$0xff]
    %v2508 = vld [vmem:[%s801 + $0x10] sm:$0xff]
    %v2509 = vld [vmem:[%s801 + $0x18] sm:$0xff]
    %2510 = vmatprep.subr.mxu0 0.0
    %2511 = vmatpush1.msra.mxu0 %v2506
    %2512 = vmatprep.subr.mxu0 0.0
    %2513 = vmatpush1.msra.mxu0 %v2507
    %2514 = vmatprep.subr.mxu0 0.0
    %2515 = vmatpush1.msra.mxu0 %v2508
    %2516 = vmatprep.subr.mxu0 0.0
    %2517 = vmatpush1.msra.mxu0 %v2509
    %2518 = vmatprep.subr.mxu0 0.0
    %2519 = vmatpush1.msra.mxu0 0.0
    %2520 = vmatprep.subr.mxu0 0.0
    %2521 = vmatpush1.msra.mxu0 0.0
    %2522 = vmatprep.subr.mxu0 0.0
    %2523 = vmatpush1.msra.mxu0 0.0
    %2524 = vmatprep.subr.mxu0 0.0
    %2525 = vmatpush1.msra.mxu0 0.0
    %2526 = vmatprep.subr.mxu0 0.0
    %2527 = vmatpush1.msra.mxu0 0.0
    %2528 = vmatprep.subr.mxu0 0.0
    %2529 = vmatpush1.msra.mxu0 0.0
    %2530 = vmatprep.subr.mxu0 0.0
    %2531 = vmatpush1.msra.mxu0 0.0
    %2532 = vmatprep.subr.mxu0 0.0
    %2533 = vmatpush1.msra.mxu0 0.0
    %2534 = vmatprep.subr.mxu0 0.0
    %2535 = vmatpush1.msra.mxu0 0.0
    %2536 = vmatprep.subr.mxu0 0.0
    %2537 = vmatpush1.msra.mxu0 0.0
    %2538 = vmatprep.subr.mxu0 0.0
    %2539 = vmatpush1.msra.mxu0 0.0
    %2540 = vmatprep.subr.mxu0 0.0
    %2541 = vmatpush1.msra.mxu0 0.0
    %2542 = vmatprep.subr.mxu0 0.0
    %2543 = vmatpush1.msra.mxu0 0.0
    %2544 = vmatprep.subr.mxu0 0.0
    %2545 = vmatpush1.msra.mxu0 0.0
    %2546 = vmatprep.subr.mxu0 0.0
    %2547 = vmatpush1.msra.mxu0 0.0
    %2548 = vmatprep.subr.mxu0 0.0
    %2549 = vmatpush1.msra.mxu0 0.0
    %2550 = vmatprep.subr.mxu0 0.0
    %2551 = vmatpush1.msra.mxu0 0.0
    %2552 = vmatprep.subr.mxu0 0.0
    %2553 = vmatpush1.msra.mxu0 0.0
    %2554 = vmatprep.subr.mxu0 0.0
    %2555 = vmatpush1.msra.mxu0 0.0
    %2556 = vmatprep.subr.mxu0 0.0
    %2557 = vmatpush1.msra.mxu0 0.0
    %2558 = vmatprep.subr.mxu0 0.0
    %2559 = vmatpush1.msra.mxu0 0.0
    %2560 = vmatprep.subr.mxu0 0.0
    %2561 = vmatpush1.msra.mxu0 0.0
    %2562 = vmatprep.subr.mxu0 0.0
    %2563 = vmatpush1.msra.mxu0 0.0
    %2564 = vmatprep.subr.mxu0 0.0
    %2565 = vmatpush1.msra.mxu0 0.0
    %2566 = vmatprep.subr.mxu0 0.0
    %2567 = vmatpush1.msra.mxu0 0.0
    %2568 = vmatprep.subr.mxu0 0.0
    %2569 = vmatpush1.msra.mxu0 0.0
    %2570 = vmatprep.subr.mxu0 0.0
    %2571 = vmatpush1.msra.mxu0 0.0
    %2572 = vmatprep.subr.mxu0 0.0
    %2573 = vmatpush1.msra.mxu0 0.0
    %2574 = vmatprep.mubr.f32.mxu0 0.0
    %2575 = vmatmul.mubr.f32.gmra.mrb[0].mxu0 %v2264
    %v2576 = vpop.f32.mrb[0].mxu0
    %v2577 = vadd.f32 0.0, %v2576
    %v2578 = vpop.f32.mrb[0].mxu0
    %2579 = vdwg.mxu0
    %v2580 = vadd.f32 %v2505, %v2577
    %v2581 = vxor.u32 %v2580, 2147483648
    %v2582 = vmul.f32 %v2581, 1.442695
    %v2583 = vpow.pop %v2582
    %v2584 = vadd.f32 %v2583, 1.0
    %v2585 = vrcp.pop %v2584
    %v2586 = vmul.f32 1.0, %v2585
    %v2587 = vmul.f32 %v2425, %v2256
    %v2588 = vmul.f32 %v2342, %v2503
    %v2589 = vadd.f32 %v2587, %v2588
    %v2590 = vtanh.pop %v2589
    %v2591 = vmul.f32 %v2586, %v2590
    %s2592 = scalar_lea.vmem [#allocation13], 20
    %2593 = vst.msk [vmem:[%s2592] sm:$0xf] %vm215, %v2591
    %2594 = vst.msk [vmem:[#allocation3] sm:$0xf] %vm215, %v2591
    %2595 = vst.msk [vmem:[#allocation4] sm:$0xf] %vm215, %v2589
    %v2596 = vld [vmem:[#allocation3] sm:$0xf]
    %v2597 = vld [vmem:[#allocation4] sm:$0xf]
    %s2598 = scalar_lea.vmem [#allocation2], 24
    %v2599 = vld [vmem:[%s2598] sm:$0xf]
    %v2600 = vld [vmem:[#allocation11] sm:$0xff]
    %v2601 = vld [vmem:[#allocation11 + $0x8] sm:$0xff]
    %v2602 = vld [vmem:[#allocation11 + $0x10] sm:$0xff]
    %v2603 = vld [vmem:[#allocation11 + $0x18] sm:$0xff]
    %v2605 = vsel %vm558, %v2596, 0
    %2607 = vmatprep.subr.mxu0 0.0
    %2608 = vmatpush1.msra.mxu0 %v2600
    %2609 = vmatprep.subr.mxu0 0.0
    %2610 = vmatpush1.msra.mxu0 %v2601
    %2611 = vmatprep.subr.mxu0 0.0
    %2612 = vmatpush1.msra.mxu0 %v2602
    %2613 = vmatprep.subr.mxu0 0.0
    %2614 = vmatpush1.msra.mxu0 %v2603
    %2615 = vmatprep.subr.mxu0 0.0
    %2616 = vmatpush1.msra.mxu0 0.0
    %2617 = vmatprep.subr.mxu0 0.0
    %2618 = vmatpush1.msra.mxu0 0.0
    %2619 = vmatprep.subr.mxu0 0.0
    %2620 = vmatpush1.msra.mxu0 0.0
    %2621 = vmatprep.subr.mxu0 0.0
    %2622 = vmatpush1.msra.mxu0 0.0
    %2623 = vmatprep.subr.mxu0 0.0
    %2624 = vmatpush1.msra.mxu0 0.0
    %2625 = vmatprep.subr.mxu0 0.0
    %2626 = vmatpush1.msra.mxu0 0.0
    %2627 = vmatprep.subr.mxu0 0.0
    %2628 = vmatpush1.msra.mxu0 0.0
    %2629 = vmatprep.subr.mxu0 0.0
    %2630 = vmatpush1.msra.mxu0 0.0
    %2631 = vmatprep.subr.mxu0 0.0
    %2632 = vmatpush1.msra.mxu0 0.0
    %2633 = vmatprep.subr.mxu0 0.0
    %2634 = vmatpush1.msra.mxu0 0.0
    %2635 = vmatprep.subr.mxu0 0.0
    %2636 = vmatpush1.msra.mxu0 0.0
    %2637 = vmatprep.subr.mxu0 0.0
    %2638 = vmatpush1.msra.mxu0 0.0
    %2639 = vmatprep.subr.mxu0 0.0
    %2640 = vmatpush1.msra.mxu0 0.0
    %2641 = vmatprep.subr.mxu0 0.0
    %2642 = vmatpush1.msra.mxu0 0.0
    %2643 = vmatprep.subr.mxu0 0.0
    %2644 = vmatpush1.msra.mxu0 0.0
    %2645 = vmatprep.subr.mxu0 0.0
    %2646 = vmatpush1.msra.mxu0 0.0
    %2647 = vmatprep.subr.mxu0 0.0
    %2648 = vmatpush1.msra.mxu0 0.0
    %2649 = vmatprep.subr.mxu0 0.0
    %2650 = vmatpush1.msra.mxu0 0.0
    %2651 = vmatprep.subr.mxu0 0.0
    %2652 = vmatpush1.msra.mxu0 0.0
    %2653 = vmatprep.subr.mxu0 0.0
    %2654 = vmatpush1.msra.mxu0 0.0
    %2655 = vmatprep.subr.mxu0 0.0
    %2656 = vmatpush1.msra.mxu0 0.0
    %2657 = vmatprep.subr.mxu0 0.0
    %2658 = vmatpush1.msra.mxu0 0.0
    %2659 = vmatprep.subr.mxu0 0.0
    %2660 = vmatpush1.msra.mxu0 0.0
    %2661 = vmatprep.subr.mxu0 0.0
    %2662 = vmatpush1.msra.mxu0 0.0
    %2663 = vmatprep.subr.mxu0 0.0
    %2664 = vmatpush1.msra.mxu0 0.0
    %2665 = vmatprep.subr.mxu0 0.0
    %2666 = vmatpush1.msra.mxu0 0.0
    %2667 = vmatprep.subr.mxu0 0.0
    %2668 = vmatpush1.msra.mxu0 0.0
    %2669 = vmatprep.subr.mxu0 0.0
    %2670 = vmatpush1.msra.mxu0 0.0
    %2671 = vmatprep.mubr.f32.mxu0 0.0
    %2672 = vmatmul.mubr.f32.gmra.mrb[0].mxu0 %v2605
    %v2673 = vpop.f32.mrb[0].mxu0
    %v2674 = vadd.f32 0.0, %v2673
    %v2675 = vpop.f32.mrb[0].mxu0
    %2676 = vdwg.mxu0
    %v2677 = vadd.f32 %v2599, %v2674
    %v2678 = vxor.u32 %v2677, 2147483648
    %v2679 = vmul.f32 %v2678, 1.442695
    %v2680 = vpow.pop %v2679
    %v2681 = vadd.f32 %v2680, 1.0
    %v2682 = vrcp.pop %v2681
    %v2683 = vmul.f32 1.0, %v2682
    %s2684 = scalar_lea.vmem [#allocation2], 56
    %v2685 = vld [vmem:[%s2684] sm:$0xf]
    %v2686 = vld [vmem:[%s640] sm:$0xff]
    %v2687 = vld [vmem:[%s640 + $0x8] sm:$0xff]
    %v2688 = vld [vmem:[%s640 + $0x10] sm:$0xff]
    %v2689 = vld [vmem:[%s640 + $0x18] sm:$0xff]
    %2690 = vmatprep.subr.mxu0 0.0
    %2691 = vmatpush1.msra.mxu0 %v2686
    %2692 = vmatprep.subr.mxu0 0.0
    %2693 = vmatpush1.msra.mxu0 %v2687
    %2694 = vmatprep.subr.mxu0 0.0
    %2695 = vmatpush1.msra.mxu0 %v2688
    %2696 = vmatprep.subr.mxu0 0.0
    %2697 = vmatpush1.msra.mxu0 %v2689
    %2698 = vmatprep.subr.mxu0 0.0
    %2699 = vmatpush1.msra.mxu0 0.0
    %2700 = vmatprep.subr.mxu0 0.0
    %2701 = vmatpush1.msra.mxu0 0.0
    %2702 = vmatprep.subr.mxu0 0.0
    %2703 = vmatpush1.msra.mxu0 0.0
    %2704 = vmatprep.subr.mxu0 0.0
    %2705 = vmatpush1.msra.mxu0 0.0
    %2706 = vmatprep.subr.mxu0 0.0
    %2707 = vmatpush1.msra.mxu0 0.0
    %2708 = vmatprep.subr.mxu0 0.0
    %2709 = vmatpush1.msra.mxu0 0.0
    %2710 = vmatprep.subr.mxu0 0.0
    %2711 = vmatpush1.msra.mxu0 0.0
    %2712 = vmatprep.subr.mxu0 0.0
    %2713 = vmatpush1.msra.mxu0 0.0
    %2714 = vmatprep.subr.mxu0 0.0
    %2715 = vmatpush1.msra.mxu0 0.0
    %2716 = vmatprep.subr.mxu0 0.0
    %2717 = vmatpush1.msra.mxu0 0.0
    %2718 = vmatprep.subr.mxu0 0.0
    %2719 = vmatpush1.msra.mxu0 0.0
    %2720 = vmatprep.subr.mxu0 0.0
    %2721 = vmatpush1.msra.mxu0 0.0
    %2722 = vmatprep.subr.mxu0 0.0
    %2723 = vmatpush1.msra.mxu0 0.0
    %2724 = vmatprep.subr.mxu0 0.0
    %2725 = vmatpush1.msra.mxu0 0.0
    %2726 = vmatprep.subr.mxu0 0.0
    %2727 = vmatpush1.msra.mxu0 0.0
    %2728 = vmatprep.subr.mxu0 0.0
    %2729 = vmatpush1.msra.mxu0 0.0
    %2730 = vmatprep.subr.mxu0 0.0
    %2731 = vmatpush1.msra.mxu0 0.0
    %2732 = vmatprep.subr.mxu0 0.0
    %2733 = vmatpush1.msra.mxu0 0.0
    %2734 = vmatprep.subr.mxu0 0.0
    %2735 = vmatpush1.msra.mxu0 0.0
    %2736 = vmatprep.subr.mxu0 0.0
    %2737 = vmatpush1.msra.mxu0 0.0
    %2738 = vmatprep.subr.mxu0 0.0
    %2739 = vmatpush1.msra.mxu0 0.0
    %2740 = vmatprep.subr.mxu0 0.0
    %2741 = vmatpush1.msra.mxu0 0.0
    %2742 = vmatprep.subr.mxu0 0.0
    %2743 = vmatpush1.msra.mxu0 0.0
    %2744 = vmatprep.subr.mxu0 0.0
    %2745 = vmatpush1.msra.mxu0 0.0
    %2746 = vmatprep.subr.mxu0 0.0
    %2747 = vmatpush1.msra.mxu0 0.0
    %2748 = vmatprep.subr.mxu0 0.0
    %2749 = vmatpush1.msra.mxu0 0.0
    %2750 = vmatprep.subr.mxu0 0.0
    %2751 = vmatpush1.msra.mxu0 0.0
    %2752 = vmatprep.subr.mxu0 0.0
    %2753 = vmatpush1.msra.mxu0 0.0
    %2754 = vmatprep.mubr.f32.mxu0 0.0
    %2755 = vmatmul.mubr.f32.gmra.mrb[0].mxu0 %v2605
    %v2756 = vpop.f32.mrb[0].mxu0
    %v2757 = vadd.f32 0.0, %v2756
    %v2758 = vpop.f32.mrb[0].mxu0
    %2759 = vdwg.mxu0
    %v2760 = vadd.f32 %v2685, %v2757
    %v2761 = vxor.u32 %v2760, 2147483648
    %v2762 = vmul.f32 %v2761, 1.442695
    %v2763 = vpow.pop %v2762
    %v2764 = vadd.f32 %v2763, 1.0
    %v2765 = vrcp.pop %v2764
    %v2766 = vmul.f32 1.0, %v2765
    %s2767 = scalar_lea.vmem [#allocation2], 88
    %v2768 = vld [vmem:[%s2767] sm:$0xf]
    %v2769 = vld [vmem:[%s723] sm:$0xff]
    %v2770 = vld [vmem:[%s723 + $0x8] sm:$0xff]
    %v2771 = vld [vmem:[%s723 + $0x10] sm:$0xff]
    %v2772 = vld [vmem:[%s723 + $0x18] sm:$0xff]
    %2773 = vmatprep.subr.mxu0 0.0
    %2774 = vmatpush1.msra.mxu0 %v2769
    %2775 = vmatprep.subr.mxu0 0.0
    %2776 = vmatpush1.msra.mxu0 %v2770
    %2777 = vmatprep.subr.mxu0 0.0
    %2778 = vmatpush1.msra.mxu0 %v2771
    %2779 = vmatprep.subr.mxu0 0.0
    %2780 = vmatpush1.msra.mxu0 %v2772
    %2781 = vmatprep.subr.mxu0 0.0
    %2782 = vmatpush1.msra.mxu0 0.0
    %2783 = vmatprep.subr.mxu0 0.0
    %2784 = vmatpush1.msra.mxu0 0.0
    %2785 = vmatprep.subr.mxu0 0.0
    %2786 = vmatpush1.msra.mxu0 0.0
    %2787 = vmatprep.subr.mxu0 0.0
    %2788 = vmatpush1.msra.mxu0 0.0
    %2789 = vmatprep.subr.mxu0 0.0
    %2790 = vmatpush1.msra.mxu0 0.0
    %2791 = vmatprep.subr.mxu0 0.0
    %2792 = vmatpush1.msra.mxu0 0.0
    %2793 = vmatprep.subr.mxu0 0.0
    %2794 = vmatpush1.msra.mxu0 0.0
    %2795 = vmatprep.subr.mxu0 0.0
    %2796 = vmatpush1.msra.mxu0 0.0
    %2797 = vmatprep.subr.mxu0 0.0
    %2798 = vmatpush1.msra.mxu0 0.0
    %2799 = vmatprep.subr.mxu0 0.0
    %2800 = vmatpush1.msra.mxu0 0.0
    %2801 = vmatprep.subr.mxu0 0.0
    %2802 = vmatpush1.msra.mxu0 0.0
    %2803 = vmatprep.subr.mxu0 0.0
    %2804 = vmatpush1.msra.mxu0 0.0
    %2805 = vmatprep.subr.mxu0 0.0
    %2806 = vmatpush1.msra.mxu0 0.0
    %2807 = vmatprep.subr.mxu0 0.0
    %2808 = vmatpush1.msra.mxu0 0.0
    %2809 = vmatprep.subr.mxu0 0.0
    %2810 = vmatpush1.msra.mxu0 0.0
    %2811 = vmatprep.subr.mxu0 0.0
    %2812 = vmatpush1.msra.mxu0 0.0
    %2813 = vmatprep.subr.mxu0 0.0
    %2814 = vmatpush1.msra.mxu0 0.0
    %2815 = vmatprep.subr.mxu0 0.0
    %2816 = vmatpush1.msra.mxu0 0.0
    %2817 = vmatprep.subr.mxu0 0.0
    %2818 = vmatpush1.msra.mxu0 0.0
    %2819 = vmatprep.subr.mxu0 0.0
    %2820 = vmatpush1.msra.mxu0 0.0
    %2821 = vmatprep.subr.mxu0 0.0
    %2822 = vmatpush1.msra.mxu0 0.0
    %2823 = vmatprep.subr.mxu0 0.0
    %2824 = vmatpush1.msra.mxu0 0.0
    %2825 = vmatprep.subr.mxu0 0.0
    %2826 = vmatpush1.msra.mxu0 0.0
    %2827 = vmatprep.subr.mxu0 0.0
    %2828 = vmatpush1.msra.mxu0 0.0
    %2829 = vmatprep.subr.mxu0 0.0
    %2830 = vmatpush1.msra.mxu0 0.0
    %2831 = vmatprep.subr.mxu0 0.0
    %2832 = vmatpush1.msra.mxu0 0.0
    %2833 = vmatprep.subr.mxu0 0.0
    %2834 = vmatpush1.msra.mxu0 0.0
    %2835 = vmatprep.subr.mxu0 0.0
    %2836 = vmatpush1.msra.mxu0 0.0
    %2837 = vmatprep.mubr.f32.mxu0 0.0
    %2838 = vmatmul.mubr.f32.gmra.mrb[0].mxu0 %v2605
    %v2839 = vpop.f32.mrb[0].mxu0
    %v2840 = vadd.f32 0.0, %v2839
    %v2841 = vpop.f32.mrb[0].mxu0
    %2842 = vdwg.mxu0
    %v2843 = vadd.f32 %v2768, %v2840
    %v2844 = vtanh.pop %v2843
    %s2845 = scalar_lea.vmem [#allocation2], 120
    %v2846 = vld [vmem:[%s2845] sm:$0xf]
    %v2847 = vld [vmem:[%s801] sm:$0xff]
    %v2848 = vld [vmem:[%s801 + $0x8] sm:$0xff]
    %v2849 = vld [vmem:[%s801 + $0x10] sm:$0xff]
    %v2850 = vld [vmem:[%s801 + $0x18] sm:$0xff]
    %2851 = vmatprep.subr.mxu0 0.0
    %2852 = vmatpush1.msra.mxu0 %v2847
    %2853 = vmatprep.subr.mxu0 0.0
    %2854 = vmatpush1.msra.mxu0 %v2848
    %2855 = vmatprep.subr.mxu0 0.0
    %2856 = vmatpush1.msra.mxu0 %v2849
    %2857 = vmatprep.subr.mxu0 0.0
    %2858 = vmatpush1.msra.mxu0 %v2850
    %2859 = vmatprep.subr.mxu0 0.0
    %2860 = vmatpush1.msra.mxu0 0.0
    %2861 = vmatprep.subr.mxu0 0.0
    %2862 = vmatpush1.msra.mxu0 0.0
    %2863 = vmatprep.subr.mxu0 0.0
    %2864 = vmatpush1.msra.mxu0 0.0
    %2865 = vmatprep.subr.mxu0 0.0
    %2866 = vmatpush1.msra.mxu0 0.0
    %2867 = vmatprep.subr.mxu0 0.0
    %2868 = vmatpush1.msra.mxu0 0.0
    %2869 = vmatprep.subr.mxu0 0.0
    %2870 = vmatpush1.msra.mxu0 0.0
    %2871 = vmatprep.subr.mxu0 0.0
    %2872 = vmatpush1.msra.mxu0 0.0
    %2873 = vmatprep.subr.mxu0 0.0
    %2874 = vmatpush1.msra.mxu0 0.0
    %2875 = vmatprep.subr.mxu0 0.0
    %2876 = vmatpush1.msra.mxu0 0.0
    %2877 = vmatprep.subr.mxu0 0.0
    %2878 = vmatpush1.msra.mxu0 0.0
    %2879 = vmatprep.subr.mxu0 0.0
    %2880 = vmatpush1.msra.mxu0 0.0
    %2881 = vmatprep.subr.mxu0 0.0
    %2882 = vmatpush1.msra.mxu0 0.0
    %2883 = vmatprep.subr.mxu0 0.0
    %2884 = vmatpush1.msra.mxu0 0.0
    %2885 = vmatprep.subr.mxu0 0.0
    %2886 = vmatpush1.msra.mxu0 0.0
    %2887 = vmatprep.subr.mxu0 0.0
    %2888 = vmatpush1.msra.mxu0 0.0
    %2889 = vmatprep.subr.mxu0 0.0
    %2890 = vmatpush1.msra.mxu0 0.0
    %2891 = vmatprep.subr.mxu0 0.0
    %2892 = vmatpush1.msra.mxu0 0.0
    %2893 = vmatprep.subr.mxu0 0.0
    %2894 = vmatpush1.msra.mxu0 0.0
    %2895 = vmatprep.subr.mxu0 0.0
    %2896 = vmatpush1.msra.mxu0 0.0
    %2897 = vmatprep.subr.mxu0 0.0
    %2898 = vmatpush1.msra.mxu0 0.0
    %2899 = vmatprep.subr.mxu0 0.0
    %2900 = vmatpush1.msra.mxu0 0.0
    %2901 = vmatprep.subr.mxu0 0.0
    %2902 = vmatpush1.msra.mxu0 0.0
    %2903 = vmatprep.subr.mxu0 0.0
    %2904 = vmatpush1.msra.mxu0 0.0
    %2905 = vmatprep.subr.mxu0 0.0
    %2906 = vmatpush1.msra.mxu0 0.0
    %2907 = vmatprep.subr.mxu0 0.0
    %2908 = vmatpush1.msra.mxu0 0.0
    %2909 = vmatprep.subr.mxu0 0.0
    %2910 = vmatpush1.msra.mxu0 0.0
    %2911 = vmatprep.subr.mxu0 0.0
    %2912 = vmatpush1.msra.mxu0 0.0
    %2913 = vmatprep.subr.mxu0 0.0
    %2914 = vmatpush1.msra.mxu0 0.0
    %2915 = vmatprep.mubr.f32.mxu0 0.0
    %2916 = vmatmul.mubr.f32.gmra.mrb[0].mxu0 %v2605
    %v2917 = vpop.f32.mrb[0].mxu0
    %v2918 = vadd.f32 0.0, %v2917
    %v2919 = vpop.f32.mrb[0].mxu0
    %2920 = vdwg.mxu0
    %v2921 = vadd.f32 %v2846, %v2918
    %v2922 = vxor.u32 %v2921, 2147483648
    %v2923 = vmul.f32 %v2922, 1.442695
    %v2924 = vpow.pop %v2923
    %v2925 = vadd.f32 %v2924, 1.0
    %v2926 = vrcp.pop %v2925
    %v2927 = vmul.f32 1.0, %v2926
    %v2928 = vmul.f32 %v2766, %v2597
    %v2929 = vmul.f32 %v2683, %v2844
    %v2930 = vadd.f32 %v2928, %v2929
    %v2931 = vtanh.pop %v2930
    %v2932 = vmul.f32 %v2927, %v2931
    %s2933 = scalar_lea.vmem [#allocation13], 24
    %2934 = vst.msk [vmem:[%s2933] sm:$0xf] %vm215, %v2932
    %2935 = vst.msk [vmem:[#allocation3] sm:$0xf] %vm215, %v2932
    %2936 = vst.msk [vmem:[#allocation4] sm:$0xf] %vm215, %v2930
    %v2937 = vld [vmem:[#allocation3] sm:$0xf]
    %v2938 = vld [vmem:[#allocation4] sm:$0xf]
    %s2939 = scalar_lea.vmem [#allocation2], 28
    %v2940 = vld [vmem:[%s2939] sm:$0xf]
    %v2941 = vld [vmem:[#allocation11] sm:$0xff]
    %v2942 = vld [vmem:[#allocation11 + $0x8] sm:$0xff]
    %v2943 = vld [vmem:[#allocation11 + $0x10] sm:$0xff]
    %v2944 = vld [vmem:[#allocation11 + $0x18] sm:$0xff]
    %v2946 = vsel %vm558, %v2937, 0
    %2948 = vmatprep.subr.mxu0 0.0
    %2949 = vmatpush1.msra.mxu0 %v2941
    %2950 = vmatprep.subr.mxu0 0.0
    %2951 = vmatpush1.msra.mxu0 %v2942
    %2952 = vmatprep.subr.mxu0 0.0
    %2953 = vmatpush1.msra.mxu0 %v2943
    %2954 = vmatprep.subr.mxu0 0.0
    %2955 = vmatpush1.msra.mxu0 %v2944
    %2956 = vmatprep.subr.mxu0 0.0
    %2957 = vmatpush1.msra.mxu0 0.0
    %2958 = vmatprep.subr.mxu0 0.0
    %2959 = vmatpush1.msra.mxu0 0.0
    %2960 = vmatprep.subr.mxu0 0.0
    %2961 = vmatpush1.msra.mxu0 0.0
    %2962 = vmatprep.subr.mxu0 0.0
    %2963 = vmatpush1.msra.mxu0 0.0
    %2964 = vmatprep.subr.mxu0 0.0
    %2965 = vmatpush1.msra.mxu0 0.0
    %2966 = vmatprep.subr.mxu0 0.0
    %2967 = vmatpush1.msra.mxu0 0.0
    %2968 = vmatprep.subr.mxu0 0.0
    %2969 = vmatpush1.msra.mxu0 0.0
    %2970 = vmatprep.subr.mxu0 0.0
    %2971 = vmatpush1.msra.mxu0 0.0
    %2972 = vmatprep.subr.mxu0 0.0
    %2973 = vmatpush1.msra.mxu0 0.0
    %2974 = vmatprep.subr.mxu0 0.0
    %2975 = vmatpush1.msra.mxu0 0.0
    %2976 = vmatprep.subr.mxu0 0.0
    %2977 = vmatpush1.msra.mxu0 0.0
    %2978 = vmatprep.subr.mxu0 0.0
    %2979 = vmatpush1.msra.mxu0 0.0
    %2980 = vmatprep.subr.mxu0 0.0
    %2981 = vmatpush1.msra.mxu0 0.0
    %2982 = vmatprep.subr.mxu0 0.0
    %2983 = vmatpush1.msra.mxu0 0.0
    %2984 = vmatprep.subr.mxu0 0.0
    %2985 = vmatpush1.msra.mxu0 0.0
    %2986 = vmatprep.subr.mxu0 0.0
    %2987 = vmatpush1.msra.mxu0 0.0
    %2988 = vmatprep.subr.mxu0 0.0
    %2989 = vmatpush1.msra.mxu0 0.0
    %2990 = vmatprep.subr.mxu0 0.0
    %2991 = vmatpush1.msra.mxu0 0.0
    %2992 = vmatprep.subr.mxu0 0.0
    %2993 = vmatpush1.msra.mxu0 0.0
    %2994 = vmatprep.subr.mxu0 0.0
    %2995 = vmatpush1.msra.mxu0 0.0
    %2996 = vmatprep.subr.mxu0 0.0
    %2997 = vmatpush1.msra.mxu0 0.0
    %2998 = vmatprep.subr.mxu0 0.0
    %2999 = vmatpush1.msra.mxu0 0.0
    %3000 = vmatprep.subr.mxu0 0.0
    %3001 = vmatpush1.msra.mxu0 0.0
    %3002 = vmatprep.subr.mxu0 0.0
    %3003 = vmatpush1.msra.mxu0 0.0
    %3004 = vmatprep.subr.mxu0 0.0
    %3005 = vmatpush1.msra.mxu0 0.0
    %3006 = vmatprep.subr.mxu0 0.0
    %3007 = vmatpush1.msra.mxu0 0.0
    %3008 = vmatprep.subr.mxu0 0.0
    %3009 = vmatpush1.msra.mxu0 0.0
    %3010 = vmatprep.subr.mxu0 0.0
    %3011 = vmatpush1.msra.mxu0 0.0
    %3012 = vmatprep.mubr.f32.mxu0 0.0
    %3013 = vmatmul.mubr.f32.gmra.mrb[0].mxu0 %v2946
    %v3014 = vpop.f32.mrb[0].mxu0
    %v3015 = vadd.f32 0.0, %v3014
    %v3016 = vpop.f32.mrb[0].mxu0
    %3017 = vdwg.mxu0
    %v3018 = vadd.f32 %v2940, %v3015
    %v3019 = vxor.u32 %v3018, 2147483648
    %v3020 = vmul.f32 %v3019, 1.442695
    %v3021 = vpow.pop %v3020
    %v3022 = vadd.f32 %v3021, 1.0
    %v3023 = vrcp.pop %v3022
    %v3024 = vmul.f32 1.0, %v3023
    %s3025 = scalar_lea.vmem [#allocation2], 60
    %v3026 = vld [vmem:[%s3025] sm:$0xf]
    %v3027 = vld [vmem:[%s640] sm:$0xff]
    %v3028 = vld [vmem:[%s640 + $0x8] sm:$0xff]
    %v3029 = vld [vmem:[%s640 + $0x10] sm:$0xff]
    %v3030 = vld [vmem:[%s640 + $0x18] sm:$0xff]
    %3031 = vmatprep.subr.mxu0 0.0
    %3032 = vmatpush1.msra.mxu0 %v3027
    %3033 = vmatprep.subr.mxu0 0.0
    %3034 = vmatpush1.msra.mxu0 %v3028
    %3035 = vmatprep.subr.mxu0 0.0
    %3036 = vmatpush1.msra.mxu0 %v3029
    %3037 = vmatprep.subr.mxu0 0.0
    %3038 = vmatpush1.msra.mxu0 %v3030
    %3039 = vmatprep.subr.mxu0 0.0
    %3040 = vmatpush1.msra.mxu0 0.0
    %3041 = vmatprep.subr.mxu0 0.0
    %3042 = vmatpush1.msra.mxu0 0.0
    %3043 = vmatprep.subr.mxu0 0.0
    %3044 = vmatpush1.msra.mxu0 0.0
    %3045 = vmatprep.subr.mxu0 0.0
    %3046 = vmatpush1.msra.mxu0 0.0
    %3047 = vmatprep.subr.mxu0 0.0
    %3048 = vmatpush1.msra.mxu0 0.0
    %3049 = vmatprep.subr.mxu0 0.0
    %3050 = vmatpush1.msra.mxu0 0.0
    %3051 = vmatprep.subr.mxu0 0.0
    %3052 = vmatpush1.msra.mxu0 0.0
    %3053 = vmatprep.subr.mxu0 0.0
    %3054 = vmatpush1.msra.mxu0 0.0
    %3055 = vmatprep.subr.mxu0 0.0
    %3056 = vmatpush1.msra.mxu0 0.0
    %3057 = vmatprep.subr.mxu0 0.0
    %3058 = vmatpush1.msra.mxu0 0.0
    %3059 = vmatprep.subr.mxu0 0.0
    %3060 = vmatpush1.msra.mxu0 0.0
    %3061 = vmatprep.subr.mxu0 0.0
    %3062 = vmatpush1.msra.mxu0 0.0
    %3063 = vmatprep.subr.mxu0 0.0
    %3064 = vmatpush1.msra.mxu0 0.0
    %3065 = vmatprep.subr.mxu0 0.0
    %3066 = vmatpush1.msra.mxu0 0.0
    %3067 = vmatprep.subr.mxu0 0.0
    %3068 = vmatpush1.msra.mxu0 0.0
    %3069 = vmatprep.subr.mxu0 0.0
    %3070 = vmatpush1.msra.mxu0 0.0
    %3071 = vmatprep.subr.mxu0 0.0
    %3072 = vmatpush1.msra.mxu0 0.0
    %3073 = vmatprep.subr.mxu0 0.0
    %3074 = vmatpush1.msra.mxu0 0.0
    %3075 = vmatprep.subr.mxu0 0.0
    %3076 = vmatpush1.msra.mxu0 0.0
    %3077 = vmatprep.subr.mxu0 0.0
    %3078 = vmatpush1.msra.mxu0 0.0
    %3079 = vmatprep.subr.mxu0 0.0
    %3080 = vmatpush1.msra.mxu0 0.0
    %3081 = vmatprep.subr.mxu0 0.0
    %3082 = vmatpush1.msra.mxu0 0.0
    %3083 = vmatprep.subr.mxu0 0.0
    %3084 = vmatpush1.msra.mxu0 0.0
    %3085 = vmatprep.subr.mxu0 0.0
    %3086 = vmatpush1.msra.mxu0 0.0
    %3087 = vmatprep.subr.mxu0 0.0
    %3088 = vmatpush1.msra.mxu0 0.0
    %3089 = vmatprep.subr.mxu0 0.0
    %3090 = vmatpush1.msra.mxu0 0.0
    %3091 = vmatprep.subr.mxu0 0.0
    %3092 = vmatpush1.msra.mxu0 0.0
    %3093 = vmatprep.subr.mxu0 0.0
    %3094 = vmatpush1.msra.mxu0 0.0
    %3095 = vmatprep.mubr.f32.mxu0 0.0
    %3096 = vmatmul.mubr.f32.gmra.mrb[0].mxu0 %v2946
    %v3097 = vpop.f32.mrb[0].mxu0
    %v3098 = vadd.f32 0.0, %v3097
    %v3099 = vpop.f32.mrb[0].mxu0
    %3100 = vdwg.mxu0
    %v3101 = vadd.f32 %v3026, %v3098
    %v3102 = vxor.u32 %v3101, 2147483648
    %v3103 = vmul.f32 %v3102, 1.442695
    %v3104 = vpow.pop %v3103
    %v3105 = vadd.f32 %v3104, 1.0
    %v3106 = vrcp.pop %v3105
    %v3107 = vmul.f32 1.0, %v3106
    %s3108 = scalar_lea.vmem [#allocation2], 92
    %v3109 = vld [vmem:[%s3108] sm:$0xf]
    %v3110 = vld [vmem:[%s723] sm:$0xff]
    %v3111 = vld [vmem:[%s723 + $0x8] sm:$0xff]
    %v3112 = vld [vmem:[%s723 + $0x10] sm:$0xff]
    %v3113 = vld [vmem:[%s723 + $0x18] sm:$0xff]
    %3114 = vmatprep.subr.mxu0 0.0
    %3115 = vmatpush1.msra.mxu0 %v3110
    %3116 = vmatprep.subr.mxu0 0.0
    %3117 = vmatpush1.msra.mxu0 %v3111
    %3118 = vmatprep.subr.mxu0 0.0
    %3119 = vmatpush1.msra.mxu0 %v3112
    %3120 = vmatprep.subr.mxu0 0.0
    %3121 = vmatpush1.msra.mxu0 %v3113
    %3122 = vmatprep.subr.mxu0 0.0
    %3123 = vmatpush1.msra.mxu0 0.0
    %3124 = vmatprep.subr.mxu0 0.0
    %3125 = vmatpush1.msra.mxu0 0.0
    %3126 = vmatprep.subr.mxu0 0.0
    %3127 = vmatpush1.msra.mxu0 0.0
    %3128 = vmatprep.subr.mxu0 0.0
    %3129 = vmatpush1.msra.mxu0 0.0
    %3130 = vmatprep.subr.mxu0 0.0
    %3131 = vmatpush1.msra.mxu0 0.0
    %3132 = vmatprep.subr.mxu0 0.0
    %3133 = vmatpush1.msra.mxu0 0.0
    %3134 = vmatprep.subr.mxu0 0.0
    %3135 = vmatpush1.msra.mxu0 0.0
    %3136 = vmatprep.subr.mxu0 0.0
    %3137 = vmatpush1.msra.mxu0 0.0
    %3138 = vmatprep.subr.mxu0 0.0
    %3139 = vmatpush1.msra.mxu0 0.0
    %3140 = vmatprep.subr.mxu0 0.0
    %3141 = vmatpush1.msra.mxu0 0.0
    %3142 = vmatprep.subr.mxu0 0.0
    %3143 = vmatpush1.msra.mxu0 0.0
    %3144 = vmatprep.subr.mxu0 0.0
    %3145 = vmatpush1.msra.mxu0 0.0
    %3146 = vmatprep.subr.mxu0 0.0
    %3147 = vmatpush1.msra.mxu0 0.0
    %3148 = vmatprep.subr.mxu0 0.0
    %3149 = vmatpush1.msra.mxu0 0.0
    %3150 = vmatprep.subr.mxu0 0.0
    %3151 = vmatpush1.msra.mxu0 0.0
    %3152 = vmatprep.subr.mxu0 0.0
    %3153 = vmatpush1.msra.mxu0 0.0
    %3154 = vmatprep.subr.mxu0 0.0
    %3155 = vmatpush1.msra.mxu0 0.0
    %3156 = vmatprep.subr.mxu0 0.0
    %3157 = vmatpush1.msra.mxu0 0.0
    %3158 = vmatprep.subr.mxu0 0.0
    %3159 = vmatpush1.msra.mxu0 0.0
    %3160 = vmatprep.subr.mxu0 0.0
    %3161 = vmatpush1.msra.mxu0 0.0
    %3162 = vmatprep.subr.mxu0 0.0
    %3163 = vmatpush1.msra.mxu0 0.0
    %3164 = vmatprep.subr.mxu0 0.0
    %3165 = vmatpush1.msra.mxu0 0.0
    %3166 = vmatprep.subr.mxu0 0.0
    %3167 = vmatpush1.msra.mxu0 0.0
    %3168 = vmatprep.subr.mxu0 0.0
    %3169 = vmatpush1.msra.mxu0 0.0
    %3170 = vmatprep.subr.mxu0 0.0
    %3171 = vmatpush1.msra.mxu0 0.0
    %3172 = vmatprep.subr.mxu0 0.0
    %3173 = vmatpush1.msra.mxu0 0.0
    %3174 = vmatprep.subr.mxu0 0.0
    %3175 = vmatpush1.msra.mxu0 0.0
    %3176 = vmatprep.subr.mxu0 0.0
    %3177 = vmatpush1.msra.mxu0 0.0
    %3178 = vmatprep.mubr.f32.mxu0 0.0
    %3179 = vmatmul.mubr.f32.gmra.mrb[0].mxu0 %v2946
    %v3180 = vpop.f32.mrb[0].mxu0
    %v3181 = vadd.f32 0.0, %v3180
    %v3182 = vpop.f32.mrb[0].mxu0
    %3183 = vdwg.mxu0
    %v3184 = vadd.f32 %v3109, %v3181
    %v3185 = vtanh.pop %v3184
    %s3186 = scalar_lea.vmem [#allocation2], 124
    %v3187 = vld [vmem:[%s3186] sm:$0xf]
    %v3188 = vld [vmem:[%s801] sm:$0xff]
    %v3189 = vld [vmem:[%s801 + $0x8] sm:$0xff]
    %v3190 = vld [vmem:[%s801 + $0x10] sm:$0xff]
    %v3191 = vld [vmem:[%s801 + $0x18] sm:$0xff]
    %3192 = vmatprep.subr.mxu0 0.0
    %3193 = vmatpush1.msra.mxu0 %v3188
    %3194 = vmatprep.subr.mxu0 0.0
    %3195 = vmatpush1.msra.mxu0 %v3189
    %3196 = vmatprep.subr.mxu0 0.0
    %3197 = vmatpush1.msra.mxu0 %v3190
    %3198 = vmatprep.subr.mxu0 0.0
    %3199 = vmatpush1.msra.mxu0 %v3191
    %3200 = vmatprep.subr.mxu0 0.0
    %3201 = vmatpush1.msra.mxu0 0.0
    %3202 = vmatprep.subr.mxu0 0.0
    %3203 = vmatpush1.msra.mxu0 0.0
    %3204 = vmatprep.subr.mxu0 0.0
    %3205 = vmatpush1.msra.mxu0 0.0
    %3206 = vmatprep.subr.mxu0 0.0
    %3207 = vmatpush1.msra.mxu0 0.0
    %3208 = vmatprep.subr.mxu0 0.0
    %3209 = vmatpush1.msra.mxu0 0.0
    %3210 = vmatprep.subr.mxu0 0.0
    %3211 = vmatpush1.msra.mxu0 0.0
    %3212 = vmatprep.subr.mxu0 0.0
    %3213 = vmatpush1.msra.mxu0 0.0
    %3214 = vmatprep.subr.mxu0 0.0
    %3215 = vmatpush1.msra.mxu0 0.0
    %3216 = vmatprep.subr.mxu0 0.0
    %3217 = vmatpush1.msra.mxu0 0.0
    %3218 = vmatprep.subr.mxu0 0.0
    %3219 = vmatpush1.msra.mxu0 0.0
    %3220 = vmatprep.subr.mxu0 0.0
    %3221 = vmatpush1.msra.mxu0 0.0
    %3222 = vmatprep.subr.mxu0 0.0
    %3223 = vmatpush1.msra.mxu0 0.0
    %3224 = vmatprep.subr.mxu0 0.0
    %3225 = vmatpush1.msra.mxu0 0.0
    %3226 = vmatprep.subr.mxu0 0.0
    %3227 = vmatpush1.msra.mxu0 0.0
    %3228 = vmatprep.subr.mxu0 0.0
    %3229 = vmatpush1.msra.mxu0 0.0
    %3230 = vmatprep.subr.mxu0 0.0
    %3231 = vmatpush1.msra.mxu0 0.0
    %3232 = vmatprep.subr.mxu0 0.0
    %3233 = vmatpush1.msra.mxu0 0.0
    %3234 = vmatprep.subr.mxu0 0.0
    %3235 = vmatpush1.msra.mxu0 0.0
    %3236 = vmatprep.subr.mxu0 0.0
    %3237 = vmatpush1.msra.mxu0 0.0
    %3238 = vmatprep.subr.mxu0 0.0
    %3239 = vmatpush1.msra.mxu0 0.0
    %3240 = vmatprep.subr.mxu0 0.0
    %3241 = vmatpush1.msra.mxu0 0.0
    %3242 = vmatprep.subr.mxu0 0.0
    %3243 = vmatpush1.msra.mxu0 0.0
    %3244 = vmatprep.subr.mxu0 0.0
    %3245 = vmatpush1.msra.mxu0 0.0
    %3246 = vmatprep.subr.mxu0 0.0
    %3247 = vmatpush1.msra.mxu0 0.0
    %3248 = vmatprep.subr.mxu0 0.0
    %3249 = vmatpush1.msra.mxu0 0.0
    %3250 = vmatprep.subr.mxu0 0.0
    %3251 = vmatpush1.msra.mxu0 0.0
    %3252 = vmatprep.subr.mxu0 0.0
    %3253 = vmatpush1.msra.mxu0 0.0
    %3254 = vmatprep.subr.mxu0 0.0
    %3255 = vmatpush1.msra.mxu0 0.0
    %3256 = vmatprep.mubr.f32.mxu0 0.0
    %3257 = vmatmul.mubr.f32.gmra.mrb[0].mxu0 %v2946
    %v3258 = vpop.f32.mrb[0].mxu0
    %v3259 = vadd.f32 0.0, %v3258
    %v3260 = vpop.f32.mrb[0].mxu0
    %3261 = vdwg.mxu0
    %v3262 = vadd.f32 %v3187, %v3259
    %v3263 = vxor.u32 %v3262, 2147483648
    %v3264 = vmul.f32 %v3263, 1.442695
    %v3265 = vpow.pop %v3264
    %v3266 = vadd.f32 %v3265, 1.0
    %v3267 = vrcp.pop %v3266
    %v3268 = vmul.f32 1.0, %v3267
    %v3269 = vmul.f32 %v3107, %v2938
    %v3270 = vmul.f32 %v3024, %v3185
    %v3271 = vadd.f32 %v3269, %v3270
    %v3272 = vtanh.pop %v3271
    %v3273 = vmul.f32 %v3268, %v3272
    %s3274 = scalar_lea.vmem [#allocation13], 28
    %3275 = vst.msk [vmem:[%s3274] sm:$0xf] %vm215, %v3273
    %3276 = vst.msk [vmem:[#allocation3] sm:$0xf] %vm215, %v3273
    %3277 = vst.msk [vmem:[#allocation4] sm:$0xf] %vm215, %v3271
    // Predicated region
    $region42: #{tpu_custom_call.1} parent=1 // pred_check
      %p3278 = pneg %p78
    $region43: #{tpu_custom_call.1} parent=1 // pred_check_branch
      %3280 = sbr.rel (%p3278) target = $region45
    $region44: #{tpu_custom_call.1} parent=1 // pred_region
      %v3281 = vld [vmem:[#allocation3] sm:$0xf]
      %3282 = vst.msk [vmem:[#allocation14] sm:$0xf] %vm215, %v3281
      %v3283 = vld [vmem:[#allocation4] sm:$0xf]
      %3284 = vst.msk [vmem:[#allocation16] sm:$0xf] %vm215, %v3283
    $region45: #{tpu_custom_call.1} parent=1 // pred_fallthru
      _
    // Predicated region
    $region46: #{tpu_custom_call.1} parent=1 // pred_check
      _
    $region47: #{tpu_custom_call.1} parent=1 // pred_check_branch
      %3286 = sbr.rel (0) target = $region49
    $region48: #{tpu_custom_call.1} parent=1 // pred_region
      %s3288 = ssub.s32 512, 512
      %3289 = vsyncadd [#allocation7], %s3288
      %s3290 = sshll.u32 [#allocation13], 4
      %s3291 = int_to_ptr.vmem [resolvable:$true] %s3290
      %3296 = dma.vmem_to_hbm [thread:$0]  %s3291, 512, %s5, [#allocation7], 64, 64, 4
    $region49: #{tpu_custom_call.1} parent=1 // pred_fallthru
      _
    // Predicated region
    $region50: #{tpu_custom_call.1} parent=1 // pred_check
      _
    $region51: #{tpu_custom_call.1} parent=1 // pred_check_branch
      %3298 = sbr.rel (0) target = $region53
    $region52: #{tpu_custom_call.1} parent=1 // pred_region
      %s3300 = ssub.s32 64, 64
      %3301 = vsyncadd [#allocation15], %s3300
      %s3303 = sshll.u32 [#allocation14], 4
      %s3304 = int_to_ptr.vmem [resolvable:$true] %s3303
      %3306 = dma.vmem_to_hbm [thread:$0]  %s3304, 64, %s6, [#allocation15]
    $region53: #{tpu_custom_call.1} parent=1 // pred_fallthru
      _
    // Predicated region
    $region54: #{tpu_custom_call.1} parent=1 // pred_check
      _
    $region55: #{tpu_custom_call.1} parent=1 // pred_check_branch
      %3308 = sbr.rel (0) target = $region57
    $region56: #{tpu_custom_call.1} parent=1 // pred_region
      %s3310 = ssub.s32 64, 64
      %3311 = vsyncadd [#allocation15], %s3310
      %s3313 = sshll.u32 [#allocation16], 4
      %s3314 = int_to_ptr.vmem [resolvable:$true] %s3313
      %3316 = dma.vmem_to_hbm [thread:$0]  %s3314, 64, %s7, [#allocation15]
    $region57: #{tpu_custom_call.1} parent=1 // pred_fallthru
      _
    // Predicated region
    $region58: #{tpu_custom_call.1} parent=1 // pred_check
      _
    $region59: #{tpu_custom_call.1} parent=1 // pred_check_branch
      %3318 = sbr.rel (0) target = $region61
    $region60: #{tpu_custom_call.1} parent=1 // pred_region
      %3319 = dma.done [#allocation7], 512
    $region61: #{tpu_custom_call.1} parent=1 // pred_fallthru
      _
    // Predicated region
    $region62: #{tpu_custom_call.1} parent=1 // pred_check
      _
    $region63: #{tpu_custom_call.1} parent=1 // pred_check_branch
      %3321 = sbr.rel (0) target = $region65
    $region64: #{tpu_custom_call.1} parent=1 // pred_region
      %3322 = dma.done [#allocation15], 64
    $region65: #{tpu_custom_call.1} parent=1 // pred_fallthru
      _
    // Predicated region
    $region66: #{tpu_custom_call.1} parent=1 // pred_check
      _
    $region67: #{tpu_custom_call.1} parent=1 // pred_check_branch
      %3324 = sbr.rel (0) target = $region69
    $region68: #{tpu_custom_call.1} parent=1 // pred_region
      %3325 = dma.done [#allocation15], 64
    $region69: #{tpu_custom_call.1} parent=1 // pred_fallthru
      _
    %3326 = vsyncpa [#allocation6], 1
    %3327 = vsyncpa [#allocation9], 1
    %3328 = vsyncpa [#allocation12], 1
    %3329 = vsyncpa [#allocation7], 1
    %3330 = vsyncpa [#allocation15], 1

</llo_original>
